<compile_context>
chip_gen: v5e
topology: v5e:2x2
jax: 0.10.0
libtpu: 0.0.40
codegen_flags: <defaults>
</compile_context>

<pallas_src>
import functools

import jax
import jax.numpy as jnp
from jax.experimental import pallas as pl
from jax.experimental.pallas import tpu as pltpu


# ----------------------------------------------------------------------------
# Kernel 1: gridded matmul + bias + ReLU (used for conv1's im2col matmul)
# ----------------------------------------------------------------------------
def _matmul_bias_relu_kernel(x_ref, w_ref, b_ref, o_ref):
    acc = jnp.dot(x_ref[...], w_ref[...], preferred_element_type=jnp.float32)
    o_ref[...] = jnp.maximum(acc + b_ref[...], 0.0).astype(o_ref.dtype)


def pallas_matmul_bias_relu(x, w, b, *, out_dtype=jnp.bfloat16, tile_m=1024):
    """relu(x @ w + b). x:(M,K) bf16, w:(K,N) bf16, b:(1,N) f32 -> (M,N).

    Gridded over M ("parallel"); weights/bias use a constant block index so
    they stay VMEM-resident while row tiles stream through double buffers.
    """
    M, K = x.shape
    N = w.shape[1]
    tm = min(tile_m, M)
    m_pad = ((M + tm - 1) // tm) * tm
    if m_pad != M:
        x = jnp.pad(x, ((0, m_pad - M), (0, 0)))
    out = pl.pallas_call(
        _matmul_bias_relu_kernel,
        out_shape=jax.ShapeDtypeStruct((m_pad, N), out_dtype),
        grid=(m_pad // tm,),
        in_specs=[
            pl.BlockSpec((tm, K), lambda i: (i, 0)),
            pl.BlockSpec((K, N), lambda i: (0, 0)),
            pl.BlockSpec((1, N), lambda i: (0, 0)),
        ],
        out_specs=pl.BlockSpec((tm, N), lambda i: (i, 0)),
        compiler_params=pltpu.CompilerParams(
            dimension_semantics=("parallel",),
            vmem_limit_bytes=32 * 1024 * 1024,
        ),
    )(x, w, b)
    return out[:M] if m_pad != M else out


# ----------------------------------------------------------------------------
# Kernel 2: fused conv2 -> conv3 -> fc -> (mean / std / binary_logits) heads
# ----------------------------------------------------------------------------
def _torso_heads_kernel(p2_ref, w2_ref, b2_ref, w3_ref, b3_ref,
                        wfc_ref, bfc_ref, wh1_ref, bh1_ref,
                        w2h_ref, b2h_ref, out_ref, *, n_cont):
    f32 = jnp.float32
    bf16 = jnp.bfloat16
    B = out_ref.shape[0]
    c2 = w2_ref.shape[1]               # conv2 output channels (64)
    n_pos = p2_ref.shape[0] // B       # conv2 output spatial positions (3*3 = 9)

    # conv2: one matmul over all (spatial, batch) rows.
    h2 = jnp.dot(p2_ref[...], w2_ref[...], preferred_element_type=f32)
    h2 = jnp.maximum(h2 + b2_ref[...], 0.0)                      # (n_pos*B, c2) f32

    # conv3: 3x3 kernel over the 3x3 conv2 output -> 1x1 output, computed as
    # n_pos accumulated partial matmuls (kernel position s <-> spatial pos s).
    a3 = jnp.zeros((B, w3_ref.shape[1]), f32)
    for s in range(n_pos):
        lhs = h2[s * B:(s + 1) * B, :].astype(bf16)              # (B, c2)
        a3 = a3 + jnp.dot(lhs, w3_ref[s * c2:(s + 1) * c2, :],
                          preferred_element_type=f32)
    a3 = jnp.maximum(a3 + b3_ref[...], 0.0).astype(bf16)         # (B, 128)

    # fc + ReLU
    xfc = jnp.dot(a3, wfc_ref[...], preferred_element_type=f32) + bfc_ref[...]
    xfc = jnp.maximum(xfc, 0.0).astype(bf16)                     # (B, 512)

    # All three head hidden layers as one concatenated matmul.
    h = jnp.dot(xfc, wh1_ref[...], preferred_element_type=f32) + bh1_ref[...]
    h = jnp.maximum(h, 0.0).astype(bf16)                         # (B, 768)

    # Block-diagonal second layer, zero-padded to 128 lanes (lane-dense store).
    # forward_bias is already folded into b2h at column 2*n_cont.
    out = jnp.dot(h, w2h_ref[...], preferred_element_type=f32) + b2h_ref[...]

    # std columns [n_cont, 2*n_cont): exp(clamp(log_std, -20, 2)).
    col = jax.lax.broadcasted_iota(jnp.int32, out.shape, 1)
    std_vals = jnp.exp(jnp.clip(out, -20.0, 2.0))
    out_ref[...] = jnp.where((col >= n_cont) & (col < 2 * n_cont), std_vals, out)


def pallas_torso_heads(p2, prep, batch, n_cont):
    return pl.pallas_call(
        functools.partial(_torso_heads_kernel, n_cont=n_cont),
        out_shape=jax.ShapeDtypeStruct((batch, 128), jnp.float32),
        in_specs=[pl.BlockSpec(memory_space=pltpu.MemorySpace.VMEM)] * 11,
        out_specs=pl.BlockSpec(memory_space=pltpu.MemorySpace.VMEM),
        compiler_params=pltpu.CompilerParams(vmem_limit_bytes=32 * 1024 * 1024),
    )(p2, prep["w2"], prep["b2"], prep["w3"], prep["b3"],
      prep["wfc"], prep["bfc"], prep["wh1"], prep["bh1"],
      prep["w2h"], prep["b2h"])


# ----------------------------------------------------------------------------
# Parameter init (PyTorch-style layouts) and one-time preparation for kernels
# ----------------------------------------------------------------------------
def init_actor_params(key, input_shape=(4, 36, 36), action_dim=5):
    C, H, W = input_shape
    keys = jax.random.split(key, 24)
    it = iter(keys)

    def dense(kk, fan_in, fan_out):
        scale = 1.0 / jnp.sqrt(jnp.float32(fan_in))
        return jax.random.uniform(kk, (fan_in, fan_out), jnp.float32, -scale, scale)

    p = {}
    # conv weights in PyTorch layout (Cout, Cin, kh, kw)
    p["conv1_w"] = jax.random.normal(next(it), (32, C, 8, 8), jnp.float32) * 0.05
    p["conv1_b"] = jax.random.normal(next(it), (32,), jnp.float32) * 0.01
    p["conv2_w"] = jax.random.normal(next(it), (64, 32, 4, 4), jnp.float32) * 0.05
    p["conv2_b"] = jax.random.normal(next(it), (64,), jnp.float32) * 0.01
    p["conv3_w"] = jax.random.normal(next(it), (128, 64, 3, 3), jnp.float32) * 0.05
    p["conv3_b"] = jax.random.normal(next(it), (128,), jnp.float32) * 0.01

    def out_sz(h, k, s):
        return (h - k) // s + 1
    h1, w1 = out_sz(H, 8, 4), out_sz(W, 8, 4)
    h2, w2 = out_sz(h1, 4, 2), out_sz(w1, 4, 2)
    h3, w3 = out_sz(h2, 3, 1), out_sz(w2, 3, 1)
    flat = 128 * h3 * w3

    p["fc_w"] = dense(next(it), flat, 512)
    p["fc_b"] = jax.random.normal(next(it), (512,), jnp.float32) * 0.01

    n_cont = action_dim - 3
    p["mean_w1"] = dense(next(it), 512, 256)
    p["mean_b1"] = jax.random.normal(next(it), (256,), jnp.float32) * 0.01
    p["mean_w2"] = dense(next(it), 256, n_cont)
    p["mean_b2"] = jax.random.normal(next(it), (n_cont,), jnp.float32) * 0.01

    p["std_w1"] = dense(next(it), 512, 256)
    p["std_b1"] = jax.random.normal(next(it), (256,), jnp.float32) * 0.01
    p["std_w2"] = dense(next(it), 256, n_cont)
    p["std_b2"] = jax.random.normal(next(it), (n_cont,), jnp.float32) * 0.01

    p["bin_w1"] = dense(next(it), 512, 256)
    p["bin_b1"] = jax.random.normal(next(it), (256,), jnp.float32) * 0.01
    p["bin_w2"] = dense(next(it), 256, 3)
    p["bin_b2"] = jax.random.normal(next(it), (3,), jnp.float32) * 0.01

    p["forward_bias"] = jnp.float32(10.0)
    return p


def prepare_actor_params(p, action_dim=5):
    """One-time layout prep: bf16 column-major weights, concatenated head-1
    weights, block-diagonal (lane-padded) head-2 weights, folded forward_bias."""
    n_cont = action_dim - 3
    f32, bf16 = jnp.float32, jnp.bfloat16
    prep = {}
    # conv weight columns: row order (Cin, kh, kw) == PyTorch reshape(Cout,-1)
    prep["w1"] = p["conv1_w"].reshape(32, -1).T.astype(bf16)                # (256, 32)
    prep["b1"] = p["conv1_b"].reshape(1, -1).astype(f32)
    prep["w2"] = p["conv2_w"].reshape(64, -1).T.astype(bf16)                # (512, 64)
    prep["b2"] = p["conv2_b"].reshape(1, -1).astype(f32)
    # conv3 weight rows in (kh, kw, Cin) order to match the NHWC conv2 output
    prep["w3"] = p["conv3_w"].transpose(2, 3, 1, 0).reshape(-1, 128).astype(bf16)  # (576,128)
    prep["b3"] = p["conv3_b"].reshape(1, -1).astype(f32)
    # fc: conv3 output is 1x1 spatial, so PyTorch's (C,H,W) flatten == channel order
    prep["wfc"] = p["fc_w"].astype(bf16)                                    # (128, 512)
    prep["bfc"] = p["fc_b"].reshape(1, -1).astype(f32)
    # concatenated head hidden layers
    prep["wh1"] = jnp.concatenate(
        [p["mean_w1"], p["std_w1"], p["bin_w1"]], axis=1).astype(bf16)      # (512, 768)
    prep["bh1"] = jnp.concatenate(
        [p["mean_b1"], p["std_b1"], p["bin_b1"]]).reshape(1, -1).astype(f32)
    # block-diagonal head output layer, zero-padded to 128 lanes
    H = 256
    w2h = jnp.zeros((3 * H, 128), f32)
    w2h = w2h.at[0:H, 0:n_cont].set(p["mean_w2"])
    w2h = w2h.at[H:2 * H, n_cont:2 * n_cont].set(p["std_w2"])
    w2h = w2h.at[2 * H:3 * H, 2 * n_cont:2 * n_cont + 3].set(p["bin_w2"])
    prep["w2h"] = w2h.astype(bf16)
    b2h = jnp.zeros((1, 128), f32)
    b2h = b2h.at[0, 0:n_cont].set(p["mean_b2"])
    b2h = b2h.at[0, n_cont:2 * n_cont].set(p["std_b2"])
    b2h = b2h.at[0, 2 * n_cont:2 * n_cont + 3].set(p["bin_b2"])
    b2h = b2h.at[0, 2 * n_cont].add(p["forward_bias"])   # binary_logits[:, 0] += fb
    prep["b2h"] = b2h
    return prep


# ----------------------------------------------------------------------------
# Forward pass
# ----------------------------------------------------------------------------
def actor_forward(prep, state, *, action_dim=5, max_action=1.0):
    """state: (B, C, H, W) f32 NCHW.  Returns (mean, std, binary_logits).

    `max_action` is stored by the PyTorch module but unused in forward.
    """
    del max_action
    n_cont = action_dim - 3
    B = state.shape[0]

    # conv1 im2col as one fused op (feature order (Cin,kh,kw), NHWC spatial
    # output so no transpose is needed afterwards), then gridded Pallas matmul.
    p1 = jax.lax.conv_general_dilated_patches(
        state.astype(jnp.bfloat16), filter_shape=(8, 8), window_strides=(4, 4),
        padding="VALID", dimension_numbers=("NCHW", "OIHW", "NHWC"))
    _, h1, w1, k1 = p1.shape
    a1 = pallas_matmul_bias_relu(p1.reshape(B * h1 * w1, k1), prep["w1"], prep["b1"])
    a1 = a1.reshape(B, h1, w1, prep["w1"].shape[1])              # NHWC, pure reshape

    # conv2 im2col (NHWC in/out).  The fused torso kernel requires the conv2
    # output spatial extent to equal the conv3 kernel (3x3) => conv3 out = 1x1.
    p2 = jax.lax.conv_general_dilated_patches(
        a1, filter_shape=(4, 4), window_strides=(2, 2),
        padding="VALID", dimension_numbers=("NHWC", "HWIO", "NHWC"))
    _, ho2, wo2, k2 = p2.shape
    assert (ho2, wo2) == (3, 3), (
        f"fused torso kernel requires conv2 output spatial 3x3, got {(ho2, wo2)}")
    # TODO(synk): for inputs whose conv3 output is larger than 1x1 (e.g. the
    # 128x128 default), add a second im2col stage instead of the 9-term fusion.

    # Rows ordered (spatial, batch) so the kernel takes contiguous static slices.
    p2 = p2.reshape(B, ho2 * wo2, k2).transpose(1, 0, 2).reshape(ho2 * wo2 * B, k2)

    out = pallas_torso_heads(p2, prep, B, n_cont)                # (B, 128) lane-dense
    mean = out[:, 0:n_cont]
    std = out[:, n_cont:2 * n_cont]
    binary_logits = out[:, 2 * n_cont:2 * n_cont + 3]
    return mean, std, binary_logits


# ----------------------------------------------------------------------------
if __name__ == "__main__":
    # Small but architecture-consistent shapes: (4, 36, 36) input gives an
    # 8x8 -> 3x3 -> 1x1 conv chain (flattened_size = 128); batch=2; action_dim=5.
    input_shape = (4, 36, 36)
    batch = 2
    action_dim = 5

    key = jax.random.PRNGKey(0)
    k_in, k_par = jax.random.split(key)
    state = jax.random.normal(k_in, (batch,) + input_shape, jnp.float32)

    params = init_actor_params(k_par, input_shape=input_shape, action_dim=action_dim)
    prep = prepare_actor_params(params, action_dim=action_dim)

    fwd = jax.jit(actor_forward)
    mean, std, binary_logits = fwd(prep, state)
    jax.block_until_ready((mean, std, binary_logits))

    n_cont = action_dim - 3
    assert mean.shape == (batch, n_cont)
    assert std.shape == (batch, n_cont)
    assert binary_logits.shape == (batch, 3)
    assert bool(jnp.all(std > 0.0))
    assert bool(jnp.all(jnp.isfinite(mean)))
    assert bool(jnp.all(jnp.isfinite(binary_logits)))

    print("KERNEL_OK")
</pallas_src>

<mosaic_0001>
module attributes {stable_mosaic.version = 11 : i64} {
  func.func @_matmul_bias_relu_kernel(%arg0: i32, %arg1: memref<128x256xbf16, #tpu.memory_space<vmem>>, %arg2: memref<256x32xbf16, #tpu.memory_space<vmem>>, %arg3: memref<1x32xf32, #tpu.memory_space<vmem>>, %arg4: memref<128x32xbf16, #tpu.memory_space<vmem>>) attributes {dimension_semantics = [#tpu.dimension_semantics<parallel>], iteration_bounds = array<i64: 1>, scalar_prefetch = 0 : i64, scratch_operands = 0 : i64, tpu.core_type = #tpu.core_type<tc>, window_params = [{transform_indices = @transform_0, window_bounds = array<i64: 128, 256>}, {pipeline_mode = #tpu.pipeline_mode<synchronous>, transform_indices = @transform_1, window_bounds = array<i64: 256, 32>}, {pipeline_mode = #tpu.pipeline_mode<synchronous>, transform_indices = @transform_2, window_bounds = array<i64: 1, 32>}, {transform_indices = @transform_3, window_bounds = array<i64: 128, 32>}]} {
    %c0 = arith.constant 0 : index
    %c0_0 = arith.constant 0 : index
    %0 = vector.load %arg1[%c0, %c0_0] : memref<128x256xbf16, #tpu.memory_space<vmem>>, vector<128x256xbf16>
    %c0_1 = arith.constant 0 : index
    %c0_2 = arith.constant 0 : index
    %1 = vector.load %arg2[%c0_1, %c0_2] : memref<256x32xbf16, #tpu.memory_space<vmem>>, vector<256x32xbf16>
    %cst = arith.constant dense<0.000000e+00> : vector<128x32xf32>
    %2 = tpu.matmul %0, %1, %cst {dimension_numbers = #tpu.dot_dimension_numbers<[1], [0], [0], [1], [0, 0, 1, 1], [], []>} : vector<128x256xbf16>, vector<256x32xbf16>, vector<128x32xf32> -> vector<128x32xf32>
    %c0_3 = arith.constant 0 : index
    %c0_4 = arith.constant 0 : index
    %3 = vector.load %arg3[%c0_3, %c0_4] : memref<1x32xf32, #tpu.memory_space<vmem>>, vector<1x32xf32>
    %4 = vector.broadcast %3 : vector<1x32xf32> to vector<128x32xf32>
    %5 = arith.addf %2, %4 : vector<128x32xf32>
    %cst_5 = arith.constant 0.000000e+00 : f32
    %6 = vector.broadcast %cst_5 : f32 to vector<128x32xf32>
    %7 = arith.maximumf %5, %6 : vector<128x32xf32>
    %8 = arith.truncf %7 : vector<128x32xf32> to vector<128x32xbf16>
    %c0_6 = arith.constant 0 : index
    %c0_7 = arith.constant 0 : index
    %9 = vector.load %arg4[%c0_6, %c0_7] : memref<128x32xbf16, #tpu.memory_space<vmem>>, vector<128x32xbf16>
    tpu.vector_store %arg4[%c0_6, %c0_7], %8 {strides = array<i32>} : memref<128x32xbf16, #tpu.memory_space<vmem>>, vector<128x32xbf16>,
    return
  }
  func.func @transform_0(%arg0: i32) -> (i32, i32) {
    %c0_i32 = arith.constant 0 : i32
    %c0_i32_0 = arith.constant 0 : i32
    return %arg0, %c0_i32 : i32, i32
  }
  func.func @transform_1(%arg0: i32) -> (i32, i32) {
    %c0_i32 = arith.constant 0 : i32
    %c0_i32_0 = arith.constant 0 : i32
    %c0_i32_1 = arith.constant 0 : i32
    return %c0_i32, %c0_i32_0 : i32, i32
  }
  func.func @transform_2(%arg0: i32) -> (i32, i32) {
    %c0_i32 = arith.constant 0 : i32
    %c0_i32_0 = arith.constant 0 : i32
    %c0_i32_1 = arith.constant 0 : i32
    return %c0_i32, %c0_i32_0 : i32, i32
  }
  func.func @transform_3(%arg0: i32) -> (i32, i32) {
    %c0_i32 = arith.constant 0 : i32
    %c0_i32_0 = arith.constant 0 : i32
    return %arg0, %c0_i32 : i32, i32
  }
}

module attributes {stable_mosaic.version = 11 : i64} {
  func.func @_torso_heads_kernel(%arg0: memref<18x512xbf16, #tpu.memory_space<vmem>>, %arg1: memref<512x64xbf16, #tpu.memory_space<vmem>>, %arg2: memref<1x64xf32, #tpu.memory_space<vmem>>, %arg3: memref<576x128xbf16, #tpu.memory_space<vmem>>, %arg4: memref<1x128xf32, #tpu.memory_space<vmem>>, %arg5: memref<128x512xbf16, #tpu.memory_space<vmem>>, %arg6: memref<1x512xf32, #tpu.memory_space<vmem>>, %arg7: memref<512x768xbf16, #tpu.memory_space<vmem>>, %arg8: memref<1x768xf32, #tpu.memory_space<vmem>>, %arg9: memref<768x128xbf16, #tpu.memory_space<vmem>>, %arg10: memref<1x128xf32, #tpu.memory_space<vmem>>, %arg11: memref<2x128xf32, #tpu.memory_space<vmem>>) attributes {dimension_semantics = [], scalar_prefetch = 0 : i64, scratch_operands = 0 : i64, tpu.core_type = #tpu.core_type<tc>} {
    %c0 = arith.constant 0 : index
    %c0_0 = arith.constant 0 : index
    %0 = vector.load %arg0[%c0, %c0_0] : memref<18x512xbf16, #tpu.memory_space<vmem>>, vector<18x512xbf16>
    %c0_1 = arith.constant 0 : index
    %c0_2 = arith.constant 0 : index
    %1 = vector.load %arg1[%c0_1, %c0_2] : memref<512x64xbf16, #tpu.memory_space<vmem>>, vector<512x64xbf16>
    %cst = arith.constant dense<0.000000e+00> : vector<18x64xf32>
    %2 = tpu.matmul %0, %1, %cst {dimension_numbers = #tpu.dot_dimension_numbers<[1], [0], [0], [1], [0, 0, 1, 1], [], []>} : vector<18x512xbf16>, vector<512x64xbf16>, vector<18x64xf32> -> vector<18x64xf32>
    %c0_3 = arith.constant 0 : index
    %c0_4 = arith.constant 0 : index
    %3 = vector.load %arg2[%c0_3, %c0_4] : memref<1x64xf32, #tpu.memory_space<vmem>>, vector<1x64xf32>
    %4 = vector.broadcast %3 : vector<1x64xf32> to vector<18x64xf32>
    %5 = arith.addf %2, %4 : vector<18x64xf32>
    %cst_5 = arith.constant 0.000000e+00 : f32
    %6 = vector.broadcast %cst_5 : f32 to vector<18x64xf32>
    %7 = arith.maximumf %5, %6 : vector<18x64xf32>
    %cst_6 = arith.constant 0.000000e+00 : f32
    %8 = vector.broadcast %cst_6 : f32 to vector<2x128xf32>
    %9 = vector.extract_strided_slice %7 {offsets = [0, 0], sizes = [2, 64], strides = [1, 1]} : vector<18x64xf32> to vector<2x64xf32>
    %10 = arith.truncf %9 : vector<2x64xf32> to vector<2x64xbf16>
    %c0_7 = arith.constant 0 : index
    %c0_8 = arith.constant 0 : index
    %11 = vector.load %arg3[%c0_7, %c0_8] : memref<576x128xbf16, #tpu.memory_space<vmem>>, vector<64x128xbf16>
    %cst_9 = arith.constant dense<0.000000e+00> : vector<2x128xf32>
    %12 = tpu.matmul %10, %11, %cst_9 {dimension_numbers = #tpu.dot_dimension_numbers<[1], [0], [0], [1], [0, 0, 1, 1], [], []>} : vector<2x64xbf16>, vector<64x128xbf16>, vector<2x128xf32> -> vector<2x128xf32>
    %13 = arith.addf %8, %12 : vector<2x128xf32>
    %14 = vector.extract_strided_slice %7 {offsets = [2, 0], sizes = [2, 64], strides = [1, 1]} : vector<18x64xf32> to vector<2x64xf32>
    %15 = arith.truncf %14 : vector<2x64xf32> to vector<2x64xbf16>
    %c64 = arith.constant 64 : index
    %c0_10 = arith.constant 0 : index
    %16 = vector.load %arg3[%c64, %c0_10] : memref<576x128xbf16, #tpu.memory_space<vmem>>, vector<64x128xbf16>
    %cst_11 = arith.constant dense<0.000000e+00> : vector<2x128xf32>
    %17 = tpu.matmul %15, %16, %cst_11 {dimension_numbers = #tpu.dot_dimension_numbers<[1], [0], [0], [1], [0, 0, 1, 1], [], []>} : vector<2x64xbf16>, vector<64x128xbf16>, vector<2x128xf32> -> vector<2x128xf32>
    %18 = arith.addf %13, %17 : vector<2x128xf32>
    %19 = vector.extract_strided_slice %7 {offsets = [4, 0], sizes = [2, 64], strides = [1, 1]} : vector<18x64xf32> to vector<2x64xf32>
    %20 = arith.truncf %19 : vector<2x64xf32> to vector<2x64xbf16>
    %c128 = arith.constant 128 : index
    %c0_12 = arith.constant 0 : index
    %21 = vector.load %arg3[%c128, %c0_12] : memref<576x128xbf16, #tpu.memory_space<vmem>>, vector<64x128xbf16>
    %cst_13 = arith.constant dense<0.000000e+00> : vector<2x128xf32>
    %22 = tpu.matmul %20, %21, %cst_13 {dimension_numbers = #tpu.dot_dimension_numbers<[1], [0], [0], [1], [0, 0, 1, 1], [], []>} : vector<2x64xbf16>, vector<64x128xbf16>, vector<2x128xf32> -> vector<2x128xf32>
    %23 = arith.addf %18, %22 : vector<2x128xf32>
    %24 = vector.extract_strided_slice %7 {offsets = [6, 0], sizes = [2, 64], strides = [1, 1]} : vector<18x64xf32> to vector<2x64xf32>
    %25 = arith.truncf %24 : vector<2x64xf32> to vector<2x64xbf16>
    %c192 = arith.constant 192 : index
    %c0_14 = arith.constant 0 : index
    %26 = vector.load %arg3[%c192, %c0_14] : memref<576x128xbf16, #tpu.memory_space<vmem>>, vector<64x128xbf16>
    %cst_15 = arith.constant dense<0.000000e+00> : vector<2x128xf32>
    %27 = tpu.matmul %25, %26, %cst_15 {dimension_numbers = #tpu.dot_dimension_numbers<[1], [0], [0], [1], [0, 0, 1, 1], [], []>} : vector<2x64xbf16>, vector<64x128xbf16>, vector<2x128xf32> -> vector<2x128xf32>
    %28 = arith.addf %23, %27 : vector<2x128xf32>
    %29 = vector.extract_strided_slice %7 {offsets = [8, 0], sizes = [2, 64], strides = [1, 1]} : vector<18x64xf32> to vector<2x64xf32>
    %30 = arith.truncf %29 : vector<2x64xf32> to vector<2x64xbf16>
    %c256 = arith.constant 256 : index
    %c0_16 = arith.constant 0 : index
    %31 = vector.load %arg3[%c256, %c0_16] : memref<576x128xbf16, #tpu.memory_space<vmem>>, vector<64x128xbf16>
    %cst_17 = arith.constant dense<0.000000e+00> : vector<2x128xf32>
    %32 = tpu.matmul %30, %31, %cst_17 {dimension_numbers = #tpu.dot_dimension_numbers<[1], [0], [0], [1], [0, 0, 1, 1], [], []>} : vector<2x64xbf16>, vector<64x128xbf16>, vector<2x128xf32> -> vector<2x128xf32>
    %33 = arith.addf %28, %32 : vector<2x128xf32>
    %34 = vector.extract_strided_slice %7 {offsets = [10, 0], sizes = [2, 64], strides = [1, 1]} : vector<18x64xf32> to vector<2x64xf32>
    %35 = arith.truncf %34 : vector<2x64xf32> to vector<2x64xbf16>
    %c320 = arith.constant 320 : index
    %c0_18 = arith.constant 0 : index
    %36 = vector.load %arg3[%c320, %c0_18] : memref<576x128xbf16, #tpu.memory_space<vmem>>, vector<64x128xbf16>
    %cst_19 = arith.constant dense<0.000000e+00> : vector<2x128xf32>
    %37 = tpu.matmul %35, %36, %cst_19 {dimension_numbers = #tpu.dot_dimension_numbers<[1], [0], [0], [1], [0, 0, 1, 1], [], []>} : vector<2x64xbf16>, vector<64x128xbf16>, vector<2x128xf32> -> vector<2x128xf32>
    %38 = arith.addf %33, %37 : vector<2x128xf32>
    %39 = vector.extract_strided_slice %7 {offsets = [12, 0], sizes = [2, 64], strides = [1, 1]} : vector<18x64xf32> to vector<2x64xf32>
    %40 = arith.truncf %39 : vector<2x64xf32> to vector<2x64xbf16>
    %c384 = arith.constant 384 : index
    %c0_20 = arith.constant 0 : index
    %41 = vector.load %arg3[%c384, %c0_20] : memref<576x128xbf16, #tpu.memory_space<vmem>>, vector<64x128xbf16>
    %cst_21 = arith.constant dense<0.000000e+00> : vector<2x128xf32>
    %42 = tpu.matmul %40, %41, %cst_21 {dimension_numbers = #tpu.dot_dimension_numbers<[1], [0], [0], [1], [0, 0, 1, 1], [], []>} : vector<2x64xbf16>, vector<64x128xbf16>, vector<2x128xf32> -> vector<2x128xf32>
    %43 = arith.addf %38, %42 : vector<2x128xf32>
    %44 = vector.extract_strided_slice %7 {offsets = [14, 0], sizes = [2, 64], strides = [1, 1]} : vector<18x64xf32> to vector<2x64xf32>
    %45 = arith.truncf %44 : vector<2x64xf32> to vector<2x64xbf16>
    %c448 = arith.constant 448 : index
    %c0_22 = arith.constant 0 : index
    %46 = vector.load %arg3[%c448, %c0_22] : memref<576x128xbf16, #tpu.memory_space<vmem>>, vector<64x128xbf16>
    %cst_23 = arith.constant dense<0.000000e+00> : vector<2x128xf32>
    %47 = tpu.matmul %45, %46, %cst_23 {dimension_numbers = #tpu.dot_dimension_numbers<[1], [0], [0], [1], [0, 0, 1, 1], [], []>} : vector<2x64xbf16>, vector<64x128xbf16>, vector<2x128xf32> -> vector<2x128xf32>
    %48 = arith.addf %43, %47 : vector<2x128xf32>
    %49 = vector.extract_strided_slice %7 {offsets = [16, 0], sizes = [2, 64], strides = [1, 1]} : vector<18x64xf32> to vector<2x64xf32>
    %50 = arith.truncf %49 : vector<2x64xf32> to vector<2x64xbf16>
    %c512 = arith.constant 512 : index
    %c0_24 = arith.constant 0 : index
    %51 = vector.load %arg3[%c512, %c0_24] : memref<576x128xbf16, #tpu.memory_space<vmem>>, vector<64x128xbf16>
    %cst_25 = arith.constant dense<0.000000e+00> : vector<2x128xf32>
    %52 = tpu.matmul %50, %51, %cst_25 {dimension_numbers = #tpu.dot_dimension_numbers<[1], [0], [0], [1], [0, 0, 1, 1], [], []>} : vector<2x64xbf16>, vector<64x128xbf16>, vector<2x128xf32> -> vector<2x128xf32>
    %53 = arith.addf %48, %52 : vector<2x128xf32>
    %c0_26 = arith.constant 0 : index
    %c0_27 = arith.constant 0 : index
    %54 = vector.load %arg4[%c0_26, %c0_27] : memref<1x128xf32, #tpu.memory_space<vmem>>, vector<1x128xf32>
    %55 = vector.broadcast %54 : vector<1x128xf32> to vector<2x128xf32>
    %56 = arith.addf %53, %55 : vector<2x128xf32>
    %cst_28 = arith.constant 0.000000e+00 : f32
    %57 = vector.broadcast %cst_28 : f32 to vector<2x128xf32>
    %58 = arith.maximumf %56, %57 : vector<2x128xf32>
    %59 = arith.truncf %58 : vector<2x128xf32> to vector<2x128xbf16>
    %c0_29 = arith.constant 0 : index
    %c0_30 = arith.constant 0 : index
    %60 = vector.load %arg5[%c0_29, %c0_30] : memref<128x512xbf16, #tpu.memory_space<vmem>>, vector<128x512xbf16>
    %cst_31 = arith.constant dense<0.000000e+00> : vector<2x512xf32>
    %61 = tpu.matmul %59, %60, %cst_31 {dimension_numbers = #tpu.dot_dimension_numbers<[1], [0], [0], [1], [0, 0, 1, 1], [], []>} : vector<2x128xbf16>, vector<128x512xbf16>, vector<2x512xf32> -> vector<2x512xf32>
    %c0_32 = arith.constant 0 : index
    %c0_33 = arith.constant 0 : index
    %62 = vector.load %arg6[%c0_32, %c0_33] : memref<1x512xf32, #tpu.memory_space<vmem>>, vector<1x512xf32>
    %63 = vector.broadcast %62 : vector<1x512xf32> to vector<2x512xf32>
    %64 = arith.addf %61, %63 : vector<2x512xf32>
    %cst_34 = arith.constant 0.000000e+00 : f32
    %65 = vector.broadcast %cst_34 : f32 to vector<2x512xf32>
    %66 = arith.maximumf %64, %65 : vector<2x512xf32>
    %67 = arith.truncf %66 : vector<2x512xf32> to vector<2x512xbf16>
    %c0_35 = arith.constant 0 : index
    %c0_36 = arith.constant 0 : index
    %68 = vector.load %arg7[%c0_35, %c0_36] : memref<512x768xbf16, #tpu.memory_space<vmem>>, vector<512x768xbf16>
    %cst_37 = arith.constant dense<0.000000e+00> : vector<2x768xf32>
    %69 = tpu.matmul %67, %68, %cst_37 {dimension_numbers = #tpu.dot_dimension_numbers<[1], [0], [0], [1], [0, 0, 1, 1], [], []>} : vector<2x512xbf16>, vector<512x768xbf16>, vector<2x768xf32> -> vector<2x768xf32>
    %c0_38 = arith.constant 0 : index
    %c0_39 = arith.constant 0 : index
    %70 = vector.load %arg8[%c0_38, %c0_39] : memref<1x768xf32, #tpu.memory_space<vmem>>, vector<1x768xf32>
    %71 = vector.broadcast %70 : vector<1x768xf32> to vector<2x768xf32>
    %72 = arith.addf %69, %71 : vector<2x768xf32>
    %cst_40 = arith.constant 0.000000e+00 : f32
    %73 = vector.broadcast %cst_40 : f32 to vector<2x768xf32>
    %74 = arith.maximumf %72, %73 : vector<2x768xf32>
    %75 = arith.truncf %74 : vector<2x768xf32> to vector<2x768xbf16>
    %c0_41 = arith.constant 0 : index
    %c0_42 = arith.constant 0 : index
    %76 = vector.load %arg9[%c0_41, %c0_42] : memref<768x128xbf16, #tpu.memory_space<vmem>>, vector<768x128xbf16>
    %cst_43 = arith.constant dense<0.000000e+00> : vector<2x128xf32>
    %77 = tpu.matmul %75, %76, %cst_43 {dimension_numbers = #tpu.dot_dimension_numbers<[1], [0], [0], [1], [0, 0, 1, 1], [], []>} : vector<2x768xbf16>, vector<768x128xbf16>, vector<2x128xf32> -> vector<2x128xf32>
    %c0_44 = arith.constant 0 : index
    %c0_45 = arith.constant 0 : index
    %78 = vector.load %arg10[%c0_44, %c0_45] : memref<1x128xf32, #tpu.memory_space<vmem>>, vector<1x128xf32>
    %79 = vector.broadcast %78 : vector<1x128xf32> to vector<2x128xf32>
    %80 = arith.addf %77, %79 : vector<2x128xf32>
    %81 = tpu.iota {dimensions = array<i32: 1>} : vector<2x128xi32>
    %cst_46 = arith.constant -2.000000e+01 : f32
    %cst_47 = arith.constant 2.000000e+00 : f32
    %82 = vector.broadcast %cst_46 : f32 to vector<2x128xf32>
    %83 = arith.maximumf %82, %80 : vector<2x128xf32>
    %84 = vector.broadcast %cst_47 : f32 to vector<2x128xf32>
    %85 = arith.minimumf %84, %83 : vector<2x128xf32>
    %86 = math.exp %85 : vector<2x128xf32>
    %c2_i32 = arith.constant 2 : i32
    %87 = vector.broadcast %c2_i32 : i32 to vector<2x128xi32>
    %88 = arith.cmpi sge, %81, %87 : vector<2x128xi32>
    %c4_i32 = arith.constant 4 : i32
    %89 = vector.broadcast %c4_i32 : i32 to vector<2x128xi32>
    %90 = arith.cmpi slt, %81, %89 : vector<2x128xi32>
    %91 = arith.andi %88, %90 : vector<2x128xi1>
    %92 = arith.select %91, %86, %80 : vector<2x128xi1>, vector<2x128xf32>
    %c0_48 = arith.constant 0 : index
    %c0_49 = arith.constant 0 : index
    %93 = vector.load %arg11[%c0_48, %c0_49] : memref<2x128xf32, #tpu.memory_space<vmem>>, vector<2x128xf32>
    tpu.vector_store %arg11[%c0_48, %c0_49], %92 {strides = array<i32>} : memref<2x128xf32, #tpu.memory_space<vmem>>, vector<2x128xf32>,
    return
  }
}

</mosaic_0001>

<llo_original>
// kernel: actor_forward.2
$region0: #{actor_forward.2}
  #allocation0 [shape = 'u32[]', space=smem, size = 0x4, offset = 0x4, fixed_abs, tag = 'smem constant byte address 0x4 - core index']
  #allocation1 [shape = 'u32[72,128]{1,0:T(1,128)}', space=vmem, size = 0x9000, scoped, tag = 'internal scratch']
  %s0 = inlined_call_operand.vmem [shape: bf16[128,256], index: 0, kind: input, shape index: {}]
  %s1 = inlined_call_operand.vmem [shape: bf16[256,32], index: 1, kind: input, shape index: {}]
  %s2 = inlined_call_operand.vmem [shape: f32[1,32], index: 2, kind: input, shape index: {}]
  %s3 = inlined_call_operand.vmem [shape: bf16[128,32], index: 3, kind: output, shape index: {}]
  %s4 = sld [smem:[#allocation0]]
  $region22: #{actor_forward.2} parent=0
    _
  %s6 = ssub.s32 1, %s4
  %s7 = scalar_select 0, %s6, %s4
  // Predicated region
  $region2: #{actor_forward.2} parent=0 // pred_check
    _
  $region3: #{actor_forward.2} parent=0 // pred_check_branch
    %9 = sbr.rel (0) target = $region5
  $region4: #{actor_forward.2} parent=0 // pred_region
    _
  $region5: #{actor_forward.2} parent=0 // pred_fallthru
    _
  // Predicated region
  $region6: #{actor_forward.2} parent=0 // pred_check
    _
  $region7: #{actor_forward.2} parent=0 // pred_check_branch
    %11 = sbr.rel (0) target = $region9
  $region8: #{actor_forward.2} parent=0 // pred_region
    _
  $region9: #{actor_forward.2} parent=0 // pred_fallthru
    _
  // Predicated region
  $region10: #{actor_forward.2} parent=0 // pred_check
    _
  $region11: #{actor_forward.2} parent=0 // pred_check_branch
    %13 = sbr.rel (0) target = $region13
  $region12: #{actor_forward.2} parent=0 // pred_region
    _
  $region13: #{actor_forward.2} parent=0 // pred_fallthru
    _
  %v14 = vld [vmem:[%s0] sm:$0xff]
  %v15 = vld [vmem:[%s0 + $0x8] sm:$0xff]
  %v16 = vld [vmem:[%s0 + $0x10] sm:$0xff]
  %v17 = vld [vmem:[%s0 + $0x18] sm:$0xff]
  %v18 = vld [vmem:[%s0 + $0x20] sm:$0xff]
  %v19 = vld [vmem:[%s0 + $0x28] sm:$0xff]
  %v20 = vld [vmem:[%s0 + $0x30] sm:$0xff]
  %v21 = vld [vmem:[%s0 + $0x38] sm:$0xff]
  %v22 = vld [vmem:[%s0 + $0x40] sm:$0xff]
  %v23 = vld [vmem:[%s0 + $0x48] sm:$0xff]
  %v24 = vld [vmem:[%s0 + $0x50] sm:$0xff]
  %v25 = vld [vmem:[%s0 + $0x58] sm:$0xff]
  %v26 = vld [vmem:[%s0 + $0x60] sm:$0xff]
  %v27 = vld [vmem:[%s0 + $0x68] sm:$0xff]
  %v28 = vld [vmem:[%s0 + $0x70] sm:$0xff]
  %v29 = vld [vmem:[%s0 + $0x78] sm:$0xff]
  %v30 = vld [vmem:[%s1] sm:$0xf]
  %v31 = vld [vmem:[%s1 + $0x4] sm:$0xf]
  %v32 = vld [vmem:[%s1 + $0x8] sm:$0xf]
  %v33 = vld [vmem:[%s1 + $0xc] sm:$0xf]
  %v34 = vld [vmem:[%s1 + $0x10] sm:$0xf]
  %v35 = vld [vmem:[%s1 + $0x14] sm:$0xf]
  %v36 = vld [vmem:[%s1 + $0x18] sm:$0xf]
  %v37 = vld [vmem:[%s1 + $0x1c] sm:$0xf]
  %v38 = vld [vmem:[%s1 + $0x20] sm:$0xf]
  %v39 = vld [vmem:[%s1 + $0x24] sm:$0xf]
  %v40 = vld [vmem:[%s1 + $0x28] sm:$0xf]
  %v41 = vld [vmem:[%s1 + $0x2c] sm:$0xf]
  %v42 = vld [vmem:[%s1 + $0x30] sm:$0xf]
  %v43 = vld [vmem:[%s1 + $0x34] sm:$0xf]
  %v44 = vld [vmem:[%s1 + $0x38] sm:$0xf]
  %v45 = vld [vmem:[%s1 + $0x3c] sm:$0xf]
  %v46 = vld [vmem:[%s1 + $0x40] sm:$0xf]
  %v47 = vld [vmem:[%s1 + $0x44] sm:$0xf]
  %v48 = vld [vmem:[%s1 + $0x48] sm:$0xf]
  %v49 = vld [vmem:[%s1 + $0x4c] sm:$0xf]
  %v50 = vld [vmem:[%s1 + $0x50] sm:$0xf]
  %v51 = vld [vmem:[%s1 + $0x54] sm:$0xf]
  %v52 = vld [vmem:[%s1 + $0x58] sm:$0xf]
  %v53 = vld [vmem:[%s1 + $0x5c] sm:$0xf]
  %v54 = vld [vmem:[%s1 + $0x60] sm:$0xf]
  %v55 = vld [vmem:[%s1 + $0x64] sm:$0xf]
  %v56 = vld [vmem:[%s1 + $0x68] sm:$0xf]
  %v57 = vld [vmem:[%s1 + $0x6c] sm:$0xf]
  %v58 = vld [vmem:[%s1 + $0x70] sm:$0xf]
  %v59 = vld [vmem:[%s1 + $0x74] sm:$0xf]
  %v60 = vld [vmem:[%s1 + $0x78] sm:$0xf]
  %v61 = vld [vmem:[%s1 + $0x7c] sm:$0xf]
  %v62 = vld [vmem:[%s2] sm:$0x1]
  %v64 = vperm.slane %v62, 0
  %v82 = vunpack.c.l.b16 %v14
  %v83 = vunpack.c.h.b16 %v14
  %v84 = vunpack.c.l.b16 %v15
  %v85 = vunpack.c.h.b16 %v15
  %v86 = vunpack.c.l.b16 %v16
  %v87 = vunpack.c.h.b16 %v16
  %v88 = vunpack.c.l.b16 %v17
  %v89 = vunpack.c.h.b16 %v17
  %v90 = vunpack.c.l.b16 %v18
  %v91 = vunpack.c.h.b16 %v18
  %v92 = vunpack.c.l.b16 %v19
  %v93 = vunpack.c.h.b16 %v19
  %v94 = vunpack.c.l.b16 %v20
  %v95 = vunpack.c.h.b16 %v20
  %v96 = vunpack.c.l.b16 %v21
  %v97 = vunpack.c.h.b16 %v21
  %v98 = vunpack.c.l.b16 %v22
  %v99 = vunpack.c.h.b16 %v22
  %v100 = vunpack.c.l.b16 %v23
  %v101 = vunpack.c.h.b16 %v23
  %v102 = vunpack.c.l.b16 %v24
  %v103 = vunpack.c.h.b16 %v24
  %v104 = vunpack.c.l.b16 %v25
  %v105 = vunpack.c.h.b16 %v25
  %v106 = vunpack.c.l.b16 %v26
  %v107 = vunpack.c.h.b16 %v26
  %v108 = vunpack.c.l.b16 %v27
  %v109 = vunpack.c.h.b16 %v27
  %v110 = vunpack.c.l.b16 %v28
  %v111 = vunpack.c.h.b16 %v28
  %v112 = vunpack.c.l.b16 %v29
  %v113 = vunpack.c.h.b16 %v29
  %v114 = vpack.c.b16 %v84, %v82
  %v115 = vpack.c.b16 %v85, %v83
  %v116 = vpack.c.b16 %v88, %v86
  %v117 = vpack.c.b16 %v89, %v87
  %v118 = vpack.c.b16 %v92, %v90
  %v119 = vpack.c.b16 %v93, %v91
  %v120 = vpack.c.b16 %v96, %v94
  %v121 = vpack.c.b16 %v97, %v95
  %v122 = vpack.c.b16 %v100, %v98
  %v123 = vpack.c.b16 %v101, %v99
  %v124 = vpack.c.b16 %v104, %v102
  %v125 = vpack.c.b16 %v105, %v103
  %v126 = vpack.c.b16 %v108, %v106
  %v127 = vpack.c.b16 %v109, %v107
  %v128 = vpack.c.b16 %v112, %v110
  %v129 = vpack.c.b16 %v113, %v111
  %v178 = vunpack.c.l.b16 %v30
  %v179 = vunpack.c.l.b16 %v31
  %v180 = vunpack.c.l.b16 %v32
  %v181 = vunpack.c.l.b16 %v33
  %v182 = vunpack.c.l.b16 %v34
  %v183 = vunpack.c.l.b16 %v35
  %v184 = vunpack.c.l.b16 %v36
  %v185 = vunpack.c.l.b16 %v37
  %v186 = vunpack.c.l.b16 %v38
  %v187 = vunpack.c.l.b16 %v39
  %v188 = vunpack.c.l.b16 %v40
  %v189 = vunpack.c.l.b16 %v41
  %v190 = vunpack.c.l.b16 %v42
  %v191 = vunpack.c.l.b16 %v43
  %v192 = vunpack.c.l.b16 %v44
  %v193 = vunpack.c.l.b16 %v45
  %v194 = vunpack.c.l.b16 %v46
  %v195 = vunpack.c.l.b16 %v47
  %v196 = vunpack.c.l.b16 %v48
  %v197 = vunpack.c.l.b16 %v49
  %v198 = vunpack.c.l.b16 %v50
  %v199 = vunpack.c.l.b16 %v51
  %v200 = vunpack.c.l.b16 %v52
  %v201 = vunpack.c.l.b16 %v53
  %v202 = vunpack.c.l.b16 %v54
  %v203 = vunpack.c.l.b16 %v55
  %v204 = vunpack.c.l.b16 %v56
  %v205 = vunpack.c.l.b16 %v57
  %v206 = vunpack.c.l.b16 %v58
  %v207 = vunpack.c.l.b16 %v59
  %v208 = vunpack.c.l.b16 %v60
  %v209 = vunpack.c.l.b16 %v61
  %v210 = vpack.c.b16 %v179, %v178
  %v211 = vpack.c.b16 %v181, %v180
  %v212 = vpack.c.b16 %v183, %v182
  %v213 = vpack.c.b16 %v185, %v184
  %v214 = vpack.c.b16 %v187, %v186
  %v215 = vpack.c.b16 %v189, %v188
  %v216 = vpack.c.b16 %v191, %v190
  %v217 = vpack.c.b16 %v193, %v192
  %v218 = vpack.c.b16 %v195, %v194
  %v219 = vpack.c.b16 %v197, %v196
  %v220 = vpack.c.b16 %v199, %v198
  %v221 = vpack.c.b16 %v201, %v200
  %v222 = vpack.c.b16 %v203, %v202
  %v223 = vpack.c.b16 %v205, %v204
  %v224 = vpack.c.b16 %v207, %v206
  %v225 = vpack.c.b16 %v209, %v208
  %242 = vmatpush.bf16.msra.mxu0 %v217
  %243 = vmatpush.bf16.msra.mxu0 %v216
  %244 = vmatpush.bf16.msra.mxu0 %v215
  %245 = vmatpush.bf16.msra.mxu0 %v214
  %246 = vmatpush.bf16.msra.mxu0 %v213
  %247 = vmatpush.bf16.msra.mxu0 %v212
  %248 = vmatpush.bf16.msra.mxu0 %v211
  %249 = vmatpush.bf16.msra.mxu0 %v210
  %250 = vmatmul.bf16.gmra.mxu0 %v114
  %v251 = vpop.f32.mrf.mxu0
  %v252 = vadd.f32 %v64, %v251
  %v253 = vpop.f32.mrf.mxu0
  %v254 = vadd.f32 %v64, %v253
  %255 = vmatmul.bf16.gmra.mxu0 %v116
  %v256 = vpop.f32.mrf.mxu0
  %v257 = vadd.f32 %v64, %v256
  %v258 = vpop.f32.mrf.mxu0
  %v259 = vadd.f32 %v64, %v258
  %260 = vmatmul.bf16.gmra.mxu0 %v118
  %v261 = vpop.f32.mrf.mxu0
  %v262 = vadd.f32 %v64, %v261
  %v263 = vpop.f32.mrf.mxu0
  %v264 = vadd.f32 %v64, %v263
  %265 = vmatmul.bf16.gmra.mxu0 %v120
  %v266 = vpop.f32.mrf.mxu0
  %v267 = vadd.f32 %v64, %v266
  %v268 = vpop.f32.mrf.mxu0
  %v269 = vadd.f32 %v64, %v268
  %270 = vmatmul.bf16.gmra.mxu0 %v122
  %v271 = vpop.f32.mrf.mxu0
  %v272 = vadd.f32 %v64, %v271
  %v273 = vpop.f32.mrf.mxu0
  %v274 = vadd.f32 %v64, %v273
  %275 = vmatmul.bf16.gmra.mxu0 %v124
  %v276 = vpop.f32.mrf.mxu0
  %v277 = vadd.f32 %v64, %v276
  %v278 = vpop.f32.mrf.mxu0
  %v279 = vadd.f32 %v64, %v278
  %280 = vmatmul.bf16.gmra.mxu0 %v126
  %v281 = vpop.f32.mrf.mxu0
  %v282 = vadd.f32 %v64, %v281
  %v283 = vpop.f32.mrf.mxu0
  %v284 = vadd.f32 %v64, %v283
  %285 = vmatmul.bf16.gmra.mxu0 %v128
  %v286 = vpop.f32.mrf.mxu0
  %v287 = vadd.f32 %v64, %v286
  %v288 = vpop.f32.mrf.mxu0
  %v289 = vadd.f32 %v64, %v288
  %290 = vdwg.mxu0
  %291 = vmatpush.bf16.msra.mxu0 %v225
  %292 = vmatpush.bf16.msra.mxu0 %v224
  %293 = vmatpush.bf16.msra.mxu0 %v223
  %294 = vmatpush.bf16.msra.mxu0 %v222
  %295 = vmatpush.bf16.msra.mxu0 %v221
  %296 = vmatpush.bf16.msra.mxu0 %v220
  %297 = vmatpush.bf16.msra.mxu0 %v219
  %298 = vmatpush.bf16.msra.mxu0 %v218
  %299 = vmatmul.bf16.gmra.mxu0 %v115
  %v300 = vpop.f32.mrf.mxu0
  %v301 = vadd.f32 %v252, %v300
  %v302 = vpop.f32.mrf.mxu0
  %v303 = vadd.f32 %v254, %v302
  %304 = vmatmul.bf16.gmra.mxu0 %v117
  %v305 = vpop.f32.mrf.mxu0
  %v306 = vadd.f32 %v257, %v305
  %v307 = vpop.f32.mrf.mxu0
  %v308 = vadd.f32 %v259, %v307
  %309 = vmatmul.bf16.gmra.mxu0 %v119
  %v310 = vpop.f32.mrf.mxu0
  %v311 = vadd.f32 %v262, %v310
  %v312 = vpop.f32.mrf.mxu0
  %v313 = vadd.f32 %v264, %v312
  %314 = vmatmul.bf16.gmra.mxu0 %v121
  %v315 = vpop.f32.mrf.mxu0
  %v316 = vadd.f32 %v267, %v315
  %v317 = vpop.f32.mrf.mxu0
  %v318 = vadd.f32 %v269, %v317
  %319 = vmatmul.bf16.gmra.mxu0 %v123
  %v320 = vpop.f32.mrf.mxu0
  %v321 = vadd.f32 %v272, %v320
  %v322 = vpop.f32.mrf.mxu0
  %v323 = vadd.f32 %v274, %v322
  %324 = vmatmul.bf16.gmra.mxu0 %v125
  %v325 = vpop.f32.mrf.mxu0
  %v326 = vadd.f32 %v277, %v325
  %v327 = vpop.f32.mrf.mxu0
  %v328 = vadd.f32 %v279, %v327
  %329 = vmatmul.bf16.gmra.mxu0 %v127
  %v330 = vpop.f32.mrf.mxu0
  %v331 = vadd.f32 %v282, %v330
  %v332 = vpop.f32.mrf.mxu0
  %v333 = vadd.f32 %v284, %v332
  %334 = vmatmul.bf16.gmra.mxu0 %v129
  %v335 = vpop.f32.mrf.mxu0
  %v336 = vadd.f32 %v287, %v335
  %v337 = vpop.f32.mrf.mxu0
  %v338 = vadd.f32 %v289, %v337
  %339 = vdwg.mxu0
  %v340 = vmax.f32 %v301, 0.0
  %v341 = vmax.f32 %v303, 0.0
  %v342 = vmax.f32 %v306, 0.0
  %v343 = vmax.f32 %v308, 0.0
  %v344 = vmax.f32 %v311, 0.0
  %v345 = vmax.f32 %v313, 0.0
  %v346 = vmax.f32 %v316, 0.0
  %v347 = vmax.f32 %v318, 0.0
  %v348 = vmax.f32 %v321, 0.0
  %v349 = vmax.f32 %v323, 0.0
  %v350 = vmax.f32 %v326, 0.0
  %v351 = vmax.f32 %v328, 0.0
  %v352 = vmax.f32 %v331, 0.0
  %v353 = vmax.f32 %v333, 0.0
  %v354 = vmax.f32 %v336, 0.0
  %v355 = vmax.f32 %v338, 0.0
  %v356 = vpack.c.bf16 %v340, %v340
  %v357 = vpack.c.bf16 %v341, %v341
  %v358 = vpack.c.bf16 %v342, %v342
  %v359 = vpack.c.bf16 %v343, %v343
  %v360 = vpack.c.bf16 %v344, %v344
  %v361 = vpack.c.bf16 %v345, %v345
  %v362 = vpack.c.bf16 %v346, %v346
  %v363 = vpack.c.bf16 %v347, %v347
  %v364 = vpack.c.bf16 %v348, %v348
  %v365 = vpack.c.bf16 %v349, %v349
  %v366 = vpack.c.bf16 %v350, %v350
  %v367 = vpack.c.bf16 %v351, %v351
  %v368 = vpack.c.bf16 %v352, %v352
  %v369 = vpack.c.bf16 %v353, %v353
  %v370 = vpack.c.bf16 %v354, %v354
  %v371 = vpack.c.bf16 %v355, %v355
  %vm372 = vcmask 257024
  %373 = vst.msk [vmem:[%s3] sm:$0xf] %vm372, %v356
  %374 = vst.msk [vmem:[%s3 + $0x4] sm:$0xf] %vm372, %v357
  %375 = vst.msk [vmem:[%s3 + $0x8] sm:$0xf] %vm372, %v358
  %376 = vst.msk [vmem:[%s3 + $0xc] sm:$0xf] %vm372, %v359
  %377 = vst.msk [vmem:[%s3 + $0x10] sm:$0xf] %vm372, %v360
  %378 = vst.msk [vmem:[%s3 + $0x14] sm:$0xf] %vm372, %v361
  %379 = vst.msk [vmem:[%s3 + $0x18] sm:$0xf] %vm372, %v362
  %380 = vst.msk [vmem:[%s3 + $0x1c] sm:$0xf] %vm372, %v363
  %381 = vst.msk [vmem:[%s3 + $0x20] sm:$0xf] %vm372, %v364
  %382 = vst.msk [vmem:[%s3 + $0x24] sm:$0xf] %vm372, %v365
  %383 = vst.msk [vmem:[%s3 + $0x28] sm:$0xf] %vm372, %v366
  %384 = vst.msk [vmem:[%s3 + $0x2c] sm:$0xf] %vm372, %v367
  %385 = vst.msk [vmem:[%s3 + $0x30] sm:$0xf] %vm372, %v368
  %386 = vst.msk [vmem:[%s3 + $0x34] sm:$0xf] %vm372, %v369
  %387 = vst.msk [vmem:[%s3 + $0x38] sm:$0xf] %vm372, %v370
  %388 = vst.msk [vmem:[%s3 + $0x3c] sm:$0xf] %vm372, %v371
  // Predicated region
  $region14: #{actor_forward.2} parent=0 // pred_check
    _
  $region15: #{actor_forward.2} parent=0 // pred_check_branch
    %390 = sbr.rel (0) target = $region17
  $region16: #{actor_forward.2} parent=0 // pred_region
    _
  $region17: #{actor_forward.2} parent=0 // pred_fallthru
    _
  // Predicated region
  $region18: #{actor_forward.2} parent=0 // pred_check
    _
  $region19: #{actor_forward.2} parent=0 // pred_check_branch
    %392 = sbr.rel (0) target = $region21
  $region20: #{actor_forward.2} parent=0 // pred_region
    _
  $region21: #{actor_forward.2} parent=0 // pred_fallthru
    _

// kernel: actor_forward.3
$region0: #{actor_forward.3}
  #allocation0 [shape = 'u32[]', space=smem, size = 0x4, offset = 0x4, fixed_abs, tag = 'smem constant byte address 0x4 - core index']
  #allocation1 [shape = 'u32[72,128]{1,0:T(1,128)}', space=vmem, size = 0x9000, scoped, tag = 'internal scratch']
  %s0 = inlined_call_operand.vmem [shape: bf16[18,512], index: 0, kind: input, shape index: {}]
  %s1 = inlined_call_operand.vmem [shape: bf16[512,64], index: 1, kind: input, shape index: {}]
  %s2 = inlined_call_operand.vmem [shape: f32[1,64], index: 2, kind: input, shape index: {}]
  %s3 = inlined_call_operand.vmem [shape: bf16[576,128], index: 3, kind: input, shape index: {}]
  %s4 = inlined_call_operand.vmem [shape: f32[1,128], index: 4, kind: input, shape index: {}]
  %s5 = inlined_call_operand.vmem [shape: bf16[128,512], index: 5, kind: input, shape index: {}]
  %s6 = inlined_call_operand.vmem [shape: f32[1,512], index: 6, kind: input, shape index: {}]
  %s7 = inlined_call_operand.vmem [shape: bf16[512,768], index: 7, kind: input, shape index: {}]
  %s8 = inlined_call_operand.vmem [shape: f32[1,768], index: 8, kind: input, shape index: {}]
  %s9 = inlined_call_operand.vmem [shape: bf16[768,128], index: 9, kind: input, shape index: {}]
  %s10 = inlined_call_operand.vmem [shape: f32[1,128], index: 10, kind: input, shape index: {}]
  %s11 = inlined_call_operand.vmem [shape: f32[2,128], index: 11, kind: output, shape index: {}]
  %s12 = sld [smem:[#allocation0]]
  $region54: #{actor_forward.3} parent=0
    _
  %s14 = ssub.s32 1, %s12
  %s15 = scalar_select 0, %s14, %s12
  // Predicated region
  $region2: #{actor_forward.3} parent=0 // pred_check
    _
  $region3: #{actor_forward.3} parent=0 // pred_check_branch
    %17 = sbr.rel (0) target = $region5
  $region4: #{actor_forward.3} parent=0 // pred_region
    _
  $region5: #{actor_forward.3} parent=0 // pred_fallthru
    _
  // Predicated region
  $region6: #{actor_forward.3} parent=0 // pred_check
    _
  $region7: #{actor_forward.3} parent=0 // pred_check_branch
    %19 = sbr.rel (0) target = $region9
  $region8: #{actor_forward.3} parent=0 // pred_region
    _
  $region9: #{actor_forward.3} parent=0 // pred_fallthru
    _
  // Predicated region
  $region10: #{actor_forward.3} parent=0 // pred_check
    _
  $region11: #{actor_forward.3} parent=0 // pred_check_branch
    %21 = sbr.rel (0) target = $region13
  $region12: #{actor_forward.3} parent=0 // pred_region
    _
  $region13: #{actor_forward.3} parent=0 // pred_fallthru
    _
  // Predicated region
  $region14: #{actor_forward.3} parent=0 // pred_check
    _
  $region15: #{actor_forward.3} parent=0 // pred_check_branch
    %23 = sbr.rel (0) target = $region17
  $region16: #{actor_forward.3} parent=0 // pred_region
    _
  $region17: #{actor_forward.3} parent=0 // pred_fallthru
    _
  // Predicated region
  $region18: #{actor_forward.3} parent=0 // pred_check
    _
  $region19: #{actor_forward.3} parent=0 // pred_check_branch
    %25 = sbr.rel (0) target = $region21
  $region20: #{actor_forward.3} parent=0 // pred_region
    _
  $region21: #{actor_forward.3} parent=0 // pred_fallthru
    _
  // Predicated region
  $region22: #{actor_forward.3} parent=0 // pred_check
    _
  $region23: #{actor_forward.3} parent=0 // pred_check_branch
    %27 = sbr.rel (0) target = $region25
  $region24: #{actor_forward.3} parent=0 // pred_region
    _
  $region25: #{actor_forward.3} parent=0 // pred_fallthru
    _
  // Predicated region
  $region26: #{actor_forward.3} parent=0 // pred_check
    _
  $region27: #{actor_forward.3} parent=0 // pred_check_branch
    %29 = sbr.rel (0) target = $region29
  $region28: #{actor_forward.3} parent=0 // pred_region
    _
  $region29: #{actor_forward.3} parent=0 // pred_fallthru
    _
  // Predicated region
  $region30: #{actor_forward.3} parent=0 // pred_check
    _
  $region31: #{actor_forward.3} parent=0 // pred_check_branch
    %31 = sbr.rel (0) target = $region33
  $region32: #{actor_forward.3} parent=0 // pred_region
    _
  $region33: #{actor_forward.3} parent=0 // pred_fallthru
    _
  // Predicated region
  $region34: #{actor_forward.3} parent=0 // pred_check
    _
  $region35: #{actor_forward.3} parent=0 // pred_check_branch
    %33 = sbr.rel (0) target = $region37
  $region36: #{actor_forward.3} parent=0 // pred_region
    _
  $region37: #{actor_forward.3} parent=0 // pred_fallthru
    _
  // Predicated region
  $region38: #{actor_forward.3} parent=0 // pred_check
    _
  $region39: #{actor_forward.3} parent=0 // pred_check_branch
    %35 = sbr.rel (0) target = $region41
  $region40: #{actor_forward.3} parent=0 // pred_region
    _
  $region41: #{actor_forward.3} parent=0 // pred_fallthru
    _
  // Predicated region
  $region42: #{actor_forward.3} parent=0 // pred_check
    _
  $region43: #{actor_forward.3} parent=0 // pred_check_branch
    %37 = sbr.rel (0) target = $region45
  $region44: #{actor_forward.3} parent=0 // pred_region
    _
  $region45: #{actor_forward.3} parent=0 // pred_fallthru
    _
  %v39 = vld [vmem:[%s0] sm:$0xff]
  %v40 = vld [vmem:[%s0 + $0x8] sm:$0xff]
  %v41 = vld [vmem:[%s0 + $0x10] sm:$0xff]
  %v42 = vld [vmem:[%s0 + $0x18] sm:$0xff]
  %v43 = vld [vmem:[%s0 + $0x20] sm:$0x11]
  %v44 = vld [vmem:[%s0 + $0x28] sm:$0x11]
  %v45 = vld [vmem:[%s1] sm:$0xf]
  %v46 = vld [vmem:[%s1 + $0x4] sm:$0xf]
  %v47 = vld [vmem:[%s1 + $0x8] sm:$0xf]
  %v48 = vld [vmem:[%s1 + $0xc] sm:$0xf]
  %v49 = vld [vmem:[%s1 + $0x10] sm:$0xf]
  %v50 = vld [vmem:[%s1 + $0x14] sm:$0xf]
  %v51 = vld [vmem:[%s1 + $0x18] sm:$0xf]
  %v52 = vld [vmem:[%s1 + $0x1c] sm:$0xf]
  %v53 = vld [vmem:[%s1 + $0x20] sm:$0xf]
  %v54 = vld [vmem:[%s1 + $0x24] sm:$0xf]
  %v55 = vld [vmem:[%s1 + $0x28] sm:$0xf]
  %v56 = vld [vmem:[%s1 + $0x2c] sm:$0xf]
  %v57 = vld [vmem:[%s1 + $0x30] sm:$0xf]
  %v58 = vld [vmem:[%s1 + $0x34] sm:$0xf]
  %v59 = vld [vmem:[%s1 + $0x38] sm:$0xf]
  %v60 = vld [vmem:[%s1 + $0x3c] sm:$0xf]
  %v61 = vld [vmem:[%s1 + $0x40] sm:$0xf]
  %v62 = vld [vmem:[%s1 + $0x44] sm:$0xf]
  %v63 = vld [vmem:[%s1 + $0x48] sm:$0xf]
  %v64 = vld [vmem:[%s1 + $0x4c] sm:$0xf]
  %v65 = vld [vmem:[%s1 + $0x50] sm:$0xf]
  %v66 = vld [vmem:[%s1 + $0x54] sm:$0xf]
  %v67 = vld [vmem:[%s1 + $0x58] sm:$0xf]
  %v68 = vld [vmem:[%s1 + $0x5c] sm:$0xf]
  %v69 = vld [vmem:[%s1 + $0x60] sm:$0xf]
  %v70 = vld [vmem:[%s1 + $0x64] sm:$0xf]
  %v71 = vld [vmem:[%s1 + $0x68] sm:$0xf]
  %v72 = vld [vmem:[%s1 + $0x6c] sm:$0xf]
  %v73 = vld [vmem:[%s1 + $0x70] sm:$0xf]
  %v74 = vld [vmem:[%s1 + $0x74] sm:$0xf]
  %v75 = vld [vmem:[%s1 + $0x78] sm:$0xf]
  %v76 = vld [vmem:[%s1 + $0x7c] sm:$0xf]
  %v77 = vld [vmem:[%s1 + $0x80] sm:$0xf]
  %v78 = vld [vmem:[%s1 + $0x84] sm:$0xf]
  %v79 = vld [vmem:[%s1 + $0x88] sm:$0xf]
  %v80 = vld [vmem:[%s1 + $0x8c] sm:$0xf]
  %v81 = vld [vmem:[%s1 + $0x90] sm:$0xf]
  %v82 = vld [vmem:[%s1 + $0x94] sm:$0xf]
  %v83 = vld [vmem:[%s1 + $0x98] sm:$0xf]
  %v84 = vld [vmem:[%s1 + $0x9c] sm:$0xf]
  %v85 = vld [vmem:[%s1 + $0xa0] sm:$0xf]
  %v86 = vld [vmem:[%s1 + $0xa4] sm:$0xf]
  %v87 = vld [vmem:[%s1 + $0xa8] sm:$0xf]
  %v88 = vld [vmem:[%s1 + $0xac] sm:$0xf]
  %v89 = vld [vmem:[%s1 + $0xb0] sm:$0xf]
  %v90 = vld [vmem:[%s1 + $0xb4] sm:$0xf]
  %v91 = vld [vmem:[%s1 + $0xb8] sm:$0xf]
  %v92 = vld [vmem:[%s1 + $0xbc] sm:$0xf]
  %v93 = vld [vmem:[%s1 + $0xc0] sm:$0xf]
  %v94 = vld [vmem:[%s1 + $0xc4] sm:$0xf]
  %v95 = vld [vmem:[%s1 + $0xc8] sm:$0xf]
  %v96 = vld [vmem:[%s1 + $0xcc] sm:$0xf]
  %v97 = vld [vmem:[%s1 + $0xd0] sm:$0xf]
  %v98 = vld [vmem:[%s1 + $0xd4] sm:$0xf]
  %v99 = vld [vmem:[%s1 + $0xd8] sm:$0xf]
  %v100 = vld [vmem:[%s1 + $0xdc] sm:$0xf]
  %v101 = vld [vmem:[%s1 + $0xe0] sm:$0xf]
  %v102 = vld [vmem:[%s1 + $0xe4] sm:$0xf]
  %v103 = vld [vmem:[%s1 + $0xe8] sm:$0xf]
  %v104 = vld [vmem:[%s1 + $0xec] sm:$0xf]
  %v105 = vld [vmem:[%s1 + $0xf0] sm:$0xf]
  %v106 = vld [vmem:[%s1 + $0xf4] sm:$0xf]
  %v107 = vld [vmem:[%s1 + $0xf8] sm:$0xf]
  %v108 = vld [vmem:[%s1 + $0xfc] sm:$0xf]
  %v109 = vld [vmem:[%s2] sm:$0x1]
  %v111 = vperm.slane %v109, 0
  %v119 = vunpack.c.l.b16 %v39
  %v120 = vunpack.c.h.b16 %v39
  %v121 = vunpack.c.l.b16 %v40
  %v122 = vunpack.c.h.b16 %v40
  %v123 = vunpack.c.l.b16 %v41
  %v124 = vunpack.c.h.b16 %v41
  %v125 = vunpack.c.l.b16 %v42
  %v126 = vunpack.c.h.b16 %v42
  %v127 = vunpack.c.l.b16 %v43
  %v128 = vunpack.c.h.b16 %v43
  %v129 = vunpack.c.l.b16 %v44
  %v130 = vunpack.c.h.b16 %v44
  %v131 = vpack.c.b16 %v123, %v119
  %v132 = vpack.c.b16 %v124, %v120
  %v133 = vpack.c.b16 %v125, %v121
  %v134 = vpack.c.b16 %v126, %v122
  %v135 = vpack.c.b16 %v127, %v127
  %v136 = vpack.c.b16 %v128, %v128
  %v137 = vpack.c.b16 %v129, %v129
  %v138 = vpack.c.b16 %v130, %v130
  %v211 = vunpack.c.l.b16 %v45
  %v212 = vunpack.c.l.b16 %v46
  %v213 = vunpack.c.l.b16 %v47
  %v214 = vunpack.c.l.b16 %v48
  %v215 = vunpack.c.l.b16 %v49
  %v216 = vunpack.c.l.b16 %v50
  %v217 = vunpack.c.l.b16 %v51
  %v218 = vunpack.c.l.b16 %v52
  %v219 = vunpack.c.l.b16 %v53
  %v220 = vunpack.c.l.b16 %v54
  %v221 = vunpack.c.l.b16 %v55
  %v222 = vunpack.c.l.b16 %v56
  %v223 = vunpack.c.l.b16 %v57
  %v224 = vunpack.c.l.b16 %v58
  %v225 = vunpack.c.l.b16 %v59
  %v226 = vunpack.c.l.b16 %v60
  %v227 = vunpack.c.l.b16 %v61
  %v228 = vunpack.c.l.b16 %v62
  %v229 = vunpack.c.l.b16 %v63
  %v230 = vunpack.c.l.b16 %v64
  %v231 = vunpack.c.l.b16 %v65
  %v232 = vunpack.c.l.b16 %v66
  %v233 = vunpack.c.l.b16 %v67
  %v234 = vunpack.c.l.b16 %v68
  %v235 = vunpack.c.l.b16 %v69
  %v236 = vunpack.c.l.b16 %v70
  %v237 = vunpack.c.l.b16 %v71
  %v238 = vunpack.c.l.b16 %v72
  %v239 = vunpack.c.l.b16 %v73
  %v240 = vunpack.c.l.b16 %v74
  %v241 = vunpack.c.l.b16 %v75
  %v242 = vunpack.c.l.b16 %v76
  %v243 = vunpack.c.l.b16 %v77
  %v244 = vunpack.c.l.b16 %v78
  %v245 = vunpack.c.l.b16 %v79
  %v246 = vunpack.c.l.b16 %v80
  %v247 = vunpack.c.l.b16 %v81
  %v248 = vunpack.c.l.b16 %v82
  %v249 = vunpack.c.l.b16 %v83
  %v250 = vunpack.c.l.b16 %v84
  %v251 = vunpack.c.l.b16 %v85
  %v252 = vunpack.c.l.b16 %v86
  %v253 = vunpack.c.l.b16 %v87
  %v254 = vunpack.c.l.b16 %v88
  %v255 = vunpack.c.l.b16 %v89
  %v256 = vunpack.c.l.b16 %v90
  %v257 = vunpack.c.l.b16 %v91
  %v258 = vunpack.c.l.b16 %v92
  %v259 = vunpack.c.l.b16 %v93
  %v260 = vunpack.c.l.b16 %v94
  %v261 = vunpack.c.l.b16 %v95
  %v262 = vunpack.c.l.b16 %v96
  %v263 = vunpack.c.l.b16 %v97
  %v264 = vunpack.c.l.b16 %v98
  %v265 = vunpack.c.l.b16 %v99
  %v266 = vunpack.c.l.b16 %v100
  %v267 = vunpack.c.l.b16 %v101
  %v268 = vunpack.c.l.b16 %v102
  %v269 = vunpack.c.l.b16 %v103
  %v270 = vunpack.c.l.b16 %v104
  %v271 = vunpack.c.l.b16 %v105
  %v272 = vunpack.c.l.b16 %v106
  %v273 = vunpack.c.l.b16 %v107
  %v274 = vunpack.c.l.b16 %v108
  %v275 = vpack.c.b16 %v212, %v211
  %v276 = vpack.c.b16 %v214, %v213
  %v277 = vpack.c.b16 %v216, %v215
  %v278 = vpack.c.b16 %v218, %v217
  %v279 = vpack.c.b16 %v220, %v219
  %v280 = vpack.c.b16 %v222, %v221
  %v281 = vpack.c.b16 %v224, %v223
  %v282 = vpack.c.b16 %v226, %v225
  %v283 = vpack.c.b16 %v228, %v227
  %v284 = vpack.c.b16 %v230, %v229
  %v285 = vpack.c.b16 %v232, %v231
  %v286 = vpack.c.b16 %v234, %v233
  %v287 = vpack.c.b16 %v236, %v235
  %v288 = vpack.c.b16 %v238, %v237
  %v289 = vpack.c.b16 %v240, %v239
  %v290 = vpack.c.b16 %v242, %v241
  %v291 = vpack.c.b16 %v244, %v243
  %v292 = vpack.c.b16 %v246, %v245
  %v293 = vpack.c.b16 %v248, %v247
  %v294 = vpack.c.b16 %v250, %v249
  %v295 = vpack.c.b16 %v252, %v251
  %v296 = vpack.c.b16 %v254, %v253
  %v297 = vpack.c.b16 %v256, %v255
  %v298 = vpack.c.b16 %v258, %v257
  %v299 = vpack.c.b16 %v260, %v259
  %v300 = vpack.c.b16 %v262, %v261
  %v301 = vpack.c.b16 %v264, %v263
  %v302 = vpack.c.b16 %v266, %v265
  %v303 = vpack.c.b16 %v268, %v267
  %v304 = vpack.c.b16 %v270, %v269
  %v305 = vpack.c.b16 %v272, %v271
  %v306 = vpack.c.b16 %v274, %v273
  %339 = vmatpush.bf16.msra.mxu0 %v282
  %340 = vmatpush.bf16.msra.mxu0 %v281
  %341 = vmatpush.bf16.msra.mxu0 %v280
  %342 = vmatpush.bf16.msra.mxu0 %v279
  %343 = vmatpush.bf16.msra.mxu0 %v278
  %344 = vmatpush.bf16.msra.mxu0 %v277
  %345 = vmatpush.bf16.msra.mxu0 %v276
  %346 = vmatpush.bf16.msra.mxu0 %v275
  %347 = vmatmul.bf16.gmra.mxu0 %v131
  %v348 = vpop.f32.mrf.mxu0
  %v349 = vadd.f32 %v111, %v348
  %v350 = vpop.f32.mrf.mxu0
  %v351 = vadd.f32 %v111, %v350
  %352 = vmatmul.bf16.gmra.mxu0 %v135
  %v353 = vpop.f32.mrf.mxu0
  %v354 = vadd.f32 %v111, %v353
  %v355 = vpop.f32.mrf.mxu0
  %356 = vdwg.mxu0
  %357 = vmatpush.bf16.msra.mxu0 %v290
  %358 = vmatpush.bf16.msra.mxu0 %v289
  %359 = vmatpush.bf16.msra.mxu0 %v288
  %360 = vmatpush.bf16.msra.mxu0 %v287
  %361 = vmatpush.bf16.msra.mxu0 %v286
  %362 = vmatpush.bf16.msra.mxu0 %v285
  %363 = vmatpush.bf16.msra.mxu0 %v284
  %364 = vmatpush.bf16.msra.mxu0 %v283
  %365 = vmatmul.bf16.gmra.mxu0 %v132
  %v366 = vpop.f32.mrf.mxu0
  %v367 = vadd.f32 %v349, %v366
  %v368 = vpop.f32.mrf.mxu0
  %v369 = vadd.f32 %v351, %v368
  %370 = vmatmul.bf16.gmra.mxu0 %v136
  %v371 = vpop.f32.mrf.mxu0
  %v372 = vadd.f32 %v354, %v371
  %v373 = vpop.f32.mrf.mxu0
  %374 = vdwg.mxu0
  %375 = vmatpush.bf16.msra.mxu0 %v298
  %376 = vmatpush.bf16.msra.mxu0 %v297
  %377 = vmatpush.bf16.msra.mxu0 %v296
  %378 = vmatpush.bf16.msra.mxu0 %v295
  %379 = vmatpush.bf16.msra.mxu0 %v294
  %380 = vmatpush.bf16.msra.mxu0 %v293
  %381 = vmatpush.bf16.msra.mxu0 %v292
  %382 = vmatpush.bf16.msra.mxu0 %v291
  %383 = vmatmul.bf16.gmra.mxu0 %v133
  %v384 = vpop.f32.mrf.mxu0
  %v385 = vadd.f32 %v367, %v384
  %v386 = vpop.f32.mrf.mxu0
  %v387 = vadd.f32 %v369, %v386
  %388 = vmatmul.bf16.gmra.mxu0 %v137
  %v389 = vpop.f32.mrf.mxu0
  %v390 = vadd.f32 %v372, %v389
  %v391 = vpop.f32.mrf.mxu0
  %392 = vdwg.mxu0
  %393 = vmatpush.bf16.msra.mxu0 %v306
  %394 = vmatpush.bf16.msra.mxu0 %v305
  %395 = vmatpush.bf16.msra.mxu0 %v304
  %396 = vmatpush.bf16.msra.mxu0 %v303
  %397 = vmatpush.bf16.msra.mxu0 %v302
  %398 = vmatpush.bf16.msra.mxu0 %v301
  %399 = vmatpush.bf16.msra.mxu0 %v300
  %400 = vmatpush.bf16.msra.mxu0 %v299
  %401 = vmatmul.bf16.gmra.mxu0 %v134
  %v402 = vpop.f32.mrf.mxu0
  %v403 = vadd.f32 %v385, %v402
  %v404 = vpop.f32.mrf.mxu0
  %v405 = vadd.f32 %v387, %v404
  %406 = vmatmul.bf16.gmra.mxu0 %v138
  %v407 = vpop.f32.mrf.mxu0
  %v408 = vadd.f32 %v390, %v407
  %v409 = vpop.f32.mrf.mxu0
  %410 = vdwg.mxu0
  %v411 = vmax.f32 %v403, 0.0
  %v412 = vmax.f32 %v405, 0.0
  %v413 = vmax.f32 %v408, 0.0
  %v414 = vpack.c.bf16 %v411, %v411
  %v415 = vld [vmem:[%s3] sm:$0xf]
  %v416 = vld [vmem:[%s3 + $0x4] sm:$0xf]
  %v417 = vld [vmem:[%s3 + $0x8] sm:$0xf]
  %v418 = vld [vmem:[%s3 + $0xc] sm:$0xf]
  %v419 = vld [vmem:[%s3 + $0x10] sm:$0xf]
  %v420 = vld [vmem:[%s3 + $0x14] sm:$0xf]
  %v421 = vld [vmem:[%s3 + $0x18] sm:$0xf]
  %v422 = vld [vmem:[%s3 + $0x1c] sm:$0xf]
  %v423 = vld [vmem:[%s3 + $0x20] sm:$0xf]
  %v424 = vld [vmem:[%s3 + $0x24] sm:$0xf]
  %v425 = vld [vmem:[%s3 + $0x28] sm:$0xf]
  %v426 = vld [vmem:[%s3 + $0x2c] sm:$0xf]
  %v427 = vld [vmem:[%s3 + $0x30] sm:$0xf]
  %v428 = vld [vmem:[%s3 + $0x34] sm:$0xf]
  %v429 = vld [vmem:[%s3 + $0x38] sm:$0xf]
  %v430 = vld [vmem:[%s3 + $0x3c] sm:$0xf]
  %v432 = vrot.slane %v414, 1
  %v441 = vunpack.c.l.b16 %v423
  %v442 = vunpack.c.l.b16 %v424
  %v443 = vunpack.c.l.b16 %v425
  %v444 = vunpack.c.l.b16 %v426
  %v445 = vunpack.c.l.b16 %v427
  %v446 = vunpack.c.l.b16 %v428
  %v447 = vunpack.c.l.b16 %v429
  %v448 = vunpack.c.l.b16 %v430
  %v449 = vpack.c.b16 %v442, %v441
  %v450 = vpack.c.b16 %v444, %v443
  %v451 = vpack.c.b16 %v446, %v445
  %v452 = vpack.c.b16 %v448, %v447
  %vm457 = vcmask 523264
  %v459 = vsel %vm457, %v432, 0
  %461 = vmatpush.bf16.msra.mxu0 0
  %462 = vmatpush.bf16.msra.mxu0 0
  %463 = vmatpush.bf16.msra.mxu0 0
  %464 = vmatpush.bf16.msra.mxu0 0
  %465 = vmatpush.bf16.msra.mxu0 %v452
  %466 = vmatpush.bf16.msra.mxu0 %v451
  %467 = vmatpush.bf16.msra.mxu0 %v450
  %468 = vmatpush.bf16.msra.mxu0 %v449
  %469 = vmatmul.bf16.gmra.mxu0 %v459
  %v470 = vpop.f32.mrf.mxu0
  %v471 = vadd.f32 0.0, %v470
  %v472 = vpop.f32.mrf.mxu0
  %473 = vdwg.mxu0
  %v482 = vunpack.c.l.b16 %v415
  %v483 = vunpack.c.l.b16 %v416
  %v484 = vunpack.c.l.b16 %v417
  %v485 = vunpack.c.l.b16 %v418
  %v486 = vunpack.c.l.b16 %v419
  %v487 = vunpack.c.l.b16 %v420
  %v488 = vunpack.c.l.b16 %v421
  %v489 = vunpack.c.l.b16 %v422
  %v490 = vpack.c.b16 %v483, %v482
  %v491 = vpack.c.b16 %v485, %v484
  %v492 = vpack.c.b16 %v487, %v486
  %v493 = vpack.c.b16 %v489, %v488
  %v499 = vsel %vm457, %v414, 0
  %501 = vmatpush.bf16.msra.mxu0 0
  %502 = vmatpush.bf16.msra.mxu0 0
  %503 = vmatpush.bf16.msra.mxu0 0
  %504 = vmatpush.bf16.msra.mxu0 0
  %505 = vmatpush.bf16.msra.mxu0 %v493
  %506 = vmatpush.bf16.msra.mxu0 %v492
  %507 = vmatpush.bf16.msra.mxu0 %v491
  %508 = vmatpush.bf16.msra.mxu0 %v490
  %509 = vmatmul.bf16.gmra.mxu0 %v499
  %v510 = vpop.f32.mrf.mxu0
  %v511 = vadd.f32 %v471, %v510
  %v512 = vpop.f32.mrf.mxu0
  %513 = vdwg.mxu0
  %v514 = vld [vmem:[%s3 + $0x40] sm:$0xf]
  %v515 = vld [vmem:[%s3 + $0x44] sm:$0xf]
  %v516 = vld [vmem:[%s3 + $0x48] sm:$0xf]
  %v517 = vld [vmem:[%s3 + $0x4c] sm:$0xf]
  %v518 = vld [vmem:[%s3 + $0x50] sm:$0xf]
  %v519 = vld [vmem:[%s3 + $0x54] sm:$0xf]
  %v520 = vld [vmem:[%s3 + $0x58] sm:$0xf]
  %v521 = vld [vmem:[%s3 + $0x5c] sm:$0xf]
  %v522 = vrot.slane %v414, 2
  %v531 = vunpack.c.l.b16 %v514
  %v532 = vunpack.c.l.b16 %v515
  %v533 = vunpack.c.l.b16 %v516
  %v534 = vunpack.c.l.b16 %v517
  %v535 = vunpack.c.l.b16 %v518
  %v536 = vunpack.c.l.b16 %v519
  %v537 = vunpack.c.l.b16 %v520
  %v538 = vunpack.c.l.b16 %v521
  %v539 = vpack.c.b16 %v532, %v531
  %v540 = vpack.c.b16 %v534, %v533
  %v541 = vpack.c.b16 %v536, %v535
  %v542 = vpack.c.b16 %v538, %v537
  %v548 = vsel %vm457, %v522, 0
  %550 = vmatpush.bf16.msra.mxu0 0
  %551 = vmatpush.bf16.msra.mxu0 0
  %552 = vmatpush.bf16.msra.mxu0 0
  %553 = vmatpush.bf16.msra.mxu0 0
  %554 = vmatpush.bf16.msra.mxu0 %v542
  %555 = vmatpush.bf16.msra.mxu0 %v541
  %556 = vmatpush.bf16.msra.mxu0 %v540
  %557 = vmatpush.bf16.msra.mxu0 %v539
  %558 = vmatmul.bf16.gmra.mxu0 %v548
  %v559 = vpop.f32.mrf.mxu0
  %v560 = vadd.f32 0.0, %v559
  %v561 = vpop.f32.mrf.mxu0
  %562 = vdwg.mxu0
  %v563 = vadd.f32 %v511, %v560
  %v564 = vld [vmem:[%s3 + $0x60] sm:$0xf]
  %v565 = vld [vmem:[%s3 + $0x64] sm:$0xf]
  %v566 = vld [vmem:[%s3 + $0x68] sm:$0xf]
  %v567 = vld [vmem:[%s3 + $0x6c] sm:$0xf]
  %v568 = vld [vmem:[%s3 + $0x70] sm:$0xf]
  %v569 = vld [vmem:[%s3 + $0x74] sm:$0xf]
  %v570 = vld [vmem:[%s3 + $0x78] sm:$0xf]
  %v571 = vld [vmem:[%s3 + $0x7c] sm:$0xf]
  %v572 = vrot.slane %v414, 3
  %v581 = vunpack.c.l.b16 %v564
  %v582 = vunpack.c.l.b16 %v565
  %v583 = vunpack.c.l.b16 %v566
  %v584 = vunpack.c.l.b16 %v567
  %v585 = vunpack.c.l.b16 %v568
  %v586 = vunpack.c.l.b16 %v569
  %v587 = vunpack.c.l.b16 %v570
  %v588 = vunpack.c.l.b16 %v571
  %v589 = vpack.c.b16 %v582, %v581
  %v590 = vpack.c.b16 %v584, %v583
  %v591 = vpack.c.b16 %v586, %v585
  %v592 = vpack.c.b16 %v588, %v587
  %v598 = vsel %vm457, %v572, 0
  %600 = vmatpush.bf16.msra.mxu0 0
  %601 = vmatpush.bf16.msra.mxu0 0
  %602 = vmatpush.bf16.msra.mxu0 0
  %603 = vmatpush.bf16.msra.mxu0 0
  %604 = vmatpush.bf16.msra.mxu0 %v592
  %605 = vmatpush.bf16.msra.mxu0 %v591
  %606 = vmatpush.bf16.msra.mxu0 %v590
  %607 = vmatpush.bf16.msra.mxu0 %v589
  %608 = vmatmul.bf16.gmra.mxu0 %v598
  %v609 = vpop.f32.mrf.mxu0
  %v610 = vadd.f32 0.0, %v609
  %v611 = vpop.f32.mrf.mxu0
  %612 = vdwg.mxu0
  %v613 = vadd.f32 %v563, %v610
  %v614 = vpack.c.bf16 %v412, %v412
  %v615 = vld [vmem:[%s3 + $0x80] sm:$0xf]
  %v616 = vld [vmem:[%s3 + $0x84] sm:$0xf]
  %v617 = vld [vmem:[%s3 + $0x88] sm:$0xf]
  %v618 = vld [vmem:[%s3 + $0x8c] sm:$0xf]
  %v619 = vld [vmem:[%s3 + $0x90] sm:$0xf]
  %v620 = vld [vmem:[%s3 + $0x94] sm:$0xf]
  %v621 = vld [vmem:[%s3 + $0x98] sm:$0xf]
  %v622 = vld [vmem:[%s3 + $0x9c] sm:$0xf]
  %v631 = vunpack.c.l.b16 %v615
  %v632 = vunpack.c.l.b16 %v616
  %v633 = vunpack.c.l.b16 %v617
  %v634 = vunpack.c.l.b16 %v618
  %v635 = vunpack.c.l.b16 %v619
  %v636 = vunpack.c.l.b16 %v620
  %v637 = vunpack.c.l.b16 %v621
  %v638 = vunpack.c.l.b16 %v622
  %v639 = vpack.c.b16 %v632, %v631
  %v640 = vpack.c.b16 %v634, %v633
  %v641 = vpack.c.b16 %v636, %v635
  %v642 = vpack.c.b16 %v638, %v637
  %v648 = vsel %vm457, %v614, 0
  %650 = vmatpush.bf16.msra.mxu0 0
  %651 = vmatpush.bf16.msra.mxu0 0
  %652 = vmatpush.bf16.msra.mxu0 0
  %653 = vmatpush.bf16.msra.mxu0 0
  %654 = vmatpush.bf16.msra.mxu0 %v642
  %655 = vmatpush.bf16.msra.mxu0 %v641
  %656 = vmatpush.bf16.msra.mxu0 %v640
  %657 = vmatpush.bf16.msra.mxu0 %v639
  %658 = vmatmul.bf16.gmra.mxu0 %v648
  %v659 = vpop.f32.mrf.mxu0
  %v660 = vadd.f32 0.0, %v659
  %v661 = vpop.f32.mrf.mxu0
  %662 = vdwg.mxu0
  %v663 = vadd.f32 %v613, %v660
  %v664 = vld [vmem:[%s3 + $0xa0] sm:$0xf]
  %v665 = vld [vmem:[%s3 + $0xa4] sm:$0xf]
  %v666 = vld [vmem:[%s3 + $0xa8] sm:$0xf]
  %v667 = vld [vmem:[%s3 + $0xac] sm:$0xf]
  %v668 = vld [vmem:[%s3 + $0xb0] sm:$0xf]
  %v669 = vld [vmem:[%s3 + $0xb4] sm:$0xf]
  %v670 = vld [vmem:[%s3 + $0xb8] sm:$0xf]
  %v671 = vld [vmem:[%s3 + $0xbc] sm:$0xf]
  %v673 = vrot.slane %v614, 1
  %v682 = vunpack.c.l.b16 %v664
  %v683 = vunpack.c.l.b16 %v665
  %v684 = vunpack.c.l.b16 %v666
  %v685 = vunpack.c.l.b16 %v667
  %v686 = vunpack.c.l.b16 %v668
  %v687 = vunpack.c.l.b16 %v669
  %v688 = vunpack.c.l.b16 %v670
  %v689 = vunpack.c.l.b16 %v671
  %v690 = vpack.c.b16 %v683, %v682
  %v691 = vpack.c.b16 %v685, %v684
  %v692 = vpack.c.b16 %v687, %v686
  %v693 = vpack.c.b16 %v689, %v688
  %v699 = vsel %vm457, %v673, 0
  %701 = vmatpush.bf16.msra.mxu0 0
  %702 = vmatpush.bf16.msra.mxu0 0
  %703 = vmatpush.bf16.msra.mxu0 0
  %704 = vmatpush.bf16.msra.mxu0 0
  %705 = vmatpush.bf16.msra.mxu0 %v693
  %706 = vmatpush.bf16.msra.mxu0 %v692
  %707 = vmatpush.bf16.msra.mxu0 %v691
  %708 = vmatpush.bf16.msra.mxu0 %v690
  %709 = vmatmul.bf16.gmra.mxu0 %v699
  %v710 = vpop.f32.mrf.mxu0
  %v711 = vadd.f32 0.0, %v710
  %v712 = vpop.f32.mrf.mxu0
  %713 = vdwg.mxu0
  %v714 = vadd.f32 %v663, %v711
  %v715 = vld [vmem:[%s3 + $0xc0] sm:$0xf]
  %v716 = vld [vmem:[%s3 + $0xc4] sm:$0xf]
  %v717 = vld [vmem:[%s3 + $0xc8] sm:$0xf]
  %v718 = vld [vmem:[%s3 + $0xcc] sm:$0xf]
  %v719 = vld [vmem:[%s3 + $0xd0] sm:$0xf]
  %v720 = vld [vmem:[%s3 + $0xd4] sm:$0xf]
  %v721 = vld [vmem:[%s3 + $0xd8] sm:$0xf]
  %v722 = vld [vmem:[%s3 + $0xdc] sm:$0xf]
  %v723 = vrot.slane %v614, 2
  %v732 = vunpack.c.l.b16 %v715
  %v733 = vunpack.c.l.b16 %v716
  %v734 = vunpack.c.l.b16 %v717
  %v735 = vunpack.c.l.b16 %v718
  %v736 = vunpack.c.l.b16 %v719
  %v737 = vunpack.c.l.b16 %v720
  %v738 = vunpack.c.l.b16 %v721
  %v739 = vunpack.c.l.b16 %v722
  %v740 = vpack.c.b16 %v733, %v732
  %v741 = vpack.c.b16 %v735, %v734
  %v742 = vpack.c.b16 %v737, %v736
  %v743 = vpack.c.b16 %v739, %v738
  %v749 = vsel %vm457, %v723, 0
  %751 = vmatpush.bf16.msra.mxu0 0
  %752 = vmatpush.bf16.msra.mxu0 0
  %753 = vmatpush.bf16.msra.mxu0 0
  %754 = vmatpush.bf16.msra.mxu0 0
  %755 = vmatpush.bf16.msra.mxu0 %v743
  %756 = vmatpush.bf16.msra.mxu0 %v742
  %757 = vmatpush.bf16.msra.mxu0 %v741
  %758 = vmatpush.bf16.msra.mxu0 %v740
  %759 = vmatmul.bf16.gmra.mxu0 %v749
  %v760 = vpop.f32.mrf.mxu0
  %v761 = vadd.f32 0.0, %v760
  %v762 = vpop.f32.mrf.mxu0
  %763 = vdwg.mxu0
  %v764 = vadd.f32 %v714, %v761
  %v765 = vld [vmem:[%s3 + $0xe0] sm:$0xf]
  %v766 = vld [vmem:[%s3 + $0xe4] sm:$0xf]
  %v767 = vld [vmem:[%s3 + $0xe8] sm:$0xf]
  %v768 = vld [vmem:[%s3 + $0xec] sm:$0xf]
  %v769 = vld [vmem:[%s3 + $0xf0] sm:$0xf]
  %v770 = vld [vmem:[%s3 + $0xf4] sm:$0xf]
  %v771 = vld [vmem:[%s3 + $0xf8] sm:$0xf]
  %v772 = vld [vmem:[%s3 + $0xfc] sm:$0xf]
  %v773 = vrot.slane %v614, 3
  %v782 = vunpack.c.l.b16 %v765
  %v783 = vunpack.c.l.b16 %v766
  %v784 = vunpack.c.l.b16 %v767
  %v785 = vunpack.c.l.b16 %v768
  %v786 = vunpack.c.l.b16 %v769
  %v787 = vunpack.c.l.b16 %v770
  %v788 = vunpack.c.l.b16 %v771
  %v789 = vunpack.c.l.b16 %v772
  %v790 = vpack.c.b16 %v783, %v782
  %v791 = vpack.c.b16 %v785, %v784
  %v792 = vpack.c.b16 %v787, %v786
  %v793 = vpack.c.b16 %v789, %v788
  %v799 = vsel %vm457, %v773, 0
  %801 = vmatpush.bf16.msra.mxu0 0
  %802 = vmatpush.bf16.msra.mxu0 0
  %803 = vmatpush.bf16.msra.mxu0 0
  %804 = vmatpush.bf16.msra.mxu0 0
  %805 = vmatpush.bf16.msra.mxu0 %v793
  %806 = vmatpush.bf16.msra.mxu0 %v792
  %807 = vmatpush.bf16.msra.mxu0 %v791
  %808 = vmatpush.bf16.msra.mxu0 %v790
  %809 = vmatmul.bf16.gmra.mxu0 %v799
  %v810 = vpop.f32.mrf.mxu0
  %v811 = vadd.f32 0.0, %v810
  %v812 = vpop.f32.mrf.mxu0
  %813 = vdwg.mxu0
  %v814 = vadd.f32 %v764, %v811
  %v815 = vpack.c.bf16 %v413, %v413
  %v816 = vld [vmem:[%s3 + $0x100] sm:$0xf]
  %v817 = vld [vmem:[%s3 + $0x104] sm:$0xf]
  %v818 = vld [vmem:[%s3 + $0x108] sm:$0xf]
  %v819 = vld [vmem:[%s3 + $0x10c] sm:$0xf]
  %v820 = vld [vmem:[%s3 + $0x110] sm:$0xf]
  %v821 = vld [vmem:[%s3 + $0x114] sm:$0xf]
  %v822 = vld [vmem:[%s3 + $0x118] sm:$0xf]
  %v823 = vld [vmem:[%s3 + $0x11c] sm:$0xf]
  %v832 = vunpack.c.l.b16 %v816
  %v833 = vunpack.c.l.b16 %v817
  %v834 = vunpack.c.l.b16 %v818
  %v835 = vunpack.c.l.b16 %v819
  %v836 = vunpack.c.l.b16 %v820
  %v837 = vunpack.c.l.b16 %v821
  %v838 = vunpack.c.l.b16 %v822
  %v839 = vunpack.c.l.b16 %v823
  %v840 = vpack.c.b16 %v833, %v832
  %v841 = vpack.c.b16 %v835, %v834
  %v842 = vpack.c.b16 %v837, %v836
  %v843 = vpack.c.b16 %v839, %v838
  %v849 = vsel %vm457, %v815, 0
  %851 = vmatpush.bf16.msra.mxu0 0
  %852 = vmatpush.bf16.msra.mxu0 0
  %853 = vmatpush.bf16.msra.mxu0 0
  %854 = vmatpush.bf16.msra.mxu0 0
  %855 = vmatpush.bf16.msra.mxu0 %v843
  %856 = vmatpush.bf16.msra.mxu0 %v842
  %857 = vmatpush.bf16.msra.mxu0 %v841
  %858 = vmatpush.bf16.msra.mxu0 %v840
  %859 = vmatmul.bf16.gmra.mxu0 %v849
  %v860 = vpop.f32.mrf.mxu0
  %v861 = vadd.f32 0.0, %v860
  %v862 = vpop.f32.mrf.mxu0
  %863 = vdwg.mxu0
  %v864 = vadd.f32 %v814, %v861
  %v865 = vld [vmem:[%s4] sm:$0x1]
  %v867 = vperm.slane %v865, 0
  %v869 = vadd.f32 %v864, %v867
  %v870 = vmax.f32 %v869, 0.0
  %v871 = vpack.c.bf16 %v870, %v870
  %v872 = vld [vmem:[%s5] sm:$0xff]
  %v873 = vld [vmem:[%s5 + $0x8] sm:$0xff]
  %v874 = vld [vmem:[%s5 + $0x10] sm:$0xff]
  %v875 = vld [vmem:[%s5 + $0x18] sm:$0xff]
  %v876 = vld [vmem:[%s5 + $0x20] sm:$0xff]
  %v877 = vld [vmem:[%s5 + $0x28] sm:$0xff]
  %v878 = vld [vmem:[%s5 + $0x30] sm:$0xff]
  %v879 = vld [vmem:[%s5 + $0x38] sm:$0xff]
  %v880 = vld [vmem:[%s5 + $0x40] sm:$0xff]
  %v881 = vld [vmem:[%s5 + $0x48] sm:$0xff]
  %v882 = vld [vmem:[%s5 + $0x50] sm:$0xff]
  %v883 = vld [vmem:[%s5 + $0x58] sm:$0xff]
  %v884 = vld [vmem:[%s5 + $0x60] sm:$0xff]
  %v885 = vld [vmem:[%s5 + $0x68] sm:$0xff]
  %v886 = vld [vmem:[%s5 + $0x70] sm:$0xff]
  %v887 = vld [vmem:[%s5 + $0x78] sm:$0xff]
  %v888 = vld [vmem:[%s5 + $0x80] sm:$0xff]
  %v889 = vld [vmem:[%s5 + $0x88] sm:$0xff]
  %v890 = vld [vmem:[%s5 + $0x90] sm:$0xff]
  %v891 = vld [vmem:[%s5 + $0x98] sm:$0xff]
  %v892 = vld [vmem:[%s5 + $0xa0] sm:$0xff]
  %v893 = vld [vmem:[%s5 + $0xa8] sm:$0xff]
  %v894 = vld [vmem:[%s5 + $0xb0] sm:$0xff]
  %v895 = vld [vmem:[%s5 + $0xb8] sm:$0xff]
  %v896 = vld [vmem:[%s5 + $0xc0] sm:$0xff]
  %v897 = vld [vmem:[%s5 + $0xc8] sm:$0xff]
  %v898 = vld [vmem:[%s5 + $0xd0] sm:$0xff]
  %v899 = vld [vmem:[%s5 + $0xd8] sm:$0xff]
  %v900 = vld [vmem:[%s5 + $0xe0] sm:$0xff]
  %v901 = vld [vmem:[%s5 + $0xe8] sm:$0xff]
  %v902 = vld [vmem:[%s5 + $0xf0] sm:$0xff]
  %v903 = vld [vmem:[%s5 + $0xf8] sm:$0xff]
  %v904 = vld [vmem:[%s6] sm:$0xf]
  %v906 = vperm.slane %v904, 0
  %v907 = vperm.slane %v904, 1
  %v908 = vperm.slane %v904, 2
  %v909 = vperm.slane %v904, 3
  %v946 = vunpack.c.l.b16 %v872
  %v947 = vunpack.c.h.b16 %v872
  %v948 = vunpack.c.l.b16 %v873
  %v949 = vunpack.c.h.b16 %v873
  %v950 = vunpack.c.l.b16 %v874
  %v951 = vunpack.c.h.b16 %v874
  %v952 = vunpack.c.l.b16 %v875
  %v953 = vunpack.c.h.b16 %v875
  %v954 = vunpack.c.l.b16 %v876
  %v955 = vunpack.c.h.b16 %v876
  %v956 = vunpack.c.l.b16 %v877
  %v957 = vunpack.c.h.b16 %v877
  %v958 = vunpack.c.l.b16 %v878
  %v959 = vunpack.c.h.b16 %v878
  %v960 = vunpack.c.l.b16 %v879
  %v961 = vunpack.c.h.b16 %v879
  %v962 = vunpack.c.l.b16 %v880
  %v963 = vunpack.c.h.b16 %v880
  %v964 = vunpack.c.l.b16 %v881
  %v965 = vunpack.c.h.b16 %v881
  %v966 = vunpack.c.l.b16 %v882
  %v967 = vunpack.c.h.b16 %v882
  %v968 = vunpack.c.l.b16 %v883
  %v969 = vunpack.c.h.b16 %v883
  %v970 = vunpack.c.l.b16 %v884
  %v971 = vunpack.c.h.b16 %v884
  %v972 = vunpack.c.l.b16 %v885
  %v973 = vunpack.c.h.b16 %v885
  %v974 = vunpack.c.l.b16 %v886
  %v975 = vunpack.c.h.b16 %v886
  %v976 = vunpack.c.l.b16 %v887
  %v977 = vunpack.c.h.b16 %v887
  %v978 = vunpack.c.l.b16 %v888
  %v979 = vunpack.c.h.b16 %v888
  %v980 = vunpack.c.l.b16 %v889
  %v981 = vunpack.c.h.b16 %v889
  %v982 = vunpack.c.l.b16 %v890
  %v983 = vunpack.c.h.b16 %v890
  %v984 = vunpack.c.l.b16 %v891
  %v985 = vunpack.c.h.b16 %v891
  %v986 = vunpack.c.l.b16 %v892
  %v987 = vunpack.c.h.b16 %v892
  %v988 = vunpack.c.l.b16 %v893
  %v989 = vunpack.c.h.b16 %v893
  %v990 = vunpack.c.l.b16 %v894
  %v991 = vunpack.c.h.b16 %v894
  %v992 = vunpack.c.l.b16 %v895
  %v993 = vunpack.c.h.b16 %v895
  %v994 = vunpack.c.l.b16 %v896
  %v995 = vunpack.c.h.b16 %v896
  %v996 = vunpack.c.l.b16 %v897
  %v997 = vunpack.c.h.b16 %v897
  %v998 = vunpack.c.l.b16 %v898
  %v999 = vunpack.c.h.b16 %v898
  %v1000 = vunpack.c.l.b16 %v899
  %v1001 = vunpack.c.h.b16 %v899
  %v1002 = vunpack.c.l.b16 %v900
  %v1003 = vunpack.c.h.b16 %v900
  %v1004 = vunpack.c.l.b16 %v901
  %v1005 = vunpack.c.h.b16 %v901
  %v1006 = vunpack.c.l.b16 %v902
  %v1007 = vunpack.c.h.b16 %v902
  %v1008 = vunpack.c.l.b16 %v903
  %v1009 = vunpack.c.h.b16 %v903
  %v1010 = vpack.c.b16 %v950, %v946
  %v1011 = vpack.c.b16 %v951, %v947
  %v1012 = vpack.c.b16 %v952, %v948
  %v1013 = vpack.c.b16 %v953, %v949
  %v1014 = vpack.c.b16 %v958, %v954
  %v1015 = vpack.c.b16 %v959, %v955
  %v1016 = vpack.c.b16 %v960, %v956
  %v1017 = vpack.c.b16 %v961, %v957
  %v1018 = vpack.c.b16 %v966, %v962
  %v1019 = vpack.c.b16 %v967, %v963
  %v1020 = vpack.c.b16 %v968, %v964
  %v1021 = vpack.c.b16 %v969, %v965
  %v1022 = vpack.c.b16 %v974, %v970
  %v1023 = vpack.c.b16 %v975, %v971
  %v1024 = vpack.c.b16 %v976, %v972
  %v1025 = vpack.c.b16 %v977, %v973
  %v1026 = vpack.c.b16 %v982, %v978
  %v1027 = vpack.c.b16 %v983, %v979
  %v1028 = vpack.c.b16 %v984, %v980
  %v1029 = vpack.c.b16 %v985, %v981
  %v1030 = vpack.c.b16 %v990, %v986
  %v1031 = vpack.c.b16 %v991, %v987
  %v1032 = vpack.c.b16 %v992, %v988
  %v1033 = vpack.c.b16 %v993, %v989
  %v1034 = vpack.c.b16 %v998, %v994
  %v1035 = vpack.c.b16 %v999, %v995
  %v1036 = vpack.c.b16 %v1000, %v996
  %v1037 = vpack.c.b16 %v1001, %v997
  %v1038 = vpack.c.b16 %v1006, %v1002
  %v1039 = vpack.c.b16 %v1007, %v1003
  %v1040 = vpack.c.b16 %v1008, %v1004
  %v1041 = vpack.c.b16 %v1009, %v1005
  %1074 = vmatpush.bf16.msra.mxu0 %v1038
  %1075 = vmatpush.bf16.msra.mxu0 %v1034
  %1076 = vmatpush.bf16.msra.mxu0 %v1030
  %1077 = vmatpush.bf16.msra.mxu0 %v1026
  %1078 = vmatpush.bf16.msra.mxu0 %v1022
  %1079 = vmatpush.bf16.msra.mxu0 %v1018
  %1080 = vmatpush.bf16.msra.mxu0 %v1014
  %1081 = vmatpush.bf16.msra.mxu0 %v1010
  %1082 = vmatmul.bf16.gmra.mxu0 %v871
  %v1083 = vpop.f32.mrf.mxu0
  %v1084 = vadd.f32 %v906, %v1083
  %v1085 = vpop.f32.mrf.mxu0
  %1086 = vdwg.mxu0
  %1087 = vmatpush.bf16.msra.mxu0 %v1039
  %1088 = vmatpush.bf16.msra.mxu0 %v1035
  %1089 = vmatpush.bf16.msra.mxu0 %v1031
  %1090 = vmatpush.bf16.msra.mxu0 %v1027
  %1091 = vmatpush.bf16.msra.mxu0 %v1023
  %1092 = vmatpush.bf16.msra.mxu0 %v1019
  %1093 = vmatpush.bf16.msra.mxu0 %v1015
  %1094 = vmatpush.bf16.msra.mxu0 %v1011
  %1095 = vmatmul.bf16.gmra.mxu0 %v871
  %v1096 = vpop.f32.mrf.mxu0
  %v1097 = vadd.f32 %v907, %v1096
  %v1098 = vpop.f32.mrf.mxu0
  %1099 = vdwg.mxu0
  %1100 = vmatpush.bf16.msra.mxu0 %v1040
  %1101 = vmatpush.bf16.msra.mxu0 %v1036
  %1102 = vmatpush.bf16.msra.mxu0 %v1032
  %1103 = vmatpush.bf16.msra.mxu0 %v1028
  %1104 = vmatpush.bf16.msra.mxu0 %v1024
  %1105 = vmatpush.bf16.msra.mxu0 %v1020
  %1106 = vmatpush.bf16.msra.mxu0 %v1016
  %1107 = vmatpush.bf16.msra.mxu0 %v1012
  %1108 = vmatmul.bf16.gmra.mxu0 %v871
  %v1109 = vpop.f32.mrf.mxu0
  %v1110 = vadd.f32 %v908, %v1109
  %v1111 = vpop.f32.mrf.mxu0
  %1112 = vdwg.mxu0
  %1113 = vmatpush.bf16.msra.mxu0 %v1041
  %1114 = vmatpush.bf16.msra.mxu0 %v1037
  %1115 = vmatpush.bf16.msra.mxu0 %v1033
  %1116 = vmatpush.bf16.msra.mxu0 %v1029
  %1117 = vmatpush.bf16.msra.mxu0 %v1025
  %1118 = vmatpush.bf16.msra.mxu0 %v1021
  %1119 = vmatpush.bf16.msra.mxu0 %v1017
  %1120 = vmatpush.bf16.msra.mxu0 %v1013
  %1121 = vmatmul.bf16.gmra.mxu0 %v871
  %v1122 = vpop.f32.mrf.mxu0
  %v1123 = vadd.f32 %v909, %v1122
  %v1124 = vpop.f32.mrf.mxu0
  %1125 = vdwg.mxu0
  %v1126 = vmax.f32 %v1084, 0.0
  %v1127 = vmax.f32 %v1097, 0.0
  %v1128 = vmax.f32 %v1110, 0.0
  %v1129 = vmax.f32 %v1123, 0.0
  %v1130 = vpack.c.bf16 %v1126, %v1126
  %v1131 = vpack.c.bf16 %v1127, %v1127
  %v1132 = vpack.c.bf16 %v1128, %v1128
  %v1133 = vpack.c.bf16 %v1129, %v1129
  %v1134 = vld [vmem:[%s7] sm:$0xff]
  %v1135 = vld [vmem:[%s7 + $0x8] sm:$0xff]
  %v1136 = vld [vmem:[%s7 + $0x10] sm:$0xff]
  %v1137 = vld [vmem:[%s7 + $0x18] sm:$0xff]
  %v1138 = vld [vmem:[%s7 + $0x20] sm:$0xff]
  %v1139 = vld [vmem:[%s7 + $0x28] sm:$0xff]
  %v1140 = vld [vmem:[%s7 + $0x30] sm:$0xff]
  %v1141 = vld [vmem:[%s7 + $0x38] sm:$0xff]
  %v1142 = vld [vmem:[%s7 + $0x40] sm:$0xff]
  %v1143 = vld [vmem:[%s7 + $0x48] sm:$0xff]
  %v1144 = vld [vmem:[%s7 + $0x50] sm:$0xff]
  %v1145 = vld [vmem:[%s7 + $0x58] sm:$0xff]
  %v1146 = vld [vmem:[%s7 + $0x60] sm:$0xff]
  %v1147 = vld [vmem:[%s7 + $0x68] sm:$0xff]
  %v1148 = vld [vmem:[%s7 + $0x70] sm:$0xff]
  %v1149 = vld [vmem:[%s7 + $0x78] sm:$0xff]
  %v1150 = vld [vmem:[%s7 + $0x80] sm:$0xff]
  %v1151 = vld [vmem:[%s7 + $0x88] sm:$0xff]
  %v1152 = vld [vmem:[%s7 + $0x90] sm:$0xff]
  %v1153 = vld [vmem:[%s7 + $0x98] sm:$0xff]
  %v1154 = vld [vmem:[%s7 + $0xa0] sm:$0xff]
  %v1155 = vld [vmem:[%s7 + $0xa8] sm:$0xff]
  %v1156 = vld [vmem:[%s7 + $0xb0] sm:$0xff]
  %v1157 = vld [vmem:[%s7 + $0xb8] sm:$0xff]
  %v1158 = vld [vmem:[%s7 + $0xc0] sm:$0xff]
  %v1159 = vld [vmem:[%s7 + $0xc8] sm:$0xff]
  %v1160 = vld [vmem:[%s7 + $0xd0] sm:$0xff]
  %v1161 = vld [vmem:[%s7 + $0xd8] sm:$0xff]
  %v1162 = vld [vmem:[%s7 + $0xe0] sm:$0xff]
  %v1163 = vld [vmem:[%s7 + $0xe8] sm:$0xff]
  %v1164 = vld [vmem:[%s7 + $0xf0] sm:$0xff]
  %v1165 = vld [vmem:[%s7 + $0xf8] sm:$0xff]
  %v1166 = vld [vmem:[%s7 + $0x100] sm:$0xff]
  %v1167 = vld [vmem:[%s7 + $0x108] sm:$0xff]
  %v1168 = vld [vmem:[%s7 + $0x110] sm:$0xff]
  %v1169 = vld [vmem:[%s7 + $0x118] sm:$0xff]
  %v1170 = vld [vmem:[%s7 + $0x120] sm:$0xff]
  %v1171 = vld [vmem:[%s7 + $0x128] sm:$0xff]
  %v1172 = vld [vmem:[%s7 + $0x130] sm:$0xff]
  %v1173 = vld [vmem:[%s7 + $0x138] sm:$0xff]
  %v1174 = vld [vmem:[%s7 + $0x140] sm:$0xff]
  %v1175 = vld [vmem:[%s7 + $0x148] sm:$0xff]
  %v1176 = vld [vmem:[%s7 + $0x150] sm:$0xff]
  %v1177 = vld [vmem:[%s7 + $0x158] sm:$0xff]
  %v1178 = vld [vmem:[%s7 + $0x160] sm:$0xff]
  %v1179 = vld [vmem:[%s7 + $0x168] sm:$0xff]
  %v1180 = vld [vmem:[%s7 + $0x170] sm:$0xff]
  %v1181 = vld [vmem:[%s7 + $0x178] sm:$0xff]
  %v1182 = vld [vmem:[%s7 + $0x180] sm:$0xff]
  %v1183 = vld [vmem:[%s7 + $0x188] sm:$0xff]
  %v1184 = vld [vmem:[%s7 + $0x190] sm:$0xff]
  %v1185 = vld [vmem:[%s7 + $0x198] sm:$0xff]
  %v1186 = vld [vmem:[%s7 + $0x1a0] sm:$0xff]
  %v1187 = vld [vmem:[%s7 + $0x1a8] sm:$0xff]
  %v1188 = vld [vmem:[%s7 + $0x1b0] sm:$0xff]
  %v1189 = vld [vmem:[%s7 + $0x1b8] sm:$0xff]
  %v1190 = vld [vmem:[%s7 + $0x1c0] sm:$0xff]
  %v1191 = vld [vmem:[%s7 + $0x1c8] sm:$0xff]
  %v1192 = vld [vmem:[%s7 + $0x1d0] sm:$0xff]
  %v1193 = vld [vmem:[%s7 + $0x1d8] sm:$0xff]
  %v1194 = vld [vmem:[%s7 + $0x1e0] sm:$0xff]
  %v1195 = vld [vmem:[%s7 + $0x1e8] sm:$0xff]
  %v1196 = vld [vmem:[%s7 + $0x1f0] sm:$0xff]
  %v1197 = vld [vmem:[%s7 + $0x1f8] sm:$0xff]
  %v1198 = vld [vmem:[%s7 + $0x200] sm:$0xff]
  %v1199 = vld [vmem:[%s7 + $0x208] sm:$0xff]
  %v1200 = vld [vmem:[%s7 + $0x210] sm:$0xff]
  %v1201 = vld [vmem:[%s7 + $0x218] sm:$0xff]
  %v1202 = vld [vmem:[%s7 + $0x220] sm:$0xff]
  %v1203 = vld [vmem:[%s7 + $0x228] sm:$0xff]
  %v1204 = vld [vmem:[%s7 + $0x230] sm:$0xff]
  %v1205 = vld [vmem:[%s7 + $0x238] sm:$0xff]
  %v1206 = vld [vmem:[%s7 + $0x240] sm:$0xff]
  %v1207 = vld [vmem:[%s7 + $0x248] sm:$0xff]
  %v1208 = vld [vmem:[%s7 + $0x250] sm:$0xff]
  %v1209 = vld [vmem:[%s7 + $0x258] sm:$0xff]
  %v1210 = vld [vmem:[%s7 + $0x260] sm:$0xff]
  %v1211 = vld [vmem:[%s7 + $0x268] sm:$0xff]
  %v1212 = vld [vmem:[%s7 + $0x270] sm:$0xff]
  %v1213 = vld [vmem:[%s7 + $0x278] sm:$0xff]
  %v1214 = vld [vmem:[%s7 + $0x280] sm:$0xff]
  %v1215 = vld [vmem:[%s7 + $0x288] sm:$0xff]
  %v1216 = vld [vmem:[%s7 + $0x290] sm:$0xff]
  %v1217 = vld [vmem:[%s7 + $0x298] sm:$0xff]
  %v1218 = vld [vmem:[%s7 + $0x2a0] sm:$0xff]
  %v1219 = vld [vmem:[%s7 + $0x2a8] sm:$0xff]
  %v1220 = vld [vmem:[%s7 + $0x2b0] sm:$0xff]
  %v1221 = vld [vmem:[%s7 + $0x2b8] sm:$0xff]
  %v1222 = vld [vmem:[%s7 + $0x2c0] sm:$0xff]
  %v1223 = vld [vmem:[%s7 + $0x2c8] sm:$0xff]
  %v1224 = vld [vmem:[%s7 + $0x2d0] sm:$0xff]
  %v1225 = vld [vmem:[%s7 + $0x2d8] sm:$0xff]
  %v1226 = vld [vmem:[%s7 + $0x2e0] sm:$0xff]
  %v1227 = vld [vmem:[%s7 + $0x2e8] sm:$0xff]
  %v1228 = vld [vmem:[%s7 + $0x2f0] sm:$0xff]
  %v1229 = vld [vmem:[%s7 + $0x2f8] sm:$0xff]
  %v1230 = vld [vmem:[%s7 + $0x300] sm:$0xff]
  %v1231 = vld [vmem:[%s7 + $0x308] sm:$0xff]
  %v1232 = vld [vmem:[%s7 + $0x310] sm:$0xff]
  %v1233 = vld [vmem:[%s7 + $0x318] sm:$0xff]
  %v1234 = vld [vmem:[%s7 + $0x320] sm:$0xff]
  %v1235 = vld [vmem:[%s7 + $0x328] sm:$0xff]
  %v1236 = vld [vmem:[%s7 + $0x330] sm:$0xff]
  %v1237 = vld [vmem:[%s7 + $0x338] sm:$0xff]
  %v1238 = vld [vmem:[%s7 + $0x340] sm:$0xff]
  %v1239 = vld [vmem:[%s7 + $0x348] sm:$0xff]
  %v1240 = vld [vmem:[%s7 + $0x350] sm:$0xff]
  %v1241 = vld [vmem:[%s7 + $0x358] sm:$0xff]
  %v1242 = vld [vmem:[%s7 + $0x360] sm:$0xff]
  %v1243 = vld [vmem:[%s7 + $0x368] sm:$0xff]
  %v1244 = vld [vmem:[%s7 + $0x370] sm:$0xff]
  %v1245 = vld [vmem:[%s7 + $0x378] sm:$0xff]
  %v1246 = vld [vmem:[%s7 + $0x380] sm:$0xff]
  %v1247 = vld [vmem:[%s7 + $0x388] sm:$0xff]
  %v1248 = vld [vmem:[%s7 + $0x390] sm:$0xff]
  %v1249 = vld [vmem:[%s7 + $0x398] sm:$0xff]
  %v1250 = vld [vmem:[%s7 + $0x3a0] sm:$0xff]
  %v1251 = vld [vmem:[%s7 + $0x3a8] sm:$0xff]
  %v1252 = vld [vmem:[%s7 + $0x3b0] sm:$0xff]
  %v1253 = vld [vmem:[%s7 + $0x3b8] sm:$0xff]
  %v1254 = vld [vmem:[%s7 + $0x3c0] sm:$0xff]
  %v1255 = vld [vmem:[%s7 + $0x3c8] sm:$0xff]
  %v1256 = vld [vmem:[%s7 + $0x3d0] sm:$0xff]
  %v1257 = vld [vmem:[%s7 + $0x3d8] sm:$0xff]
  %v1258 = vld [vmem:[%s7 + $0x3e0] sm:$0xff]
  %v1259 = vld [vmem:[%s7 + $0x3e8] sm:$0xff]
  %v1260 = vld [vmem:[%s7 + $0x3f0] sm:$0xff]
  %v1261 = vld [vmem:[%s7 + $0x3f8] sm:$0xff]
  %v1262 = vld [vmem:[%s7 + $0x400] sm:$0xff]
  %v1263 = vld [vmem:[%s7 + $0x408] sm:$0xff]
  %v1264 = vld [vmem:[%s7 + $0x410] sm:$0xff]
  %v1265 = vld [vmem:[%s7 + $0x418] sm:$0xff]
  %v1266 = vld [vmem:[%s7 + $0x420] sm:$0xff]
  %v1267 = vld [vmem:[%s7 + $0x428] sm:$0xff]
  %v1268 = vld [vmem:[%s7 + $0x430] sm:$0xff]
  %v1269 = vld [vmem:[%s7 + $0x438] sm:$0xff]
  %v1270 = vld [vmem:[%s7 + $0x440] sm:$0xff]
  %v1271 = vld [vmem:[%s7 + $0x448] sm:$0xff]
  %v1272 = vld [vmem:[%s7 + $0x450] sm:$0xff]
  %v1273 = vld [vmem:[%s7 + $0x458] sm:$0xff]
  %v1274 = vld [vmem:[%s7 + $0x460] sm:$0xff]
  %v1275 = vld [vmem:[%s7 + $0x468] sm:$0xff]
  %v1276 = vld [vmem:[%s7 + $0x470] sm:$0xff]
  %v1277 = vld [vmem:[%s7 + $0x478] sm:$0xff]
  %v1278 = vld [vmem:[%s7 + $0x480] sm:$0xff]
  %v1279 = vld [vmem:[%s7 + $0x488] sm:$0xff]
  %v1280 = vld [vmem:[%s7 + $0x490] sm:$0xff]
  %v1281 = vld [vmem:[%s7 + $0x498] sm:$0xff]
  %v1282 = vld [vmem:[%s7 + $0x4a0] sm:$0xff]
  %v1283 = vld [vmem:[%s7 + $0x4a8] sm:$0xff]
  %v1284 = vld [vmem:[%s7 + $0x4b0] sm:$0xff]
  %v1285 = vld [vmem:[%s7 + $0x4b8] sm:$0xff]
  %v1286 = vld [vmem:[%s7 + $0x4c0] sm:$0xff]
  %v1287 = vld [vmem:[%s7 + $0x4c8] sm:$0xff]
  %v1288 = vld [vmem:[%s7 + $0x4d0] sm:$0xff]
  %v1289 = vld [vmem:[%s7 + $0x4d8] sm:$0xff]
  %v1290 = vld [vmem:[%s7 + $0x4e0] sm:$0xff]
  %v1291 = vld [vmem:[%s7 + $0x4e8] sm:$0xff]
  %v1292 = vld [vmem:[%s7 + $0x4f0] sm:$0xff]
  %v1293 = vld [vmem:[%s7 + $0x4f8] sm:$0xff]
  %v1294 = vld [vmem:[%s7 + $0x500] sm:$0xff]
  %v1295 = vld [vmem:[%s7 + $0x508] sm:$0xff]
  %v1296 = vld [vmem:[%s7 + $0x510] sm:$0xff]
  %v1297 = vld [vmem:[%s7 + $0x518] sm:$0xff]
  %v1298 = vld [vmem:[%s7 + $0x520] sm:$0xff]
  %v1299 = vld [vmem:[%s7 + $0x528] sm:$0xff]
  %v1300 = vld [vmem:[%s7 + $0x530] sm:$0xff]
  %v1301 = vld [vmem:[%s7 + $0x538] sm:$0xff]
  %v1302 = vld [vmem:[%s7 + $0x540] sm:$0xff]
  %v1303 = vld [vmem:[%s7 + $0x548] sm:$0xff]
  %v1304 = vld [vmem:[%s7 + $0x550] sm:$0xff]
  %v1305 = vld [vmem:[%s7 + $0x558] sm:$0xff]
  %v1306 = vld [vmem:[%s7 + $0x560] sm:$0xff]
  %v1307 = vld [vmem:[%s7 + $0x568] sm:$0xff]
  %v1308 = vld [vmem:[%s7 + $0x570] sm:$0xff]
  %v1309 = vld [vmem:[%s7 + $0x578] sm:$0xff]
  %v1310 = vld [vmem:[%s7 + $0x580] sm:$0xff]
  %v1311 = vld [vmem:[%s7 + $0x588] sm:$0xff]
  %v1312 = vld [vmem:[%s7 + $0x590] sm:$0xff]
  %v1313 = vld [vmem:[%s7 + $0x598] sm:$0xff]
  %v1314 = vld [vmem:[%s7 + $0x5a0] sm:$0xff]
  %v1315 = vld [vmem:[%s7 + $0x5a8] sm:$0xff]
  %v1316 = vld [vmem:[%s7 + $0x5b0] sm:$0xff]
  %v1317 = vld [vmem:[%s7 + $0x5b8] sm:$0xff]
  %v1318 = vld [vmem:[%s7 + $0x5c0] sm:$0xff]
  %v1319 = vld [vmem:[%s7 + $0x5c8] sm:$0xff]
  %v1320 = vld [vmem:[%s7 + $0x5d0] sm:$0xff]
  %v1321 = vld [vmem:[%s7 + $0x5d8] sm:$0xff]
  %v1322 = vld [vmem:[%s7 + $0x5e0] sm:$0xff]
  %v1323 = vld [vmem:[%s7 + $0x5e8] sm:$0xff]
  %v1324 = vld [vmem:[%s7 + $0x5f0] sm:$0xff]
  %v1325 = vld [vmem:[%s7 + $0x5f8] sm:$0xff]
  %v1326 = vld [vmem:[%s8] sm:$0x3f]
  %v1328 = vperm.slane %v1326, 0
  %v1329 = vperm.slane %v1326, 1
  %v1330 = vperm.slane %v1326, 2
  %v1331 = vperm.slane %v1326, 3
  %v1332 = vperm.slane %v1326, 4
  %v1333 = vperm.slane %v1326, 5
  %v1532 = vunpack.c.l.b16 %v1134
  %v1533 = vunpack.c.h.b16 %v1134
  %v1534 = vunpack.c.l.b16 %v1135
  %v1535 = vunpack.c.h.b16 %v1135
  %v1536 = vunpack.c.l.b16 %v1136
  %v1537 = vunpack.c.h.b16 %v1136
  %v1538 = vunpack.c.l.b16 %v1137
  %v1539 = vunpack.c.h.b16 %v1137
  %v1540 = vunpack.c.l.b16 %v1138
  %v1541 = vunpack.c.h.b16 %v1138
  %v1542 = vunpack.c.l.b16 %v1139
  %v1543 = vunpack.c.h.b16 %v1139
  %v1544 = vunpack.c.l.b16 %v1140
  %v1545 = vunpack.c.h.b16 %v1140
  %v1546 = vunpack.c.l.b16 %v1141
  %v1547 = vunpack.c.h.b16 %v1141
  %v1548 = vunpack.c.l.b16 %v1142
  %v1549 = vunpack.c.h.b16 %v1142
  %v1550 = vunpack.c.l.b16 %v1143
  %v1551 = vunpack.c.h.b16 %v1143
  %v1552 = vunpack.c.l.b16 %v1144
  %v1553 = vunpack.c.h.b16 %v1144
  %v1554 = vunpack.c.l.b16 %v1145
  %v1555 = vunpack.c.h.b16 %v1145
  %v1556 = vunpack.c.l.b16 %v1146
  %v1557 = vunpack.c.h.b16 %v1146
  %v1558 = vunpack.c.l.b16 %v1147
  %v1559 = vunpack.c.h.b16 %v1147
  %v1560 = vunpack.c.l.b16 %v1148
  %v1561 = vunpack.c.h.b16 %v1148
  %v1562 = vunpack.c.l.b16 %v1149
  %v1563 = vunpack.c.h.b16 %v1149
  %v1564 = vunpack.c.l.b16 %v1150
  %v1565 = vunpack.c.h.b16 %v1150
  %v1566 = vunpack.c.l.b16 %v1151
  %v1567 = vunpack.c.h.b16 %v1151
  %v1568 = vunpack.c.l.b16 %v1152
  %v1569 = vunpack.c.h.b16 %v1152
  %v1570 = vunpack.c.l.b16 %v1153
  %v1571 = vunpack.c.h.b16 %v1153
  %v1572 = vunpack.c.l.b16 %v1154
  %v1573 = vunpack.c.h.b16 %v1154
  %v1574 = vunpack.c.l.b16 %v1155
  %v1575 = vunpack.c.h.b16 %v1155
  %v1576 = vunpack.c.l.b16 %v1156
  %v1577 = vunpack.c.h.b16 %v1156
  %v1578 = vunpack.c.l.b16 %v1157
  %v1579 = vunpack.c.h.b16 %v1157
  %v1580 = vunpack.c.l.b16 %v1158
  %v1581 = vunpack.c.h.b16 %v1158
  %v1582 = vunpack.c.l.b16 %v1159
  %v1583 = vunpack.c.h.b16 %v1159
  %v1584 = vunpack.c.l.b16 %v1160
  %v1585 = vunpack.c.h.b16 %v1160
  %v1586 = vunpack.c.l.b16 %v1161
  %v1587 = vunpack.c.h.b16 %v1161
  %v1588 = vunpack.c.l.b16 %v1162
  %v1589 = vunpack.c.h.b16 %v1162
  %v1590 = vunpack.c.l.b16 %v1163
  %v1591 = vunpack.c.h.b16 %v1163
  %v1592 = vunpack.c.l.b16 %v1164
  %v1593 = vunpack.c.h.b16 %v1164
  %v1594 = vunpack.c.l.b16 %v1165
  %v1595 = vunpack.c.h.b16 %v1165
  %v1596 = vunpack.c.l.b16 %v1166
  %v1597 = vunpack.c.h.b16 %v1166
  %v1598 = vunpack.c.l.b16 %v1167
  %v1599 = vunpack.c.h.b16 %v1167
  %v1600 = vunpack.c.l.b16 %v1168
  %v1601 = vunpack.c.h.b16 %v1168
  %v1602 = vunpack.c.l.b16 %v1169
  %v1603 = vunpack.c.h.b16 %v1169
  %v1604 = vunpack.c.l.b16 %v1170
  %v1605 = vunpack.c.h.b16 %v1170
  %v1606 = vunpack.c.l.b16 %v1171
  %v1607 = vunpack.c.h.b16 %v1171
  %v1608 = vunpack.c.l.b16 %v1172
  %v1609 = vunpack.c.h.b16 %v1172
  %v1610 = vunpack.c.l.b16 %v1173
  %v1611 = vunpack.c.h.b16 %v1173
  %v1612 = vunpack.c.l.b16 %v1174
  %v1613 = vunpack.c.h.b16 %v1174
  %v1614 = vunpack.c.l.b16 %v1175
  %v1615 = vunpack.c.h.b16 %v1175
  %v1616 = vunpack.c.l.b16 %v1176
  %v1617 = vunpack.c.h.b16 %v1176
  %v1618 = vunpack.c.l.b16 %v1177
  %v1619 = vunpack.c.h.b16 %v1177
  %v1620 = vunpack.c.l.b16 %v1178
  %v1621 = vunpack.c.h.b16 %v1178
  %v1622 = vunpack.c.l.b16 %v1179
  %v1623 = vunpack.c.h.b16 %v1179
  %v1624 = vunpack.c.l.b16 %v1180
  %v1625 = vunpack.c.h.b16 %v1180
  %v1626 = vunpack.c.l.b16 %v1181
  %v1627 = vunpack.c.h.b16 %v1181
  %v1628 = vunpack.c.l.b16 %v1182
  %v1629 = vunpack.c.h.b16 %v1182
  %v1630 = vunpack.c.l.b16 %v1183
  %v1631 = vunpack.c.h.b16 %v1183
  %v1632 = vunpack.c.l.b16 %v1184
  %v1633 = vunpack.c.h.b16 %v1184
  %v1634 = vunpack.c.l.b16 %v1185
  %v1635 = vunpack.c.h.b16 %v1185
  %v1636 = vunpack.c.l.b16 %v1186
  %v1637 = vunpack.c.h.b16 %v1186
  %v1638 = vunpack.c.l.b16 %v1187
  %v1639 = vunpack.c.h.b16 %v1187
  %v1640 = vunpack.c.l.b16 %v1188
  %v1641 = vunpack.c.h.b16 %v1188
  %v1642 = vunpack.c.l.b16 %v1189
  %v1643 = vunpack.c.h.b16 %v1189
  %v1644 = vunpack.c.l.b16 %v1190
  %v1645 = vunpack.c.h.b16 %v1190
  %v1646 = vunpack.c.l.b16 %v1191
  %v1647 = vunpack.c.h.b16 %v1191
  %v1648 = vunpack.c.l.b16 %v1192
  %v1649 = vunpack.c.h.b16 %v1192
  %v1650 = vunpack.c.l.b16 %v1193
  %v1651 = vunpack.c.h.b16 %v1193
  %v1652 = vunpack.c.l.b16 %v1194
  %v1653 = vunpack.c.h.b16 %v1194
  %v1654 = vunpack.c.l.b16 %v1195
  %v1655 = vunpack.c.h.b16 %v1195
  %v1656 = vunpack.c.l.b16 %v1196
  %v1657 = vunpack.c.h.b16 %v1196
  %v1658 = vunpack.c.l.b16 %v1197
  %v1659 = vunpack.c.h.b16 %v1197
  %v1660 = vunpack.c.l.b16 %v1198
  %v1661 = vunpack.c.h.b16 %v1198
  %v1662 = vunpack.c.l.b16 %v1199
  %v1663 = vunpack.c.h.b16 %v1199
  %v1664 = vunpack.c.l.b16 %v1200
  %v1665 = vunpack.c.h.b16 %v1200
  %v1666 = vunpack.c.l.b16 %v1201
  %v1667 = vunpack.c.h.b16 %v1201
  %v1668 = vunpack.c.l.b16 %v1202
  %v1669 = vunpack.c.h.b16 %v1202
  %v1670 = vunpack.c.l.b16 %v1203
  %v1671 = vunpack.c.h.b16 %v1203
  %v1672 = vunpack.c.l.b16 %v1204
  %v1673 = vunpack.c.h.b16 %v1204
  %v1674 = vunpack.c.l.b16 %v1205
  %v1675 = vunpack.c.h.b16 %v1205
  %v1676 = vunpack.c.l.b16 %v1206
  %v1677 = vunpack.c.h.b16 %v1206
  %v1678 = vunpack.c.l.b16 %v1207
  %v1679 = vunpack.c.h.b16 %v1207
  %v1680 = vunpack.c.l.b16 %v1208
  %v1681 = vunpack.c.h.b16 %v1208
  %v1682 = vunpack.c.l.b16 %v1209
  %v1683 = vunpack.c.h.b16 %v1209
  %v1684 = vunpack.c.l.b16 %v1210
  %v1685 = vunpack.c.h.b16 %v1210
  %v1686 = vunpack.c.l.b16 %v1211
  %v1687 = vunpack.c.h.b16 %v1211
  %v1688 = vunpack.c.l.b16 %v1212
  %v1689 = vunpack.c.h.b16 %v1212
  %v1690 = vunpack.c.l.b16 %v1213
  %v1691 = vunpack.c.h.b16 %v1213
  %v1692 = vunpack.c.l.b16 %v1214
  %v1693 = vunpack.c.h.b16 %v1214
  %v1694 = vunpack.c.l.b16 %v1215
  %v1695 = vunpack.c.h.b16 %v1215
  %v1696 = vunpack.c.l.b16 %v1216
  %v1697 = vunpack.c.h.b16 %v1216
  %v1698 = vunpack.c.l.b16 %v1217
  %v1699 = vunpack.c.h.b16 %v1217
  %v1700 = vunpack.c.l.b16 %v1218
  %v1701 = vunpack.c.h.b16 %v1218
  %v1702 = vunpack.c.l.b16 %v1219
  %v1703 = vunpack.c.h.b16 %v1219
  %v1704 = vunpack.c.l.b16 %v1220
  %v1705 = vunpack.c.h.b16 %v1220
  %v1706 = vunpack.c.l.b16 %v1221
  %v1707 = vunpack.c.h.b16 %v1221
  %v1708 = vunpack.c.l.b16 %v1222
  %v1709 = vunpack.c.h.b16 %v1222
  %v1710 = vunpack.c.l.b16 %v1223
  %v1711 = vunpack.c.h.b16 %v1223
  %v1712 = vunpack.c.l.b16 %v1224
  %v1713 = vunpack.c.h.b16 %v1224
  %v1714 = vunpack.c.l.b16 %v1225
  %v1715 = vunpack.c.h.b16 %v1225
  %v1716 = vunpack.c.l.b16 %v1226
  %v1717 = vunpack.c.h.b16 %v1226
  %v1718 = vunpack.c.l.b16 %v1227
  %v1719 = vunpack.c.h.b16 %v1227
  %v1720 = vunpack.c.l.b16 %v1228
  %v1721 = vunpack.c.h.b16 %v1228
  %v1722 = vunpack.c.l.b16 %v1229
  %v1723 = vunpack.c.h.b16 %v1229
  %v1724 = vunpack.c.l.b16 %v1230
  %v1725 = vunpack.c.h.b16 %v1230
  %v1726 = vunpack.c.l.b16 %v1231
  %v1727 = vunpack.c.h.b16 %v1231
  %v1728 = vunpack.c.l.b16 %v1232
  %v1729 = vunpack.c.h.b16 %v1232
  %v1730 = vunpack.c.l.b16 %v1233
  %v1731 = vunpack.c.h.b16 %v1233
  %v1732 = vunpack.c.l.b16 %v1234
  %v1733 = vunpack.c.h.b16 %v1234
  %v1734 = vunpack.c.l.b16 %v1235
  %v1735 = vunpack.c.h.b16 %v1235
  %v1736 = vunpack.c.l.b16 %v1236
  %v1737 = vunpack.c.h.b16 %v1236
  %v1738 = vunpack.c.l.b16 %v1237
  %v1739 = vunpack.c.h.b16 %v1237
  %v1740 = vunpack.c.l.b16 %v1238
  %v1741 = vunpack.c.h.b16 %v1238
  %v1742 = vunpack.c.l.b16 %v1239
  %v1743 = vunpack.c.h.b16 %v1239
  %v1744 = vunpack.c.l.b16 %v1240
  %v1745 = vunpack.c.h.b16 %v1240
  %v1746 = vunpack.c.l.b16 %v1241
  %v1747 = vunpack.c.h.b16 %v1241
  %v1748 = vunpack.c.l.b16 %v1242
  %v1749 = vunpack.c.h.b16 %v1242
  %v1750 = vunpack.c.l.b16 %v1243
  %v1751 = vunpack.c.h.b16 %v1243
  %v1752 = vunpack.c.l.b16 %v1244
  %v1753 = vunpack.c.h.b16 %v1244
  %v1754 = vunpack.c.l.b16 %v1245
  %v1755 = vunpack.c.h.b16 %v1245
  %v1756 = vunpack.c.l.b16 %v1246
  %v1757 = vunpack.c.h.b16 %v1246
  %v1758 = vunpack.c.l.b16 %v1247
  %v1759 = vunpack.c.h.b16 %v1247
  %v1760 = vunpack.c.l.b16 %v1248
  %v1761 = vunpack.c.h.b16 %v1248
  %v1762 = vunpack.c.l.b16 %v1249
  %v1763 = vunpack.c.h.b16 %v1249
  %v1764 = vunpack.c.l.b16 %v1250
  %v1765 = vunpack.c.h.b16 %v1250
  %v1766 = vunpack.c.l.b16 %v1251
  %v1767 = vunpack.c.h.b16 %v1251
  %v1768 = vunpack.c.l.b16 %v1252
  %v1769 = vunpack.c.h.b16 %v1252
  %v1770 = vunpack.c.l.b16 %v1253
  %v1771 = vunpack.c.h.b16 %v1253
  %v1772 = vunpack.c.l.b16 %v1254
  %v1773 = vunpack.c.h.b16 %v1254
  %v1774 = vunpack.c.l.b16 %v1255
  %v1775 = vunpack.c.h.b16 %v1255
  %v1776 = vunpack.c.l.b16 %v1256
  %v1777 = vunpack.c.h.b16 %v1256
  %v1778 = vunpack.c.l.b16 %v1257
  %v1779 = vunpack.c.h.b16 %v1257
  %v1780 = vunpack.c.l.b16 %v1258
  %v1781 = vunpack.c.h.b16 %v1258
  %v1782 = vunpack.c.l.b16 %v1259
  %v1783 = vunpack.c.h.b16 %v1259
  %v1784 = vunpack.c.l.b16 %v1260
  %v1785 = vunpack.c.h.b16 %v1260
  %v1786 = vunpack.c.l.b16 %v1261
  %v1787 = vunpack.c.h.b16 %v1261
  %v1788 = vunpack.c.l.b16 %v1262
  %v1789 = vunpack.c.h.b16 %v1262
  %v1790 = vunpack.c.l.b16 %v1263
  %v1791 = vunpack.c.h.b16 %v1263
  %v1792 = vunpack.c.l.b16 %v1264
  %v1793 = vunpack.c.h.b16 %v1264
  %v1794 = vunpack.c.l.b16 %v1265
  %v1795 = vunpack.c.h.b16 %v1265
  %v1796 = vunpack.c.l.b16 %v1266
  %v1797 = vunpack.c.h.b16 %v1266
  %v1798 = vunpack.c.l.b16 %v1267
  %v1799 = vunpack.c.h.b16 %v1267
  %v1800 = vunpack.c.l.b16 %v1268
  %v1801 = vunpack.c.h.b16 %v1268
  %v1802 = vunpack.c.l.b16 %v1269
  %v1803 = vunpack.c.h.b16 %v1269
  %v1804 = vunpack.c.l.b16 %v1270
  %v1805 = vunpack.c.h.b16 %v1270
  %v1806 = vunpack.c.l.b16 %v1271
  %v1807 = vunpack.c.h.b16 %v1271
  %v1808 = vunpack.c.l.b16 %v1272
  %v1809 = vunpack.c.h.b16 %v1272
  %v1810 = vunpack.c.l.b16 %v1273
  %v1811 = vunpack.c.h.b16 %v1273
  %v1812 = vunpack.c.l.b16 %v1274
  %v1813 = vunpack.c.h.b16 %v1274
  %v1814 = vunpack.c.l.b16 %v1275
  %v1815 = vunpack.c.h.b16 %v1275
  %v1816 = vunpack.c.l.b16 %v1276
  %v1817 = vunpack.c.h.b16 %v1276
  %v1818 = vunpack.c.l.b16 %v1277
  %v1819 = vunpack.c.h.b16 %v1277
  %v1820 = vunpack.c.l.b16 %v1278
  %v1821 = vunpack.c.h.b16 %v1278
  %v1822 = vunpack.c.l.b16 %v1279
  %v1823 = vunpack.c.h.b16 %v1279
  %v1824 = vunpack.c.l.b16 %v1280
  %v1825 = vunpack.c.h.b16 %v1280
  %v1826 = vunpack.c.l.b16 %v1281
  %v1827 = vunpack.c.h.b16 %v1281
  %v1828 = vunpack.c.l.b16 %v1282
  %v1829 = vunpack.c.h.b16 %v1282
  %v1830 = vunpack.c.l.b16 %v1283
  %v1831 = vunpack.c.h.b16 %v1283
  %v1832 = vunpack.c.l.b16 %v1284
  %v1833 = vunpack.c.h.b16 %v1284
  %v1834 = vunpack.c.l.b16 %v1285
  %v1835 = vunpack.c.h.b16 %v1285
  %v1836 = vunpack.c.l.b16 %v1286
  %v1837 = vunpack.c.h.b16 %v1286
  %v1838 = vunpack.c.l.b16 %v1287
  %v1839 = vunpack.c.h.b16 %v1287
  %v1840 = vunpack.c.l.b16 %v1288
  %v1841 = vunpack.c.h.b16 %v1288
  %v1842 = vunpack.c.l.b16 %v1289
  %v1843 = vunpack.c.h.b16 %v1289
  %v1844 = vunpack.c.l.b16 %v1290
  %v1845 = vunpack.c.h.b16 %v1290
  %v1846 = vunpack.c.l.b16 %v1291
  %v1847 = vunpack.c.h.b16 %v1291
  %v1848 = vunpack.c.l.b16 %v1292
  %v1849 = vunpack.c.h.b16 %v1292
  %v1850 = vunpack.c.l.b16 %v1293
  %v1851 = vunpack.c.h.b16 %v1293
  %v1852 = vunpack.c.l.b16 %v1294
  %v1853 = vunpack.c.h.b16 %v1294
  %v1854 = vunpack.c.l.b16 %v1295
  %v1855 = vunpack.c.h.b16 %v1295
  %v1856 = vunpack.c.l.b16 %v1296
  %v1857 = vunpack.c.h.b16 %v1296
  %v1858 = vunpack.c.l.b16 %v1297
  %v1859 = vunpack.c.h.b16 %v1297
  %v1860 = vunpack.c.l.b16 %v1298
  %v1861 = vunpack.c.h.b16 %v1298
  %v1862 = vunpack.c.l.b16 %v1299
  %v1863 = vunpack.c.h.b16 %v1299
  %v1864 = vunpack.c.l.b16 %v1300
  %v1865 = vunpack.c.h.b16 %v1300
  %v1866 = vunpack.c.l.b16 %v1301
  %v1867 = vunpack.c.h.b16 %v1301
  %v1868 = vunpack.c.l.b16 %v1302
  %v1869 = vunpack.c.h.b16 %v1302
  %v1870 = vunpack.c.l.b16 %v1303
  %v1871 = vunpack.c.h.b16 %v1303
  %v1872 = vunpack.c.l.b16 %v1304
  %v1873 = vunpack.c.h.b16 %v1304
  %v1874 = vunpack.c.l.b16 %v1305
  %v1875 = vunpack.c.h.b16 %v1305
  %v1876 = vunpack.c.l.b16 %v1306
  %v1877 = vunpack.c.h.b16 %v1306
  %v1878 = vunpack.c.l.b16 %v1307
  %v1879 = vunpack.c.h.b16 %v1307
  %v1880 = vunpack.c.l.b16 %v1308
  %v1881 = vunpack.c.h.b16 %v1308
  %v1882 = vunpack.c.l.b16 %v1309
  %v1883 = vunpack.c.h.b16 %v1309
  %v1884 = vunpack.c.l.b16 %v1310
  %v1885 = vunpack.c.h.b16 %v1310
  %v1886 = vunpack.c.l.b16 %v1311
  %v1887 = vunpack.c.h.b16 %v1311
  %v1888 = vunpack.c.l.b16 %v1312
  %v1889 = vunpack.c.h.b16 %v1312
  %v1890 = vunpack.c.l.b16 %v1313
  %v1891 = vunpack.c.h.b16 %v1313
  %v1892 = vunpack.c.l.b16 %v1314
  %v1893 = vunpack.c.h.b16 %v1314
  %v1894 = vunpack.c.l.b16 %v1315
  %v1895 = vunpack.c.h.b16 %v1315
  %v1896 = vunpack.c.l.b16 %v1316
  %v1897 = vunpack.c.h.b16 %v1316
  %v1898 = vunpack.c.l.b16 %v1317
  %v1899 = vunpack.c.h.b16 %v1317
  %v1900 = vunpack.c.l.b16 %v1318
  %v1901 = vunpack.c.h.b16 %v1318
  %v1902 = vunpack.c.l.b16 %v1319
  %v1903 = vunpack.c.h.b16 %v1319
  %v1904 = vunpack.c.l.b16 %v1320
  %v1905 = vunpack.c.h.b16 %v1320
  %v1906 = vunpack.c.l.b16 %v1321
  %v1907 = vunpack.c.h.b16 %v1321
  %v1908 = vunpack.c.l.b16 %v1322
  %v1909 = vunpack.c.h.b16 %v1322
  %v1910 = vunpack.c.l.b16 %v1323
  %v1911 = vunpack.c.h.b16 %v1323
  %v1912 = vunpack.c.l.b16 %v1324
  %v1913 = vunpack.c.h.b16 %v1324
  %v1914 = vunpack.c.l.b16 %v1325
  %v1915 = vunpack.c.h.b16 %v1325
  %v1916 = vpack.c.b16 %v1538, %v1532
  %v1917 = vpack.c.b16 %v1539, %v1533
  %v1918 = vpack.c.b16 %v1540, %v1534
  %v1919 = vpack.c.b16 %v1541, %v1535
  %v1920 = vpack.c.b16 %v1542, %v1536
  %v1921 = vpack.c.b16 %v1543, %v1537
  %v1922 = vpack.c.b16 %v1550, %v1544
  %v1923 = vpack.c.b16 %v1551, %v1545
  %v1924 = vpack.c.b16 %v1552, %v1546
  %v1925 = vpack.c.b16 %v1553, %v1547
  %v1926 = vpack.c.b16 %v1554, %v1548
  %v1927 = vpack.c.b16 %v1555, %v1549
  %v1928 = vpack.c.b16 %v1562, %v1556
  %v1929 = vpack.c.b16 %v1563, %v1557
  %v1930 = vpack.c.b16 %v1564, %v1558
  %v1931 = vpack.c.b16 %v1565, %v1559
  %v1932 = vpack.c.b16 %v1566, %v1560
  %v1933 = vpack.c.b16 %v1567, %v1561
  %v1934 = vpack.c.b16 %v1574, %v1568
  %v1935 = vpack.c.b16 %v1575, %v1569
  %v1936 = vpack.c.b16 %v1576, %v1570
  %v1937 = vpack.c.b16 %v1577, %v1571
  %v1938 = vpack.c.b16 %v1578, %v1572
  %v1939 = vpack.c.b16 %v1579, %v1573
  %v1940 = vpack.c.b16 %v1586, %v1580
  %v1941 = vpack.c.b16 %v1587, %v1581
  %v1942 = vpack.c.b16 %v1588, %v1582
  %v1943 = vpack.c.b16 %v1589, %v1583
  %v1944 = vpack.c.b16 %v1590, %v1584
  %v1945 = vpack.c.b16 %v1591, %v1585
  %v1946 = vpack.c.b16 %v1598, %v1592
  %v1947 = vpack.c.b16 %v1599, %v1593
  %v1948 = vpack.c.b16 %v1600, %v1594
  %v1949 = vpack.c.b16 %v1601, %v1595
  %v1950 = vpack.c.b16 %v1602, %v1596
  %v1951 = vpack.c.b16 %v1603, %v1597
  %v1952 = vpack.c.b16 %v1610, %v1604
  %v1953 = vpack.c.b16 %v1611, %v1605
  %v1954 = vpack.c.b16 %v1612, %v1606
  %v1955 = vpack.c.b16 %v1613, %v1607
  %v1956 = vpack.c.b16 %v1614, %v1608
  %v1957 = vpack.c.b16 %v1615, %v1609
  %v1958 = vpack.c.b16 %v1622, %v1616
  %v1959 = vpack.c.b16 %v1623, %v1617
  %v1960 = vpack.c.b16 %v1624, %v1618
  %v1961 = vpack.c.b16 %v1625, %v1619
  %v1962 = vpack.c.b16 %v1626, %v1620
  %v1963 = vpack.c.b16 %v1627, %v1621
  %v1964 = vpack.c.b16 %v1634, %v1628
  %v1965 = vpack.c.b16 %v1635, %v1629
  %v1966 = vpack.c.b16 %v1636, %v1630
  %v1967 = vpack.c.b16 %v1637, %v1631
  %v1968 = vpack.c.b16 %v1638, %v1632
  %v1969 = vpack.c.b16 %v1639, %v1633
  %v1970 = vpack.c.b16 %v1646, %v1640
  %v1971 = vpack.c.b16 %v1647, %v1641
  %v1972 = vpack.c.b16 %v1648, %v1642
  %v1973 = vpack.c.b16 %v1649, %v1643
  %v1974 = vpack.c.b16 %v1650, %v1644
  %v1975 = vpack.c.b16 %v1651, %v1645
  %v1976 = vpack.c.b16 %v1658, %v1652
  %v1977 = vpack.c.b16 %v1659, %v1653
  %v1978 = vpack.c.b16 %v1660, %v1654
  %v1979 = vpack.c.b16 %v1661, %v1655
  %v1980 = vpack.c.b16 %v1662, %v1656
  %v1981 = vpack.c.b16 %v1663, %v1657
  %v1982 = vpack.c.b16 %v1670, %v1664
  %v1983 = vpack.c.b16 %v1671, %v1665
  %v1984 = vpack.c.b16 %v1672, %v1666
  %v1985 = vpack.c.b16 %v1673, %v1667
  %v1986 = vpack.c.b16 %v1674, %v1668
  %v1987 = vpack.c.b16 %v1675, %v1669
  %v1988 = vpack.c.b16 %v1682, %v1676
  %v1989 = vpack.c.b16 %v1683, %v1677
  %v1990 = vpack.c.b16 %v1684, %v1678
  %v1991 = vpack.c.b16 %v1685, %v1679
  %v1992 = vpack.c.b16 %v1686, %v1680
  %v1993 = vpack.c.b16 %v1687, %v1681
  %v1994 = vpack.c.b16 %v1694, %v1688
  %v1995 = vpack.c.b16 %v1695, %v1689
  %v1996 = vpack.c.b16 %v1696, %v1690
  %v1997 = vpack.c.b16 %v1697, %v1691
  %v1998 = vpack.c.b16 %v1698, %v1692
  %v1999 = vpack.c.b16 %v1699, %v1693
  %v2000 = vpack.c.b16 %v1706, %v1700
  %v2001 = vpack.c.b16 %v1707, %v1701
  %v2002 = vpack.c.b16 %v1708, %v1702
  %v2003 = vpack.c.b16 %v1709, %v1703
  %v2004 = vpack.c.b16 %v1710, %v1704
  %v2005 = vpack.c.b16 %v1711, %v1705
  %v2006 = vpack.c.b16 %v1718, %v1712
  %v2007 = vpack.c.b16 %v1719, %v1713
  %v2008 = vpack.c.b16 %v1720, %v1714
  %v2009 = vpack.c.b16 %v1721, %v1715
  %v2010 = vpack.c.b16 %v1722, %v1716
  %v2011 = vpack.c.b16 %v1723, %v1717
  %v2012 = vpack.c.b16 %v1730, %v1724
  %v2013 = vpack.c.b16 %v1731, %v1725
  %v2014 = vpack.c.b16 %v1732, %v1726
  %v2015 = vpack.c.b16 %v1733, %v1727
  %v2016 = vpack.c.b16 %v1734, %v1728
  %v2017 = vpack.c.b16 %v1735, %v1729
  %v2018 = vpack.c.b16 %v1742, %v1736
  %v2019 = vpack.c.b16 %v1743, %v1737
  %v2020 = vpack.c.b16 %v1744, %v1738
  %v2021 = vpack.c.b16 %v1745, %v1739
  %v2022 = vpack.c.b16 %v1746, %v1740
  %v2023 = vpack.c.b16 %v1747, %v1741
  %v2024 = vpack.c.b16 %v1754, %v1748
  %v2025 = vpack.c.b16 %v1755, %v1749
  %v2026 = vpack.c.b16 %v1756, %v1750
  %v2027 = vpack.c.b16 %v1757, %v1751
  %v2028 = vpack.c.b16 %v1758, %v1752
  %v2029 = vpack.c.b16 %v1759, %v1753
  %v2030 = vpack.c.b16 %v1766, %v1760
  %v2031 = vpack.c.b16 %v1767, %v1761
  %v2032 = vpack.c.b16 %v1768, %v1762
  %v2033 = vpack.c.b16 %v1769, %v1763
  %v2034 = vpack.c.b16 %v1770, %v1764
  %v2035 = vpack.c.b16 %v1771, %v1765
  %v2036 = vpack.c.b16 %v1778, %v1772
  %v2037 = vpack.c.b16 %v1779, %v1773
  %v2038 = vpack.c.b16 %v1780, %v1774
  %v2039 = vpack.c.b16 %v1781, %v1775
  %v2040 = vpack.c.b16 %v1782, %v1776
  %v2041 = vpack.c.b16 %v1783, %v1777
  %v2042 = vpack.c.b16 %v1790, %v1784
  %v2043 = vpack.c.b16 %v1791, %v1785
  %v2044 = vpack.c.b16 %v1792, %v1786
  %v2045 = vpack.c.b16 %v1793, %v1787
  %v2046 = vpack.c.b16 %v1794, %v1788
  %v2047 = vpack.c.b16 %v1795, %v1789
  %v2048 = vpack.c.b16 %v1802, %v1796
  %v2049 = vpack.c.b16 %v1803, %v1797
  %v2050 = vpack.c.b16 %v1804, %v1798
  %v2051 = vpack.c.b16 %v1805, %v1799
  %v2052 = vpack.c.b16 %v1806, %v1800
  %v2053 = vpack.c.b16 %v1807, %v1801
  %v2054 = vpack.c.b16 %v1814, %v1808
  %v2055 = vpack.c.b16 %v1815, %v1809
  %v2056 = vpack.c.b16 %v1816, %v1810
  %v2057 = vpack.c.b16 %v1817, %v1811
  %v2058 = vpack.c.b16 %v1818, %v1812
  %v2059 = vpack.c.b16 %v1819, %v1813
  %v2060 = vpack.c.b16 %v1826, %v1820
  %v2061 = vpack.c.b16 %v1827, %v1821
  %v2062 = vpack.c.b16 %v1828, %v1822
  %v2063 = vpack.c.b16 %v1829, %v1823
  %v2064 = vpack.c.b16 %v1830, %v1824
  %v2065 = vpack.c.b16 %v1831, %v1825
  %v2066 = vpack.c.b16 %v1838, %v1832
  %v2067 = vpack.c.b16 %v1839, %v1833
  %v2068 = vpack.c.b16 %v1840, %v1834
  %v2069 = vpack.c.b16 %v1841, %v1835
  %v2070 = vpack.c.b16 %v1842, %v1836
  %v2071 = vpack.c.b16 %v1843, %v1837
  %v2072 = vpack.c.b16 %v1850, %v1844
  %v2073 = vpack.c.b16 %v1851, %v1845
  %v2074 = vpack.c.b16 %v1852, %v1846
  %v2075 = vpack.c.b16 %v1853, %v1847
  %v2076 = vpack.c.b16 %v1854, %v1848
  %v2077 = vpack.c.b16 %v1855, %v1849
  %v2078 = vpack.c.b16 %v1862, %v1856
  %v2079 = vpack.c.b16 %v1863, %v1857
  %v2080 = vpack.c.b16 %v1864, %v1858
  %v2081 = vpack.c.b16 %v1865, %v1859
  %v2082 = vpack.c.b16 %v1866, %v1860
  %v2083 = vpack.c.b16 %v1867, %v1861
  %v2084 = vpack.c.b16 %v1874, %v1868
  %v2085 = vpack.c.b16 %v1875, %v1869
  %v2086 = vpack.c.b16 %v1876, %v1870
  %v2087 = vpack.c.b16 %v1877, %v1871
  %v2088 = vpack.c.b16 %v1878, %v1872
  %v2089 = vpack.c.b16 %v1879, %v1873
  %v2090 = vpack.c.b16 %v1886, %v1880
  %v2091 = vpack.c.b16 %v1887, %v1881
  %v2092 = vpack.c.b16 %v1888, %v1882
  %v2093 = vpack.c.b16 %v1889, %v1883
  %v2094 = vpack.c.b16 %v1890, %v1884
  %v2095 = vpack.c.b16 %v1891, %v1885
  %v2096 = vpack.c.b16 %v1898, %v1892
  %v2097 = vpack.c.b16 %v1899, %v1893
  %v2098 = vpack.c.b16 %v1900, %v1894
  %v2099 = vpack.c.b16 %v1901, %v1895
  %v2100 = vpack.c.b16 %v1902, %v1896
  %v2101 = vpack.c.b16 %v1903, %v1897
  %v2102 = vpack.c.b16 %v1910, %v1904
  %v2103 = vpack.c.b16 %v1911, %v1905
  %v2104 = vpack.c.b16 %v1912, %v1906
  %v2105 = vpack.c.b16 %v1913, %v1907
  %v2106 = vpack.c.b16 %v1914, %v1908
  %v2107 = vpack.c.b16 %v1915, %v1909
  %2300 = vmatpush.bf16.msra.mxu0 %v1958
  %2301 = vmatpush.bf16.msra.mxu0 %v1952
  %2302 = vmatpush.bf16.msra.mxu0 %v1946
  %2303 = vmatpush.bf16.msra.mxu0 %v1940
  %2304 = vmatpush.bf16.msra.mxu0 %v1934
  %2305 = vmatpush.bf16.msra.mxu0 %v1928
  %2306 = vmatpush.bf16.msra.mxu0 %v1922
  %2307 = vmatpush.bf16.msra.mxu0 %v1916
  %2308 = vmatmul.bf16.gmra.mxu0 %v1130
  %v2309 = vpop.f32.mrf.mxu0
  %v2310 = vadd.f32 %v1328, %v2309
  %v2311 = vpop.f32.mrf.mxu0
  %2312 = vdwg.mxu0
  %2313 = vmatpush.bf16.msra.mxu0 %v2006
  %2314 = vmatpush.bf16.msra.mxu0 %v2000
  %2315 = vmatpush.bf16.msra.mxu0 %v1994
  %2316 = vmatpush.bf16.msra.mxu0 %v1988
  %2317 = vmatpush.bf16.msra.mxu0 %v1982
  %2318 = vmatpush.bf16.msra.mxu0 %v1976
  %2319 = vmatpush.bf16.msra.mxu0 %v1970
  %2320 = vmatpush.bf16.msra.mxu0 %v1964
  %2321 = vmatmul.bf16.gmra.mxu0 %v1131
  %v2322 = vpop.f32.mrf.mxu0
  %v2323 = vadd.f32 %v2310, %v2322
  %v2324 = vpop.f32.mrf.mxu0
  %2325 = vdwg.mxu0
  %2326 = vmatpush.bf16.msra.mxu0 %v2054
  %2327 = vmatpush.bf16.msra.mxu0 %v2048
  %2328 = vmatpush.bf16.msra.mxu0 %v2042
  %2329 = vmatpush.bf16.msra.mxu0 %v2036
  %2330 = vmatpush.bf16.msra.mxu0 %v2030
  %2331 = vmatpush.bf16.msra.mxu0 %v2024
  %2332 = vmatpush.bf16.msra.mxu0 %v2018
  %2333 = vmatpush.bf16.msra.mxu0 %v2012
  %2334 = vmatmul.bf16.gmra.mxu0 %v1132
  %v2335 = vpop.f32.mrf.mxu0
  %v2336 = vadd.f32 %v2323, %v2335
  %v2337 = vpop.f32.mrf.mxu0
  %2338 = vdwg.mxu0
  %2339 = vmatpush.bf16.msra.mxu0 %v2102
  %2340 = vmatpush.bf16.msra.mxu0 %v2096
  %2341 = vmatpush.bf16.msra.mxu0 %v2090
  %2342 = vmatpush.bf16.msra.mxu0 %v2084
  %2343 = vmatpush.bf16.msra.mxu0 %v2078
  %2344 = vmatpush.bf16.msra.mxu0 %v2072
  %2345 = vmatpush.bf16.msra.mxu0 %v2066
  %2346 = vmatpush.bf16.msra.mxu0 %v2060
  %2347 = vmatmul.bf16.gmra.mxu0 %v1133
  %v2348 = vpop.f32.mrf.mxu0
  %v2349 = vadd.f32 %v2336, %v2348
  %v2350 = vpop.f32.mrf.mxu0
  %2351 = vdwg.mxu0
  %2352 = vmatpush.bf16.msra.mxu0 %v1959
  %2353 = vmatpush.bf16.msra.mxu0 %v1953
  %2354 = vmatpush.bf16.msra.mxu0 %v1947
  %2355 = vmatpush.bf16.msra.mxu0 %v1941
  %2356 = vmatpush.bf16.msra.mxu0 %v1935
  %2357 = vmatpush.bf16.msra.mxu0 %v1929
  %2358 = vmatpush.bf16.msra.mxu0 %v1923
  %2359 = vmatpush.bf16.msra.mxu0 %v1917
  %2360 = vmatmul.bf16.gmra.mxu0 %v1130
  %v2361 = vpop.f32.mrf.mxu0
  %v2362 = vadd.f32 %v1329, %v2361
  %v2363 = vpop.f32.mrf.mxu0
  %2364 = vdwg.mxu0
  %2365 = vmatpush.bf16.msra.mxu0 %v2007
  %2366 = vmatpush.bf16.msra.mxu0 %v2001
  %2367 = vmatpush.bf16.msra.mxu0 %v1995
  %2368 = vmatpush.bf16.msra.mxu0 %v1989
  %2369 = vmatpush.bf16.msra.mxu0 %v1983
  %2370 = vmatpush.bf16.msra.mxu0 %v1977
  %2371 = vmatpush.bf16.msra.mxu0 %v1971
  %2372 = vmatpush.bf16.msra.mxu0 %v1965
  %2373 = vmatmul.bf16.gmra.mxu0 %v1131
  %v2374 = vpop.f32.mrf.mxu0
  %v2375 = vadd.f32 %v2362, %v2374
  %v2376 = vpop.f32.mrf.mxu0
  %2377 = vdwg.mxu0
  %2378 = vmatpush.bf16.msra.mxu0 %v2055
  %2379 = vmatpush.bf16.msra.mxu0 %v2049
  %2380 = vmatpush.bf16.msra.mxu0 %v2043
  %2381 = vmatpush.bf16.msra.mxu0 %v2037
  %2382 = vmatpush.bf16.msra.mxu0 %v2031
  %2383 = vmatpush.bf16.msra.mxu0 %v2025
  %2384 = vmatpush.bf16.msra.mxu0 %v2019
  %2385 = vmatpush.bf16.msra.mxu0 %v2013
  %2386 = vmatmul.bf16.gmra.mxu0 %v1132
  %v2387 = vpop.f32.mrf.mxu0
  %v2388 = vadd.f32 %v2375, %v2387
  %v2389 = vpop.f32.mrf.mxu0
  %2390 = vdwg.mxu0
  %2391 = vmatpush.bf16.msra.mxu0 %v2103
  %2392 = vmatpush.bf16.msra.mxu0 %v2097
  %2393 = vmatpush.bf16.msra.mxu0 %v2091
  %2394 = vmatpush.bf16.msra.mxu0 %v2085
  %2395 = vmatpush.bf16.msra.mxu0 %v2079
  %2396 = vmatpush.bf16.msra.mxu0 %v2073
  %2397 = vmatpush.bf16.msra.mxu0 %v2067
  %2398 = vmatpush.bf16.msra.mxu0 %v2061
  %2399 = vmatmul.bf16.gmra.mxu0 %v1133
  %v2400 = vpop.f32.mrf.mxu0
  %v2401 = vadd.f32 %v2388, %v2400
  %v2402 = vpop.f32.mrf.mxu0
  %2403 = vdwg.mxu0
  %2404 = vmatpush.bf16.msra.mxu0 %v1960
  %2405 = vmatpush.bf16.msra.mxu0 %v1954
  %2406 = vmatpush.bf16.msra.mxu0 %v1948
  %2407 = vmatpush.bf16.msra.mxu0 %v1942
  %2408 = vmatpush.bf16.msra.mxu0 %v1936
  %2409 = vmatpush.bf16.msra.mxu0 %v1930
  %2410 = vmatpush.bf16.msra.mxu0 %v1924
  %2411 = vmatpush.bf16.msra.mxu0 %v1918
  %2412 = vmatmul.bf16.gmra.mxu0 %v1130
  %v2413 = vpop.f32.mrf.mxu0
  %v2414 = vadd.f32 %v1330, %v2413
  %v2415 = vpop.f32.mrf.mxu0
  %2416 = vdwg.mxu0
  %2417 = vmatpush.bf16.msra.mxu0 %v2008
  %2418 = vmatpush.bf16.msra.mxu0 %v2002
  %2419 = vmatpush.bf16.msra.mxu0 %v1996
  %2420 = vmatpush.bf16.msra.mxu0 %v1990
  %2421 = vmatpush.bf16.msra.mxu0 %v1984
  %2422 = vmatpush.bf16.msra.mxu0 %v1978
  %2423 = vmatpush.bf16.msra.mxu0 %v1972
  %2424 = vmatpush.bf16.msra.mxu0 %v1966
  %2425 = vmatmul.bf16.gmra.mxu0 %v1131
  %v2426 = vpop.f32.mrf.mxu0
  %v2427 = vadd.f32 %v2414, %v2426
  %v2428 = vpop.f32.mrf.mxu0
  %2429 = vdwg.mxu0
  %2430 = vmatpush.bf16.msra.mxu0 %v2056
  %2431 = vmatpush.bf16.msra.mxu0 %v2050
  %2432 = vmatpush.bf16.msra.mxu0 %v2044
  %2433 = vmatpush.bf16.msra.mxu0 %v2038
  %2434 = vmatpush.bf16.msra.mxu0 %v2032
  %2435 = vmatpush.bf16.msra.mxu0 %v2026
  %2436 = vmatpush.bf16.msra.mxu0 %v2020
  %2437 = vmatpush.bf16.msra.mxu0 %v2014
  %2438 = vmatmul.bf16.gmra.mxu0 %v1132
  %v2439 = vpop.f32.mrf.mxu0
  %v2440 = vadd.f32 %v2427, %v2439
  %v2441 = vpop.f32.mrf.mxu0
  %2442 = vdwg.mxu0
  %2443 = vmatpush.bf16.msra.mxu0 %v2104
  %2444 = vmatpush.bf16.msra.mxu0 %v2098
  %2445 = vmatpush.bf16.msra.mxu0 %v2092
  %2446 = vmatpush.bf16.msra.mxu0 %v2086
  %2447 = vmatpush.bf16.msra.mxu0 %v2080
  %2448 = vmatpush.bf16.msra.mxu0 %v2074
  %2449 = vmatpush.bf16.msra.mxu0 %v2068
  %2450 = vmatpush.bf16.msra.mxu0 %v2062
  %2451 = vmatmul.bf16.gmra.mxu0 %v1133
  %v2452 = vpop.f32.mrf.mxu0
  %v2453 = vadd.f32 %v2440, %v2452
  %v2454 = vpop.f32.mrf.mxu0
  %2455 = vdwg.mxu0
  %2456 = vmatpush.bf16.msra.mxu0 %v1961
  %2457 = vmatpush.bf16.msra.mxu0 %v1955
  %2458 = vmatpush.bf16.msra.mxu0 %v1949
  %2459 = vmatpush.bf16.msra.mxu0 %v1943
  %2460 = vmatpush.bf16.msra.mxu0 %v1937
  %2461 = vmatpush.bf16.msra.mxu0 %v1931
  %2462 = vmatpush.bf16.msra.mxu0 %v1925
  %2463 = vmatpush.bf16.msra.mxu0 %v1919
  %2464 = vmatmul.bf16.gmra.mxu0 %v1130
  %v2465 = vpop.f32.mrf.mxu0
  %v2466 = vadd.f32 %v1331, %v2465
  %v2467 = vpop.f32.mrf.mxu0
  %2468 = vdwg.mxu0
  %2469 = vmatpush.bf16.msra.mxu0 %v2009
  %2470 = vmatpush.bf16.msra.mxu0 %v2003
  %2471 = vmatpush.bf16.msra.mxu0 %v1997
  %2472 = vmatpush.bf16.msra.mxu0 %v1991
  %2473 = vmatpush.bf16.msra.mxu0 %v1985
  %2474 = vmatpush.bf16.msra.mxu0 %v1979
  %2475 = vmatpush.bf16.msra.mxu0 %v1973
  %2476 = vmatpush.bf16.msra.mxu0 %v1967
  %2477 = vmatmul.bf16.gmra.mxu0 %v1131
  %v2478 = vpop.f32.mrf.mxu0
  %v2479 = vadd.f32 %v2466, %v2478
  %v2480 = vpop.f32.mrf.mxu0
  %2481 = vdwg.mxu0
  %2482 = vmatpush.bf16.msra.mxu0 %v2057
  %2483 = vmatpush.bf16.msra.mxu0 %v2051
  %2484 = vmatpush.bf16.msra.mxu0 %v2045
  %2485 = vmatpush.bf16.msra.mxu0 %v2039
  %2486 = vmatpush.bf16.msra.mxu0 %v2033
  %2487 = vmatpush.bf16.msra.mxu0 %v2027
  %2488 = vmatpush.bf16.msra.mxu0 %v2021
  %2489 = vmatpush.bf16.msra.mxu0 %v2015
  %2490 = vmatmul.bf16.gmra.mxu0 %v1132
  %v2491 = vpop.f32.mrf.mxu0
  %v2492 = vadd.f32 %v2479, %v2491
  %v2493 = vpop.f32.mrf.mxu0
  %2494 = vdwg.mxu0
  %2495 = vmatpush.bf16.msra.mxu0 %v2105
  %2496 = vmatpush.bf16.msra.mxu0 %v2099
  %2497 = vmatpush.bf16.msra.mxu0 %v2093
  %2498 = vmatpush.bf16.msra.mxu0 %v2087
  %2499 = vmatpush.bf16.msra.mxu0 %v2081
  %2500 = vmatpush.bf16.msra.mxu0 %v2075
  %2501 = vmatpush.bf16.msra.mxu0 %v2069
  %2502 = vmatpush.bf16.msra.mxu0 %v2063
  %2503 = vmatmul.bf16.gmra.mxu0 %v1133
  %v2504 = vpop.f32.mrf.mxu0
  %v2505 = vadd.f32 %v2492, %v2504
  %v2506 = vpop.f32.mrf.mxu0
  %2507 = vdwg.mxu0
  %2508 = vmatpush.bf16.msra.mxu0 %v1962
  %2509 = vmatpush.bf16.msra.mxu0 %v1956
  %2510 = vmatpush.bf16.msra.mxu0 %v1950
  %2511 = vmatpush.bf16.msra.mxu0 %v1944
  %2512 = vmatpush.bf16.msra.mxu0 %v1938
  %2513 = vmatpush.bf16.msra.mxu0 %v1932
  %2514 = vmatpush.bf16.msra.mxu0 %v1926
  %2515 = vmatpush.bf16.msra.mxu0 %v1920
  %2516 = vmatmul.bf16.gmra.mxu0 %v1130
  %v2517 = vpop.f32.mrf.mxu0
  %v2518 = vadd.f32 %v1332, %v2517
  %v2519 = vpop.f32.mrf.mxu0
  %2520 = vdwg.mxu0
  %2521 = vmatpush.bf16.msra.mxu0 %v2010
  %2522 = vmatpush.bf16.msra.mxu0 %v2004
  %2523 = vmatpush.bf16.msra.mxu0 %v1998
  %2524 = vmatpush.bf16.msra.mxu0 %v1992
  %2525 = vmatpush.bf16.msra.mxu0 %v1986
  %2526 = vmatpush.bf16.msra.mxu0 %v1980
  %2527 = vmatpush.bf16.msra.mxu0 %v1974
  %2528 = vmatpush.bf16.msra.mxu0 %v1968
  %2529 = vmatmul.bf16.gmra.mxu0 %v1131
  %v2530 = vpop.f32.mrf.mxu0
  %v2531 = vadd.f32 %v2518, %v2530
  %v2532 = vpop.f32.mrf.mxu0
  %2533 = vdwg.mxu0
  %2534 = vmatpush.bf16.msra.mxu0 %v2058
  %2535 = vmatpush.bf16.msra.mxu0 %v2052
  %2536 = vmatpush.bf16.msra.mxu0 %v2046
  %2537 = vmatpush.bf16.msra.mxu0 %v2040
  %2538 = vmatpush.bf16.msra.mxu0 %v2034
  %2539 = vmatpush.bf16.msra.mxu0 %v2028
  %2540 = vmatpush.bf16.msra.mxu0 %v2022
  %2541 = vmatpush.bf16.msra.mxu0 %v2016
  %2542 = vmatmul.bf16.gmra.mxu0 %v1132
  %v2543 = vpop.f32.mrf.mxu0
  %v2544 = vadd.f32 %v2531, %v2543
  %v2545 = vpop.f32.mrf.mxu0
  %2546 = vdwg.mxu0
  %2547 = vmatpush.bf16.msra.mxu0 %v2106
  %2548 = vmatpush.bf16.msra.mxu0 %v2100
  %2549 = vmatpush.bf16.msra.mxu0 %v2094
  %2550 = vmatpush.bf16.msra.mxu0 %v2088
  %2551 = vmatpush.bf16.msra.mxu0 %v2082
  %2552 = vmatpush.bf16.msra.mxu0 %v2076
  %2553 = vmatpush.bf16.msra.mxu0 %v2070
  %2554 = vmatpush.bf16.msra.mxu0 %v2064
  %2555 = vmatmul.bf16.gmra.mxu0 %v1133
  %v2556 = vpop.f32.mrf.mxu0
  %v2557 = vadd.f32 %v2544, %v2556
  %v2558 = vpop.f32.mrf.mxu0
  %2559 = vdwg.mxu0
  %2560 = vmatpush.bf16.msra.mxu0 %v1963
  %2561 = vmatpush.bf16.msra.mxu0 %v1957
  %2562 = vmatpush.bf16.msra.mxu0 %v1951
  %2563 = vmatpush.bf16.msra.mxu0 %v1945
  %2564 = vmatpush.bf16.msra.mxu0 %v1939
  %2565 = vmatpush.bf16.msra.mxu0 %v1933
  %2566 = vmatpush.bf16.msra.mxu0 %v1927
  %2567 = vmatpush.bf16.msra.mxu0 %v1921
  %2568 = vmatmul.bf16.gmra.mxu0 %v1130
  %v2569 = vpop.f32.mrf.mxu0
  %v2570 = vadd.f32 %v1333, %v2569
  %v2571 = vpop.f32.mrf.mxu0
  %2572 = vdwg.mxu0
  %2573 = vmatpush.bf16.msra.mxu0 %v2011
  %2574 = vmatpush.bf16.msra.mxu0 %v2005
  %2575 = vmatpush.bf16.msra.mxu0 %v1999
  %2576 = vmatpush.bf16.msra.mxu0 %v1993
  %2577 = vmatpush.bf16.msra.mxu0 %v1987
  %2578 = vmatpush.bf16.msra.mxu0 %v1981
  %2579 = vmatpush.bf16.msra.mxu0 %v1975
  %2580 = vmatpush.bf16.msra.mxu0 %v1969
  %2581 = vmatmul.bf16.gmra.mxu0 %v1131
  %v2582 = vpop.f32.mrf.mxu0
  %v2583 = vadd.f32 %v2570, %v2582
  %v2584 = vpop.f32.mrf.mxu0
  %2585 = vdwg.mxu0
  %2586 = vmatpush.bf16.msra.mxu0 %v2059
  %2587 = vmatpush.bf16.msra.mxu0 %v2053
  %2588 = vmatpush.bf16.msra.mxu0 %v2047
  %2589 = vmatpush.bf16.msra.mxu0 %v2041
  %2590 = vmatpush.bf16.msra.mxu0 %v2035
  %2591 = vmatpush.bf16.msra.mxu0 %v2029
  %2592 = vmatpush.bf16.msra.mxu0 %v2023
  %2593 = vmatpush.bf16.msra.mxu0 %v2017
  %2594 = vmatmul.bf16.gmra.mxu0 %v1132
  %v2595 = vpop.f32.mrf.mxu0
  %v2596 = vadd.f32 %v2583, %v2595
  %v2597 = vpop.f32.mrf.mxu0
  %2598 = vdwg.mxu0
  %2599 = vmatpush.bf16.msra.mxu0 %v2107
  %2600 = vmatpush.bf16.msra.mxu0 %v2101
  %2601 = vmatpush.bf16.msra.mxu0 %v2095
  %2602 = vmatpush.bf16.msra.mxu0 %v2089
  %2603 = vmatpush.bf16.msra.mxu0 %v2083
  %2604 = vmatpush.bf16.msra.mxu0 %v2077
  %2605 = vmatpush.bf16.msra.mxu0 %v2071
  %2606 = vmatpush.bf16.msra.mxu0 %v2065
  %2607 = vmatmul.bf16.gmra.mxu0 %v1133
  %v2608 = vpop.f32.mrf.mxu0
  %v2609 = vadd.f32 %v2596, %v2608
  %v2610 = vpop.f32.mrf.mxu0
  %2611 = vdwg.mxu0
  %v2612 = vmax.f32 %v2349, 0.0
  %v2613 = vmax.f32 %v2401, 0.0
  %v2614 = vmax.f32 %v2453, 0.0
  %v2615 = vmax.f32 %v2505, 0.0
  %v2616 = vmax.f32 %v2557, 0.0
  %v2617 = vmax.f32 %v2609, 0.0
  %v2618 = vpack.c.bf16 %v2612, %v2612
  %v2619 = vpack.c.bf16 %v2613, %v2613
  %v2620 = vpack.c.bf16 %v2614, %v2614
  %v2621 = vpack.c.bf16 %v2615, %v2615
  %v2622 = vpack.c.bf16 %v2616, %v2616
  %v2623 = vpack.c.bf16 %v2617, %v2617
  %v2624 = vld [vmem:[%s9] sm:$0xf]
  %v2625 = vld [vmem:[%s9 + $0x4] sm:$0xf]
  %v2626 = vld [vmem:[%s9 + $0x8] sm:$0xf]
  %v2627 = vld [vmem:[%s9 + $0xc] sm:$0xf]
  %v2628 = vld [vmem:[%s9 + $0x10] sm:$0xf]
  %v2629 = vld [vmem:[%s9 + $0x14] sm:$0xf]
  %v2630 = vld [vmem:[%s9 + $0x18] sm:$0xf]
  %v2631 = vld [vmem:[%s9 + $0x1c] sm:$0xf]
  %v2632 = vld [vmem:[%s9 + $0x20] sm:$0xf]
  %v2633 = vld [vmem:[%s9 + $0x24] sm:$0xf]
  %v2634 = vld [vmem:[%s9 + $0x28] sm:$0xf]
  %v2635 = vld [vmem:[%s9 + $0x2c] sm:$0xf]
  %v2636 = vld [vmem:[%s9 + $0x30] sm:$0xf]
  %v2637 = vld [vmem:[%s9 + $0x34] sm:$0xf]
  %v2638 = vld [vmem:[%s9 + $0x38] sm:$0xf]
  %v2639 = vld [vmem:[%s9 + $0x3c] sm:$0xf]
  %v2640 = vld [vmem:[%s9 + $0x40] sm:$0xf]
  %v2641 = vld [vmem:[%s9 + $0x44] sm:$0xf]
  %v2642 = vld [vmem:[%s9 + $0x48] sm:$0xf]
  %v2643 = vld [vmem:[%s9 + $0x4c] sm:$0xf]
  %v2644 = vld [vmem:[%s9 + $0x50] sm:$0xf]
  %v2645 = vld [vmem:[%s9 + $0x54] sm:$0xf]
  %v2646 = vld [vmem:[%s9 + $0x58] sm:$0xf]
  %v2647 = vld [vmem:[%s9 + $0x5c] sm:$0xf]
  %v2648 = vld [vmem:[%s9 + $0x60] sm:$0xf]
  %v2649 = vld [vmem:[%s9 + $0x64] sm:$0xf]
  %v2650 = vld [vmem:[%s9 + $0x68] sm:$0xf]
  %v2651 = vld [vmem:[%s9 + $0x6c] sm:$0xf]
  %v2652 = vld [vmem:[%s9 + $0x70] sm:$0xf]
  %v2653 = vld [vmem:[%s9 + $0x74] sm:$0xf]
  %v2654 = vld [vmem:[%s9 + $0x78] sm:$0xf]
  %v2655 = vld [vmem:[%s9 + $0x7c] sm:$0xf]
  %v2656 = vld [vmem:[%s9 + $0x80] sm:$0xf]
  %v2657 = vld [vmem:[%s9 + $0x84] sm:$0xf]
  %v2658 = vld [vmem:[%s9 + $0x88] sm:$0xf]
  %v2659 = vld [vmem:[%s9 + $0x8c] sm:$0xf]
  %v2660 = vld [vmem:[%s9 + $0x90] sm:$0xf]
  %v2661 = vld [vmem:[%s9 + $0x94] sm:$0xf]
  %v2662 = vld [vmem:[%s9 + $0x98] sm:$0xf]
  %v2663 = vld [vmem:[%s9 + $0x9c] sm:$0xf]
  %v2664 = vld [vmem:[%s9 + $0xa0] sm:$0xf]
  %v2665 = vld [vmem:[%s9 + $0xa4] sm:$0xf]
  %v2666 = vld [vmem:[%s9 + $0xa8] sm:$0xf]
  %v2667 = vld [vmem:[%s9 + $0xac] sm:$0xf]
  %v2668 = vld [vmem:[%s9 + $0xb0] sm:$0xf]
  %v2669 = vld [vmem:[%s9 + $0xb4] sm:$0xf]
  %v2670 = vld [vmem:[%s9 + $0xb8] sm:$0xf]
  %v2671 = vld [vmem:[%s9 + $0xbc] sm:$0xf]
  %v2672 = vld [vmem:[%s9 + $0xc0] sm:$0xf]
  %v2673 = vld [vmem:[%s9 + $0xc4] sm:$0xf]
  %v2674 = vld [vmem:[%s9 + $0xc8] sm:$0xf]
  %v2675 = vld [vmem:[%s9 + $0xcc] sm:$0xf]
  %v2676 = vld [vmem:[%s9 + $0xd0] sm:$0xf]
  %v2677 = vld [vmem:[%s9 + $0xd4] sm:$0xf]
  %v2678 = vld [vmem:[%s9 + $0xd8] sm:$0xf]
  %v2679 = vld [vmem:[%s9 + $0xdc] sm:$0xf]
  %v2680 = vld [vmem:[%s9 + $0xe0] sm:$0xf]
  %v2681 = vld [vmem:[%s9 + $0xe4] sm:$0xf]
  %v2682 = vld [vmem:[%s9 + $0xe8] sm:$0xf]
  %v2683 = vld [vmem:[%s9 + $0xec] sm:$0xf]
  %v2684 = vld [vmem:[%s9 + $0xf0] sm:$0xf]
  %v2685 = vld [vmem:[%s9 + $0xf4] sm:$0xf]
  %v2686 = vld [vmem:[%s9 + $0xf8] sm:$0xf]
  %v2687 = vld [vmem:[%s9 + $0xfc] sm:$0xf]
  %v2688 = vld [vmem:[%s9 + $0x100] sm:$0xf]
  %v2689 = vld [vmem:[%s9 + $0x104] sm:$0xf]
  %v2690 = vld [vmem:[%s9 + $0x108] sm:$0xf]
  %v2691 = vld [vmem:[%s9 + $0x10c] sm:$0xf]
  %v2692 = vld [vmem:[%s9 + $0x110] sm:$0xf]
  %v2693 = vld [vmem:[%s9 + $0x114] sm:$0xf]
  %v2694 = vld [vmem:[%s9 + $0x118] sm:$0xf]
  %v2695 = vld [vmem:[%s9 + $0x11c] sm:$0xf]
  %v2696 = vld [vmem:[%s9 + $0x120] sm:$0xf]
  %v2697 = vld [vmem:[%s9 + $0x124] sm:$0xf]
  %v2698 = vld [vmem:[%s9 + $0x128] sm:$0xf]
  %v2699 = vld [vmem:[%s9 + $0x12c] sm:$0xf]
  %v2700 = vld [vmem:[%s9 + $0x130] sm:$0xf]
  %v2701 = vld [vmem:[%s9 + $0x134] sm:$0xf]
  %v2702 = vld [vmem:[%s9 + $0x138] sm:$0xf]
  %v2703 = vld [vmem:[%s9 + $0x13c] sm:$0xf]
  %v2704 = vld [vmem:[%s9 + $0x140] sm:$0xf]
  %v2705 = vld [vmem:[%s9 + $0x144] sm:$0xf]
  %v2706 = vld [vmem:[%s9 + $0x148] sm:$0xf]
  %v2707 = vld [vmem:[%s9 + $0x14c] sm:$0xf]
  %v2708 = vld [vmem:[%s9 + $0x150] sm:$0xf]
  %v2709 = vld [vmem:[%s9 + $0x154] sm:$0xf]
  %v2710 = vld [vmem:[%s9 + $0x158] sm:$0xf]
  %v2711 = vld [vmem:[%s9 + $0x15c] sm:$0xf]
  %v2712 = vld [vmem:[%s9 + $0x160] sm:$0xf]
  %v2713 = vld [vmem:[%s9 + $0x164] sm:$0xf]
  %v2714 = vld [vmem:[%s9 + $0x168] sm:$0xf]
  %v2715 = vld [vmem:[%s9 + $0x16c] sm:$0xf]
  %v2716 = vld [vmem:[%s9 + $0x170] sm:$0xf]
  %v2717 = vld [vmem:[%s9 + $0x174] sm:$0xf]
  %v2718 = vld [vmem:[%s9 + $0x178] sm:$0xf]
  %v2719 = vld [vmem:[%s9 + $0x17c] sm:$0xf]
  %v2720 = vld [vmem:[%s10] sm:$0x1]
  %v2722 = vperm.slane %v2720, 0
  %v2820 = vunpack.c.l.b16 %v2624
  %v2821 = vunpack.c.l.b16 %v2625
  %v2822 = vunpack.c.l.b16 %v2626
  %v2823 = vunpack.c.l.b16 %v2627
  %v2824 = vunpack.c.l.b16 %v2628
  %v2825 = vunpack.c.l.b16 %v2629
  %v2826 = vunpack.c.l.b16 %v2630
  %v2827 = vunpack.c.l.b16 %v2631
  %v2828 = vunpack.c.l.b16 %v2632
  %v2829 = vunpack.c.l.b16 %v2633
  %v2830 = vunpack.c.l.b16 %v2634
  %v2831 = vunpack.c.l.b16 %v2635
  %v2832 = vunpack.c.l.b16 %v2636
  %v2833 = vunpack.c.l.b16 %v2637
  %v2834 = vunpack.c.l.b16 %v2638
  %v2835 = vunpack.c.l.b16 %v2639
  %v2836 = vunpack.c.l.b16 %v2640
  %v2837 = vunpack.c.l.b16 %v2641
  %v2838 = vunpack.c.l.b16 %v2642
  %v2839 = vunpack.c.l.b16 %v2643
  %v2840 = vunpack.c.l.b16 %v2644
  %v2841 = vunpack.c.l.b16 %v2645
  %v2842 = vunpack.c.l.b16 %v2646
  %v2843 = vunpack.c.l.b16 %v2647
  %v2844 = vunpack.c.l.b16 %v2648
  %v2845 = vunpack.c.l.b16 %v2649
  %v2846 = vunpack.c.l.b16 %v2650
  %v2847 = vunpack.c.l.b16 %v2651
  %v2848 = vunpack.c.l.b16 %v2652
  %v2849 = vunpack.c.l.b16 %v2653
  %v2850 = vunpack.c.l.b16 %v2654
  %v2851 = vunpack.c.l.b16 %v2655
  %v2852 = vunpack.c.l.b16 %v2656
  %v2853 = vunpack.c.l.b16 %v2657
  %v2854 = vunpack.c.l.b16 %v2658
  %v2855 = vunpack.c.l.b16 %v2659
  %v2856 = vunpack.c.l.b16 %v2660
  %v2857 = vunpack.c.l.b16 %v2661
  %v2858 = vunpack.c.l.b16 %v2662
  %v2859 = vunpack.c.l.b16 %v2663
  %v2860 = vunpack.c.l.b16 %v2664
  %v2861 = vunpack.c.l.b16 %v2665
  %v2862 = vunpack.c.l.b16 %v2666
  %v2863 = vunpack.c.l.b16 %v2667
  %v2864 = vunpack.c.l.b16 %v2668
  %v2865 = vunpack.c.l.b16 %v2669
  %v2866 = vunpack.c.l.b16 %v2670
  %v2867 = vunpack.c.l.b16 %v2671
  %v2868 = vunpack.c.l.b16 %v2672
  %v2869 = vunpack.c.l.b16 %v2673
  %v2870 = vunpack.c.l.b16 %v2674
  %v2871 = vunpack.c.l.b16 %v2675
  %v2872 = vunpack.c.l.b16 %v2676
  %v2873 = vunpack.c.l.b16 %v2677
  %v2874 = vunpack.c.l.b16 %v2678
  %v2875 = vunpack.c.l.b16 %v2679
  %v2876 = vunpack.c.l.b16 %v2680
  %v2877 = vunpack.c.l.b16 %v2681
  %v2878 = vunpack.c.l.b16 %v2682
  %v2879 = vunpack.c.l.b16 %v2683
  %v2880 = vunpack.c.l.b16 %v2684
  %v2881 = vunpack.c.l.b16 %v2685
  %v2882 = vunpack.c.l.b16 %v2686
  %v2883 = vunpack.c.l.b16 %v2687
  %v2884 = vunpack.c.l.b16 %v2688
  %v2885 = vunpack.c.l.b16 %v2689
  %v2886 = vunpack.c.l.b16 %v2690
  %v2887 = vunpack.c.l.b16 %v2691
  %v2888 = vunpack.c.l.b16 %v2692
  %v2889 = vunpack.c.l.b16 %v2693
  %v2890 = vunpack.c.l.b16 %v2694
  %v2891 = vunpack.c.l.b16 %v2695
  %v2892 = vunpack.c.l.b16 %v2696
  %v2893 = vunpack.c.l.b16 %v2697
  %v2894 = vunpack.c.l.b16 %v2698
  %v2895 = vunpack.c.l.b16 %v2699
  %v2896 = vunpack.c.l.b16 %v2700
  %v2897 = vunpack.c.l.b16 %v2701
  %v2898 = vunpack.c.l.b16 %v2702
  %v2899 = vunpack.c.l.b16 %v2703
  %v2900 = vunpack.c.l.b16 %v2704
  %v2901 = vunpack.c.l.b16 %v2705
  %v2902 = vunpack.c.l.b16 %v2706
  %v2903 = vunpack.c.l.b16 %v2707
  %v2904 = vunpack.c.l.b16 %v2708
  %v2905 = vunpack.c.l.b16 %v2709
  %v2906 = vunpack.c.l.b16 %v2710
  %v2907 = vunpack.c.l.b16 %v2711
  %v2908 = vunpack.c.l.b16 %v2712
  %v2909 = vunpack.c.l.b16 %v2713
  %v2910 = vunpack.c.l.b16 %v2714
  %v2911 = vunpack.c.l.b16 %v2715
  %v2912 = vunpack.c.l.b16 %v2716
  %v2913 = vunpack.c.l.b16 %v2717
  %v2914 = vunpack.c.l.b16 %v2718
  %v2915 = vunpack.c.l.b16 %v2719
  %v2916 = vpack.c.b16 %v2821, %v2820
  %v2917 = vpack.c.b16 %v2823, %v2822
  %v2918 = vpack.c.b16 %v2825, %v2824
  %v2919 = vpack.c.b16 %v2827, %v2826
  %v2920 = vpack.c.b16 %v2829, %v2828
  %v2921 = vpack.c.b16 %v2831, %v2830
  %v2922 = vpack.c.b16 %v2833, %v2832
  %v2923 = vpack.c.b16 %v2835, %v2834
  %v2924 = vpack.c.b16 %v2837, %v2836
  %v2925 = vpack.c.b16 %v2839, %v2838
  %v2926 = vpack.c.b16 %v2841, %v2840
  %v2927 = vpack.c.b16 %v2843, %v2842
  %v2928 = vpack.c.b16 %v2845, %v2844
  %v2929 = vpack.c.b16 %v2847, %v2846
  %v2930 = vpack.c.b16 %v2849, %v2848
  %v2931 = vpack.c.b16 %v2851, %v2850
  %v2932 = vpack.c.b16 %v2853, %v2852
  %v2933 = vpack.c.b16 %v2855, %v2854
  %v2934 = vpack.c.b16 %v2857, %v2856
  %v2935 = vpack.c.b16 %v2859, %v2858
  %v2936 = vpack.c.b16 %v2861, %v2860
  %v2937 = vpack.c.b16 %v2863, %v2862
  %v2938 = vpack.c.b16 %v2865, %v2864
  %v2939 = vpack.c.b16 %v2867, %v2866
  %v2940 = vpack.c.b16 %v2869, %v2868
  %v2941 = vpack.c.b16 %v2871, %v2870
  %v2942 = vpack.c.b16 %v2873, %v2872
  %v2943 = vpack.c.b16 %v2875, %v2874
  %v2944 = vpack.c.b16 %v2877, %v2876
  %v2945 = vpack.c.b16 %v2879, %v2878
  %v2946 = vpack.c.b16 %v2881, %v2880
  %v2947 = vpack.c.b16 %v2883, %v2882
  %v2948 = vpack.c.b16 %v2885, %v2884
  %v2949 = vpack.c.b16 %v2887, %v2886
  %v2950 = vpack.c.b16 %v2889, %v2888
  %v2951 = vpack.c.b16 %v2891, %v2890
  %v2952 = vpack.c.b16 %v2893, %v2892
  %v2953 = vpack.c.b16 %v2895, %v2894
  %v2954 = vpack.c.b16 %v2897, %v2896
  %v2955 = vpack.c.b16 %v2899, %v2898
  %v2956 = vpack.c.b16 %v2901, %v2900
  %v2957 = vpack.c.b16 %v2903, %v2902
  %v2958 = vpack.c.b16 %v2905, %v2904
  %v2959 = vpack.c.b16 %v2907, %v2906
  %v2960 = vpack.c.b16 %v2909, %v2908
  %v2961 = vpack.c.b16 %v2911, %v2910
  %v2962 = vpack.c.b16 %v2913, %v2912
  %v2963 = vpack.c.b16 %v2915, %v2914
  %3012 = vmatpush.bf16.msra.mxu0 %v2923
  %3013 = vmatpush.bf16.msra.mxu0 %v2922
  %3014 = vmatpush.bf16.msra.mxu0 %v2921
  %3015 = vmatpush.bf16.msra.mxu0 %v2920
  %3016 = vmatpush.bf16.msra.mxu0 %v2919
  %3017 = vmatpush.bf16.msra.mxu0 %v2918
  %3018 = vmatpush.bf16.msra.mxu0 %v2917
  %3019 = vmatpush.bf16.msra.mxu0 %v2916
  %3020 = vmatmul.bf16.gmra.mxu0 %v2618
  %v3021 = vpop.f32.mrf.mxu0
  %v3022 = vadd.f32 %v2722, %v3021
  %v3023 = vpop.f32.mrf.mxu0
  %3024 = vdwg.mxu0
  %3025 = vmatpush.bf16.msra.mxu0 %v2931
  %3026 = vmatpush.bf16.msra.mxu0 %v2930
  %3027 = vmatpush.bf16.msra.mxu0 %v2929
  %3028 = vmatpush.bf16.msra.mxu0 %v2928
  %3029 = vmatpush.bf16.msra.mxu0 %v2927
  %3030 = vmatpush.bf16.msra.mxu0 %v2926
  %3031 = vmatpush.bf16.msra.mxu0 %v2925
  %3032 = vmatpush.bf16.msra.mxu0 %v2924
  %3033 = vmatmul.bf16.gmra.mxu0 %v2619
  %v3034 = vpop.f32.mrf.mxu0
  %v3035 = vadd.f32 %v3022, %v3034
  %v3036 = vpop.f32.mrf.mxu0
  %3037 = vdwg.mxu0
  %3038 = vmatpush.bf16.msra.mxu0 %v2939
  %3039 = vmatpush.bf16.msra.mxu0 %v2938
  %3040 = vmatpush.bf16.msra.mxu0 %v2937
  %3041 = vmatpush.bf16.msra.mxu0 %v2936
  %3042 = vmatpush.bf16.msra.mxu0 %v2935
  %3043 = vmatpush.bf16.msra.mxu0 %v2934
  %3044 = vmatpush.bf16.msra.mxu0 %v2933
  %3045 = vmatpush.bf16.msra.mxu0 %v2932
  %3046 = vmatmul.bf16.gmra.mxu0 %v2620
  %v3047 = vpop.f32.mrf.mxu0
  %v3048 = vadd.f32 %v3035, %v3047
  %v3049 = vpop.f32.mrf.mxu0
  %3050 = vdwg.mxu0
  %3051 = vmatpush.bf16.msra.mxu0 %v2947
  %3052 = vmatpush.bf16.msra.mxu0 %v2946
  %3053 = vmatpush.bf16.msra.mxu0 %v2945
  %3054 = vmatpush.bf16.msra.mxu0 %v2944
  %3055 = vmatpush.bf16.msra.mxu0 %v2943
  %3056 = vmatpush.bf16.msra.mxu0 %v2942
  %3057 = vmatpush.bf16.msra.mxu0 %v2941
  %3058 = vmatpush.bf16.msra.mxu0 %v2940
  %3059 = vmatmul.bf16.gmra.mxu0 %v2621
  %v3060 = vpop.f32.mrf.mxu0
  %v3061 = vadd.f32 %v3048, %v3060
  %v3062 = vpop.f32.mrf.mxu0
  %3063 = vdwg.mxu0
  %3064 = vmatpush.bf16.msra.mxu0 %v2955
  %3065 = vmatpush.bf16.msra.mxu0 %v2954
  %3066 = vmatpush.bf16.msra.mxu0 %v2953
  %3067 = vmatpush.bf16.msra.mxu0 %v2952
  %3068 = vmatpush.bf16.msra.mxu0 %v2951
  %3069 = vmatpush.bf16.msra.mxu0 %v2950
  %3070 = vmatpush.bf16.msra.mxu0 %v2949
  %3071 = vmatpush.bf16.msra.mxu0 %v2948
  %3072 = vmatmul.bf16.gmra.mxu0 %v2622
  %v3073 = vpop.f32.mrf.mxu0
  %v3074 = vadd.f32 %v3061, %v3073
  %v3075 = vpop.f32.mrf.mxu0
  %3076 = vdwg.mxu0
  %3077 = vmatpush.bf16.msra.mxu0 %v2963
  %3078 = vmatpush.bf16.msra.mxu0 %v2962
  %3079 = vmatpush.bf16.msra.mxu0 %v2961
  %3080 = vmatpush.bf16.msra.mxu0 %v2960
  %3081 = vmatpush.bf16.msra.mxu0 %v2959
  %3082 = vmatpush.bf16.msra.mxu0 %v2958
  %3083 = vmatpush.bf16.msra.mxu0 %v2957
  %3084 = vmatpush.bf16.msra.mxu0 %v2956
  %3085 = vmatmul.bf16.gmra.mxu0 %v2623
  %v3086 = vpop.f32.mrf.mxu0
  %v3087 = vadd.f32 %v3074, %v3086
  %v3088 = vpop.f32.mrf.mxu0
  %3089 = vdwg.mxu0
  %v3090 = vlaneseq
  %v3091 = vand.u32 %v3090, 127
  %v3092 = vmax.f32 %v3087, -20.0
  %v3093 = vmin.f32 %v3092, 2.0
  %v3094 = vmul.f32 %v3093, 1.442695
  %v3095 = vpow.pop %v3094
  %vm3096 = vcmp.ge.s32.totalorder %v3091, 2
  %vm3097 = vcmp.lt.s32.totalorder %v3091, 4
  %vm3098 = vmand %vm3096, %vm3097
  %v3099 = vsel %vm3098, %v3095, %v3087
  %3100 = vst [vmem:[%s11] sm:$0x3] %v3099
  // Predicated region
  $region46: #{actor_forward.3} parent=0 // pred_check
    _
  $region47: #{actor_forward.3} parent=0 // pred_check_branch
    %3102 = sbr.rel (0) target = $region49
  $region48: #{actor_forward.3} parent=0 // pred_region
    _
  $region49: #{actor_forward.3} parent=0 // pred_fallthru
    _
  // Predicated region
  $region50: #{actor_forward.3} parent=0 // pred_check
    _
  $region51: #{actor_forward.3} parent=0 // pred_check_branch
    %3104 = sbr.rel (0) target = $region53
  $region52: #{actor_forward.3} parent=0 // pred_region
    _
  $region53: #{actor_forward.3} parent=0 // pred_fallthru
    _

</llo_original>
